<compile_context>
chip_gen: v6e
topology: v6e:2x2x1
jax: 0.10.0
libtpu: 0.0.40
codegen_flags: <defaults>
</compile_context>

<pallas_src>
import jax
import jax.numpy as jnp
from jax.experimental import pallas as pl
from jax.experimental.pallas import tpu as pltpu


def make_attention_kernel(B, N, C, num_heads, head_dim):
    d_all = num_heads * head_dim

    def kernel(x_ref, w_qkv_ref, w_proj_ref, b_proj_ref, o_ref):
        # x_ref:      (B*N, C)        flattened tokens
        # w_qkv_ref:  (C, 3*d_all)    softmax scale pre-folded into q columns
        # w_proj_ref: (d_all, C)
        # b_proj_ref: (1, C)
        # o_ref:      (B*N, C)
        x = x_ref[...]

        # Single qkv projection over all tokens (qkv_bias=False in the module).
        qkv = jnp.dot(x, w_qkv_ref[...],
                      preferred_element_type=jnp.float32)      # (B*N, 3*d_all)
        qkv = qkv.reshape(B, N, 3 * d_all)                      # leading-dim split only

        w_proj = w_proj_ref[...]                                # (d_all, C), load once

        acc = jnp.zeros((B * N, C), jnp.float32)

        # Static (unrolled) loop over heads. qkv columns are ordered
        # [q_h0..q_hH | k_h0..k_hH | v_h0..v_hH], so each head's q/k/v is a
        # contiguous static lane slice -- no reshape/transpose of the head axis.
        for h in range(num_heads):
            q = qkv[:, :, h * head_dim:(h + 1) * head_dim]                  # (B, N, hd), pre-scaled
            k = qkv[:, :, d_all + h * head_dim:d_all + (h + 1) * head_dim]  # (B, N, hd)
            v = qkv[:, :, 2 * d_all + h * head_dim:
                          2 * d_all + (h + 1) * head_dim]                   # (B, N, hd)

            s = jnp.einsum('bqd,bkd->bqk', q, k,
                           preferred_element_type=jnp.float32)  # (B, N, N)

            # Numerically stable softmax; normalize AFTER attn@v so the
            # reciprocal multiply touches (B,N,hd) instead of (B,N,N).
            m = jnp.max(s, axis=-1, keepdims=True)
            e = jnp.exp(s - m)
            inv_l = pl.reciprocal(jnp.sum(e, axis=-1, keepdims=True), approx=True)

            oh = jnp.einsum('bqk,bkd->bqd', e, v,
                            preferred_element_type=jnp.float32) * inv_l     # (B, N, hd)

            # Per-head partial output projection accumulated into (B*N, C);
            # avoids the (N, H, hd) -> (N, H*hd) merge transpose entirely.
            acc = acc + jnp.dot(oh.reshape(B * N, head_dim),
                                w_proj[h * head_dim:(h + 1) * head_dim, :],
                                preferred_element_type=jnp.float32)

        y = acc + b_proj_ref[...]                               # (1, C) broadcast
        o_ref[...] = y.astype(o_ref.dtype)

    return kernel


def prepare_params(w_qkv, w_proj, b_proj, *, num_heads, head_dim, scale):
    """One-time parameter prep (do at init, not per call): fold the softmax
    scale into the q columns of the qkv weight; bias as a (1, C) row."""
    d_all = num_heads * head_dim
    w_qkv_scaled = jnp.concatenate(
        [w_qkv[:, :d_all] * scale, w_qkv[:, d_all:]], axis=1)
    return w_qkv_scaled, w_proj, b_proj.reshape(1, -1)


def attention_forward(x, w_qkv_prepped, w_proj, b_proj, *, num_heads, head_dim):
    B, N, C = x.shape
    d_all = num_heads * head_dim
    x_flat = x.reshape(B * N, C)  # dense (B*N, C) slab in/out of the kernel

    kernel = make_attention_kernel(B, N, C, num_heads, head_dim)

    y_flat = pl.pallas_call(
        kernel,
        out_shape=jax.ShapeDtypeStruct((B * N, C), x.dtype),
        grid_spec=pltpu.PrefetchScalarGridSpec(
            num_scalar_prefetch=0,
            grid=(1,),  # whole (tiny) problem in one grid step
            in_specs=[
                pl.BlockSpec((B * N, C), lambda i: (0, 0)),
                pl.BlockSpec((C, 3 * d_all), lambda i: (0, 0)),
                pl.BlockSpec((d_all, C), lambda i: (0, 0)),
                pl.BlockSpec((1, C), lambda i: (0, 0)),
            ],
            out_specs=pl.BlockSpec((B * N, C), lambda i: (0, 0)),
        ),
        compiler_params=pltpu.CompilerParams(
            dimension_semantics=("arbitrary",)),
    )(x_flat, w_qkv_prepped, w_proj, b_proj)

    return y_flat.reshape(B, N, C)


def reference_attention(x, w_qkv, w_proj, b_proj, *, num_heads, head_dim, scale):
    B, N, C = x.shape
    d_all = num_heads * head_dim
    qkv = x @ w_qkv                                    # (B, N, 3*d_all)
    qkv = qkv.reshape(B, N, 3, num_heads, head_dim).transpose(2, 0, 3, 1, 4)
    q, k, v = qkv[0], qkv[1], qkv[2]                   # (B, H, N, hd)
    q = q * scale
    attn = q @ jnp.swapaxes(k, -2, -1)                 # (B, H, N, N)
    attn = jax.nn.softmax(attn, axis=-1)
    out = (attn @ v).transpose(0, 2, 1, 3).reshape(B, N, d_all)
    return out @ w_proj + b_proj


if __name__ == "__main__":
    # Small shapes consistent with the module: dim=C=32, num_heads=8 -> head_dim=4
    B, N, C = 2, 8, 32
    num_heads = 8
    head_dim = C // num_heads
    d_all = num_heads * head_dim
    scale = head_dim ** (-0.5)

    key = jax.random.PRNGKey(0)
    kx, kq, kp, kb = jax.random.split(key, 4)
    x = jax.random.normal(kx, (B, N, C), dtype=jnp.float32)
    # qkv: nn.Linear(dim, all_head_dim*3, bias=False) -> weight used as (C, 3*d_all)
    w_qkv = jax.random.normal(kq, (C, 3 * d_all), dtype=jnp.float32) * 0.1
    # proj: nn.Linear(all_head_dim, dim) with bias -> (d_all, C), (C,)
    w_proj = jax.random.normal(kp, (d_all, C), dtype=jnp.float32) * 0.1
    b_proj = jax.random.normal(kb, (C,), dtype=jnp.float32) * 0.1

    # One-time parameter prep (scale folded into q-columns of w_qkv).
    w_qkv_p, w_proj_p, b_proj_p = prepare_params(
        w_qkv, w_proj, b_proj,
        num_heads=num_heads, head_dim=head_dim, scale=scale)

    y = attention_forward(x, w_qkv_p, w_proj_p, b_proj_p,
                          num_heads=num_heads, head_dim=head_dim)
    y = jax.block_until_ready(y)

    y_ref = reference_attention(x, w_qkv, w_proj, b_proj,
                                num_heads=num_heads, head_dim=head_dim, scale=scale)
    assert y.shape == (B, N, C)
    # Slightly relaxed tolerance: approx=True reciprocal (EUP) in the softmax.
    assert jnp.allclose(y, y_ref, atol=2e-3, rtol=2e-3), "mismatch vs reference"
    print("KERNEL_OK")
</pallas_src>

<mosaic_0001>
module attributes {stable_mosaic.version = 11 : i64} {
  func.func @kernel(%arg0: i32, %arg1: memref<16x32xf32, #tpu.memory_space<vmem>>, %arg2: memref<32x96xf32, #tpu.memory_space<vmem>>, %arg3: memref<32x32xf32, #tpu.memory_space<vmem>>, %arg4: memref<1x32xf32, #tpu.memory_space<vmem>>, %arg5: memref<16x32xf32, #tpu.memory_space<vmem>>) attributes {dimension_semantics = [#tpu.dimension_semantics<arbitrary>], iteration_bounds = array<i64: 1>, scalar_prefetch = 0 : i64, scratch_operands = 0 : i64, tpu.core_type = #tpu.core_type<tc>, window_params = [{pipeline_mode = #tpu.pipeline_mode<synchronous>, transform_indices = @transform_0, window_bounds = array<i64: 16, 32>}, {pipeline_mode = #tpu.pipeline_mode<synchronous>, transform_indices = @transform_1, window_bounds = array<i64: 32, 96>}, {pipeline_mode = #tpu.pipeline_mode<synchronous>, transform_indices = @transform_2, window_bounds = array<i64: 32, 32>}, {pipeline_mode = #tpu.pipeline_mode<synchronous>, transform_indices = @transform_3, window_bounds = array<i64: 1, 32>}, {pipeline_mode = #tpu.pipeline_mode<synchronous>, transform_indices = @transform_4, window_bounds = array<i64: 16, 32>}]} {
    %c0 = arith.constant 0 : index
    %c0_0 = arith.constant 0 : index
    %0 = vector.load %arg1[%c0, %c0_0] : memref<16x32xf32, #tpu.memory_space<vmem>>, vector<16x32xf32>
    %c0_1 = arith.constant 0 : index
    %c0_2 = arith.constant 0 : index
    %1 = vector.load %arg2[%c0_1, %c0_2] : memref<32x96xf32, #tpu.memory_space<vmem>>, vector<32x96xf32>
    %cst = arith.constant dense<0.000000e+00> : vector<16x96xf32>
    %2 = tpu.matmul %0, %1, %cst {dimension_numbers = #tpu.dot_dimension_numbers<[1], [0], [0], [1], [0, 0, 1, 1], [], []>} : vector<16x32xf32>, vector<32x96xf32>, vector<16x96xf32> -> vector<16x96xf32>
    %3 = vector.shape_cast %2 : vector<16x96xf32> to vector<2x8x96xf32>
    %c0_3 = arith.constant 0 : index
    %c0_4 = arith.constant 0 : index
    %4 = vector.load %arg3[%c0_3, %c0_4] : memref<32x32xf32, #tpu.memory_space<vmem>>, vector<32x32xf32>
    %cst_5 = arith.constant 0.000000e+00 : f32
    %5 = vector.broadcast %cst_5 : f32 to vector<16x32xf32>
    %6 = vector.extract_strided_slice %3 {offsets = [0, 0, 0], sizes = [2, 8, 4], strides = [1, 1, 1]} : vector<2x8x96xf32> to vector<2x8x4xf32>
    %7 = vector.extract_strided_slice %3 {offsets = [0, 0, 32], sizes = [2, 8, 4], strides = [1, 1, 1]} : vector<2x8x96xf32> to vector<2x8x4xf32>
    %8 = vector.extract_strided_slice %3 {offsets = [0, 0, 64], sizes = [2, 8, 4], strides = [1, 1, 1]} : vector<2x8x96xf32> to vector<2x8x4xf32>
    "tpu.trace_start"() <{level = 10 : i32, message = "bqd,bkd->bqk"}> : () -> ()
    %cst_6 = arith.constant dense<0.000000e+00> : vector<2x8x8xf32>
    %9 = tpu.matmul %6, %7, %cst_6 {dimension_numbers = #tpu.dot_dimension_numbers<[2], [2], [1], [1], [0, 0, 0, 1, 1, 1], [0], [0]>} : vector<2x8x4xf32>, vector<2x8x4xf32>, vector<2x8x8xf32> -> vector<2x8x8xf32>
    "tpu.trace_stop"() : () -> ()
    %cst_7 = arith.constant dense<0xFF800000> : vector<2x8xf32>
    %10 = vector.multi_reduction <maximumf>, %9, %cst_7 [2] : vector<2x8x8xf32> to vector<2x8xf32>
    %11 = vector.shape_cast %10 : vector<2x8xf32> to vector<2x8x1xf32>
    %12 = vector.broadcast %11 : vector<2x8x1xf32> to vector<2x8x8xf32>
    %13 = arith.subf %9, %12 : vector<2x8x8xf32>
    %14 = math.exp %13 : vector<2x8x8xf32>
    %cst_8 = arith.constant dense<0.000000e+00> : vector<2x8xf32>
    %15 = vector.multi_reduction <add>, %14, %cst_8 [2] : vector<2x8x8xf32> to vector<2x8xf32>
    %16 = vector.shape_cast %15 : vector<2x8xf32> to vector<2x8x1xf32>
    %17 = tpu.reciprocal %16 {approx = true} : vector<2x8x1xf32> -> vector<2x8x1xf32>
    "tpu.trace_start"() <{level = 10 : i32, message = "bqk,bkd->bqd"}> : () -> ()
    %cst_9 = arith.constant dense<0.000000e+00> : vector<2x8x4xf32>
    %18 = tpu.matmul %14, %8, %cst_9 {dimension_numbers = #tpu.dot_dimension_numbers<[2], [1], [1], [2], [0, 0, 0, 1, 1, 2], [0], [0]>} : vector<2x8x8xf32>, vector<2x8x4xf32>, vector<2x8x4xf32> -> vector<2x8x4xf32>
    "tpu.trace_stop"() : () -> ()
    %19 = vector.broadcast %17 : vector<2x8x1xf32> to vector<2x8x4xf32>
    %20 = arith.mulf %18, %19 : vector<2x8x4xf32>
    %21 = vector.shape_cast %20 : vector<2x8x4xf32> to vector<16x4xf32>
    %22 = vector.extract_strided_slice %4 {offsets = [0, 0], sizes = [4, 32], strides = [1, 1]} : vector<32x32xf32> to vector<4x32xf32>
    %cst_10 = arith.constant dense<0.000000e+00> : vector<16x32xf32>
    %23 = tpu.matmul %21, %22, %cst_10 {dimension_numbers = #tpu.dot_dimension_numbers<[1], [0], [0], [1], [0, 0, 1, 1], [], []>} : vector<16x4xf32>, vector<4x32xf32>, vector<16x32xf32> -> vector<16x32xf32>
    %24 = arith.addf %5, %23 : vector<16x32xf32>
    %25 = vector.extract_strided_slice %3 {offsets = [0, 0, 4], sizes = [2, 8, 4], strides = [1, 1, 1]} : vector<2x8x96xf32> to vector<2x8x4xf32>
    %26 = vector.extract_strided_slice %3 {offsets = [0, 0, 36], sizes = [2, 8, 4], strides = [1, 1, 1]} : vector<2x8x96xf32> to vector<2x8x4xf32>
    %27 = vector.extract_strided_slice %3 {offsets = [0, 0, 68], sizes = [2, 8, 4], strides = [1, 1, 1]} : vector<2x8x96xf32> to vector<2x8x4xf32>
    "tpu.trace_start"() <{level = 10 : i32, message = "bqd,bkd->bqk"}> : () -> ()
    %cst_11 = arith.constant dense<0.000000e+00> : vector<2x8x8xf32>
    %28 = tpu.matmul %25, %26, %cst_11 {dimension_numbers = #tpu.dot_dimension_numbers<[2], [2], [1], [1], [0, 0, 0, 1, 1, 1], [0], [0]>} : vector<2x8x4xf32>, vector<2x8x4xf32>, vector<2x8x8xf32> -> vector<2x8x8xf32>
    "tpu.trace_stop"() : () -> ()
    %cst_12 = arith.constant dense<0xFF800000> : vector<2x8xf32>
    %29 = vector.multi_reduction <maximumf>, %28, %cst_12 [2] : vector<2x8x8xf32> to vector<2x8xf32>
    %30 = vector.shape_cast %29 : vector<2x8xf32> to vector<2x8x1xf32>
    %31 = vector.broadcast %30 : vector<2x8x1xf32> to vector<2x8x8xf32>
    %32 = arith.subf %28, %31 : vector<2x8x8xf32>
    %33 = math.exp %32 : vector<2x8x8xf32>
    %cst_13 = arith.constant dense<0.000000e+00> : vector<2x8xf32>
    %34 = vector.multi_reduction <add>, %33, %cst_13 [2] : vector<2x8x8xf32> to vector<2x8xf32>
    %35 = vector.shape_cast %34 : vector<2x8xf32> to vector<2x8x1xf32>
    %36 = tpu.reciprocal %35 {approx = true} : vector<2x8x1xf32> -> vector<2x8x1xf32>
    "tpu.trace_start"() <{level = 10 : i32, message = "bqk,bkd->bqd"}> : () -> ()
    %cst_14 = arith.constant dense<0.000000e+00> : vector<2x8x4xf32>
    %37 = tpu.matmul %33, %27, %cst_14 {dimension_numbers = #tpu.dot_dimension_numbers<[2], [1], [1], [2], [0, 0, 0, 1, 1, 2], [0], [0]>} : vector<2x8x8xf32>, vector<2x8x4xf32>, vector<2x8x4xf32> -> vector<2x8x4xf32>
    "tpu.trace_stop"() : () -> ()
    %38 = vector.broadcast %36 : vector<2x8x1xf32> to vector<2x8x4xf32>
    %39 = arith.mulf %37, %38 : vector<2x8x4xf32>
    %40 = vector.shape_cast %39 : vector<2x8x4xf32> to vector<16x4xf32>
    %41 = vector.extract_strided_slice %4 {offsets = [4, 0], sizes = [4, 32], strides = [1, 1]} : vector<32x32xf32> to vector<4x32xf32>
    %cst_15 = arith.constant dense<0.000000e+00> : vector<16x32xf32>
    %42 = tpu.matmul %40, %41, %cst_15 {dimension_numbers = #tpu.dot_dimension_numbers<[1], [0], [0], [1], [0, 0, 1, 1], [], []>} : vector<16x4xf32>, vector<4x32xf32>, vector<16x32xf32> -> vector<16x32xf32>
    %43 = arith.addf %24, %42 : vector<16x32xf32>
    %44 = vector.extract_strided_slice %3 {offsets = [0, 0, 8], sizes = [2, 8, 4], strides = [1, 1, 1]} : vector<2x8x96xf32> to vector<2x8x4xf32>
    %45 = vector.extract_strided_slice %3 {offsets = [0, 0, 40], sizes = [2, 8, 4], strides = [1, 1, 1]} : vector<2x8x96xf32> to vector<2x8x4xf32>
    %46 = vector.extract_strided_slice %3 {offsets = [0, 0, 72], sizes = [2, 8, 4], strides = [1, 1, 1]} : vector<2x8x96xf32> to vector<2x8x4xf32>
    "tpu.trace_start"() <{level = 10 : i32, message = "bqd,bkd->bqk"}> : () -> ()
    %cst_16 = arith.constant dense<0.000000e+00> : vector<2x8x8xf32>
    %47 = tpu.matmul %44, %45, %cst_16 {dimension_numbers = #tpu.dot_dimension_numbers<[2], [2], [1], [1], [0, 0, 0, 1, 1, 1], [0], [0]>} : vector<2x8x4xf32>, vector<2x8x4xf32>, vector<2x8x8xf32> -> vector<2x8x8xf32>
    "tpu.trace_stop"() : () -> ()
    %cst_17 = arith.constant dense<0xFF800000> : vector<2x8xf32>
    %48 = vector.multi_reduction <maximumf>, %47, %cst_17 [2] : vector<2x8x8xf32> to vector<2x8xf32>
    %49 = vector.shape_cast %48 : vector<2x8xf32> to vector<2x8x1xf32>
    %50 = vector.broadcast %49 : vector<2x8x1xf32> to vector<2x8x8xf32>
    %51 = arith.subf %47, %50 : vector<2x8x8xf32>
    %52 = math.exp %51 : vector<2x8x8xf32>
    %cst_18 = arith.constant dense<0.000000e+00> : vector<2x8xf32>
    %53 = vector.multi_reduction <add>, %52, %cst_18 [2] : vector<2x8x8xf32> to vector<2x8xf32>
    %54 = vector.shape_cast %53 : vector<2x8xf32> to vector<2x8x1xf32>
    %55 = tpu.reciprocal %54 {approx = true} : vector<2x8x1xf32> -> vector<2x8x1xf32>
    "tpu.trace_start"() <{level = 10 : i32, message = "bqk,bkd->bqd"}> : () -> ()
    %cst_19 = arith.constant dense<0.000000e+00> : vector<2x8x4xf32>
    %56 = tpu.matmul %52, %46, %cst_19 {dimension_numbers = #tpu.dot_dimension_numbers<[2], [1], [1], [2], [0, 0, 0, 1, 1, 2], [0], [0]>} : vector<2x8x8xf32>, vector<2x8x4xf32>, vector<2x8x4xf32> -> vector<2x8x4xf32>
    "tpu.trace_stop"() : () -> ()
    %57 = vector.broadcast %55 : vector<2x8x1xf32> to vector<2x8x4xf32>
    %58 = arith.mulf %56, %57 : vector<2x8x4xf32>
    %59 = vector.shape_cast %58 : vector<2x8x4xf32> to vector<16x4xf32>
    %60 = vector.extract_strided_slice %4 {offsets = [8, 0], sizes = [4, 32], strides = [1, 1]} : vector<32x32xf32> to vector<4x32xf32>
    %cst_20 = arith.constant dense<0.000000e+00> : vector<16x32xf32>
    %61 = tpu.matmul %59, %60, %cst_20 {dimension_numbers = #tpu.dot_dimension_numbers<[1], [0], [0], [1], [0, 0, 1, 1], [], []>} : vector<16x4xf32>, vector<4x32xf32>, vector<16x32xf32> -> vector<16x32xf32>
    %62 = arith.addf %43, %61 : vector<16x32xf32>
    %63 = vector.extract_strided_slice %3 {offsets = [0, 0, 12], sizes = [2, 8, 4], strides = [1, 1, 1]} : vector<2x8x96xf32> to vector<2x8x4xf32>
    %64 = vector.extract_strided_slice %3 {offsets = [0, 0, 44], sizes = [2, 8, 4], strides = [1, 1, 1]} : vector<2x8x96xf32> to vector<2x8x4xf32>
    %65 = vector.extract_strided_slice %3 {offsets = [0, 0, 76], sizes = [2, 8, 4], strides = [1, 1, 1]} : vector<2x8x96xf32> to vector<2x8x4xf32>
    "tpu.trace_start"() <{level = 10 : i32, message = "bqd,bkd->bqk"}> : () -> ()
    %cst_21 = arith.constant dense<0.000000e+00> : vector<2x8x8xf32>
    %66 = tpu.matmul %63, %64, %cst_21 {dimension_numbers = #tpu.dot_dimension_numbers<[2], [2], [1], [1], [0, 0, 0, 1, 1, 1], [0], [0]>} : vector<2x8x4xf32>, vector<2x8x4xf32>, vector<2x8x8xf32> -> vector<2x8x8xf32>
    "tpu.trace_stop"() : () -> ()
    %cst_22 = arith.constant dense<0xFF800000> : vector<2x8xf32>
    %67 = vector.multi_reduction <maximumf>, %66, %cst_22 [2] : vector<2x8x8xf32> to vector<2x8xf32>
    %68 = vector.shape_cast %67 : vector<2x8xf32> to vector<2x8x1xf32>
    %69 = vector.broadcast %68 : vector<2x8x1xf32> to vector<2x8x8xf32>
    %70 = arith.subf %66, %69 : vector<2x8x8xf32>
    %71 = math.exp %70 : vector<2x8x8xf32>
    %cst_23 = arith.constant dense<0.000000e+00> : vector<2x8xf32>
    %72 = vector.multi_reduction <add>, %71, %cst_23 [2] : vector<2x8x8xf32> to vector<2x8xf32>
    %73 = vector.shape_cast %72 : vector<2x8xf32> to vector<2x8x1xf32>
    %74 = tpu.reciprocal %73 {approx = true} : vector<2x8x1xf32> -> vector<2x8x1xf32>
    "tpu.trace_start"() <{level = 10 : i32, message = "bqk,bkd->bqd"}> : () -> ()
    %cst_24 = arith.constant dense<0.000000e+00> : vector<2x8x4xf32>
    %75 = tpu.matmul %71, %65, %cst_24 {dimension_numbers = #tpu.dot_dimension_numbers<[2], [1], [1], [2], [0, 0, 0, 1, 1, 2], [0], [0]>} : vector<2x8x8xf32>, vector<2x8x4xf32>, vector<2x8x4xf32> -> vector<2x8x4xf32>
    "tpu.trace_stop"() : () -> ()
    %76 = vector.broadcast %74 : vector<2x8x1xf32> to vector<2x8x4xf32>
    %77 = arith.mulf %75, %76 : vector<2x8x4xf32>
    %78 = vector.shape_cast %77 : vector<2x8x4xf32> to vector<16x4xf32>
    %79 = vector.extract_strided_slice %4 {offsets = [12, 0], sizes = [4, 32], strides = [1, 1]} : vector<32x32xf32> to vector<4x32xf32>
    %cst_25 = arith.constant dense<0.000000e+00> : vector<16x32xf32>
    %80 = tpu.matmul %78, %79, %cst_25 {dimension_numbers = #tpu.dot_dimension_numbers<[1], [0], [0], [1], [0, 0, 1, 1], [], []>} : vector<16x4xf32>, vector<4x32xf32>, vector<16x32xf32> -> vector<16x32xf32>
    %81 = arith.addf %62, %80 : vector<16x32xf32>
    %82 = vector.extract_strided_slice %3 {offsets = [0, 0, 16], sizes = [2, 8, 4], strides = [1, 1, 1]} : vector<2x8x96xf32> to vector<2x8x4xf32>
    %83 = vector.extract_strided_slice %3 {offsets = [0, 0, 48], sizes = [2, 8, 4], strides = [1, 1, 1]} : vector<2x8x96xf32> to vector<2x8x4xf32>
    %84 = vector.extract_strided_slice %3 {offsets = [0, 0, 80], sizes = [2, 8, 4], strides = [1, 1, 1]} : vector<2x8x96xf32> to vector<2x8x4xf32>
    "tpu.trace_start"() <{level = 10 : i32, message = "bqd,bkd->bqk"}> : () -> ()
    %cst_26 = arith.constant dense<0.000000e+00> : vector<2x8x8xf32>
    %85 = tpu.matmul %82, %83, %cst_26 {dimension_numbers = #tpu.dot_dimension_numbers<[2], [2], [1], [1], [0, 0, 0, 1, 1, 1], [0], [0]>} : vector<2x8x4xf32>, vector<2x8x4xf32>, vector<2x8x8xf32> -> vector<2x8x8xf32>
    "tpu.trace_stop"() : () -> ()
    %cst_27 = arith.constant dense<0xFF800000> : vector<2x8xf32>
    %86 = vector.multi_reduction <maximumf>, %85, %cst_27 [2] : vector<2x8x8xf32> to vector<2x8xf32>
    %87 = vector.shape_cast %86 : vector<2x8xf32> to vector<2x8x1xf32>
    %88 = vector.broadcast %87 : vector<2x8x1xf32> to vector<2x8x8xf32>
    %89 = arith.subf %85, %88 : vector<2x8x8xf32>
    %90 = math.exp %89 : vector<2x8x8xf32>
    %cst_28 = arith.constant dense<0.000000e+00> : vector<2x8xf32>
    %91 = vector.multi_reduction <add>, %90, %cst_28 [2] : vector<2x8x8xf32> to vector<2x8xf32>
    %92 = vector.shape_cast %91 : vector<2x8xf32> to vector<2x8x1xf32>
    %93 = tpu.reciprocal %92 {approx = true} : vector<2x8x1xf32> -> vector<2x8x1xf32>
    "tpu.trace_start"() <{level = 10 : i32, message = "bqk,bkd->bqd"}> : () -> ()
    %cst_29 = arith.constant dense<0.000000e+00> : vector<2x8x4xf32>
    %94 = tpu.matmul %90, %84, %cst_29 {dimension_numbers = #tpu.dot_dimension_numbers<[2], [1], [1], [2], [0, 0, 0, 1, 1, 2], [0], [0]>} : vector<2x8x8xf32>, vector<2x8x4xf32>, vector<2x8x4xf32> -> vector<2x8x4xf32>
    "tpu.trace_stop"() : () -> ()
    %95 = vector.broadcast %93 : vector<2x8x1xf32> to vector<2x8x4xf32>
    %96 = arith.mulf %94, %95 : vector<2x8x4xf32>
    %97 = vector.shape_cast %96 : vector<2x8x4xf32> to vector<16x4xf32>
    %98 = vector.extract_strided_slice %4 {offsets = [16, 0], sizes = [4, 32], strides = [1, 1]} : vector<32x32xf32> to vector<4x32xf32>
    %cst_30 = arith.constant dense<0.000000e+00> : vector<16x32xf32>
    %99 = tpu.matmul %97, %98, %cst_30 {dimension_numbers = #tpu.dot_dimension_numbers<[1], [0], [0], [1], [0, 0, 1, 1], [], []>} : vector<16x4xf32>, vector<4x32xf32>, vector<16x32xf32> -> vector<16x32xf32>
    %100 = arith.addf %81, %99 : vector<16x32xf32>
    %101 = vector.extract_strided_slice %3 {offsets = [0, 0, 20], sizes = [2, 8, 4], strides = [1, 1, 1]} : vector<2x8x96xf32> to vector<2x8x4xf32>
    %102 = vector.extract_strided_slice %3 {offsets = [0, 0, 52], sizes = [2, 8, 4], strides = [1, 1, 1]} : vector<2x8x96xf32> to vector<2x8x4xf32>
    %103 = vector.extract_strided_slice %3 {offsets = [0, 0, 84], sizes = [2, 8, 4], strides = [1, 1, 1]} : vector<2x8x96xf32> to vector<2x8x4xf32>
    "tpu.trace_start"() <{level = 10 : i32, message = "bqd,bkd->bqk"}> : () -> ()
    %cst_31 = arith.constant dense<0.000000e+00> : vector<2x8x8xf32>
    %104 = tpu.matmul %101, %102, %cst_31 {dimension_numbers = #tpu.dot_dimension_numbers<[2], [2], [1], [1], [0, 0, 0, 1, 1, 1], [0], [0]>} : vector<2x8x4xf32>, vector<2x8x4xf32>, vector<2x8x8xf32> -> vector<2x8x8xf32>
    "tpu.trace_stop"() : () -> ()
    %cst_32 = arith.constant dense<0xFF800000> : vector<2x8xf32>
    %105 = vector.multi_reduction <maximumf>, %104, %cst_32 [2] : vector<2x8x8xf32> to vector<2x8xf32>
    %106 = vector.shape_cast %105 : vector<2x8xf32> to vector<2x8x1xf32>
    %107 = vector.broadcast %106 : vector<2x8x1xf32> to vector<2x8x8xf32>
    %108 = arith.subf %104, %107 : vector<2x8x8xf32>
    %109 = math.exp %108 : vector<2x8x8xf32>
    %cst_33 = arith.constant dense<0.000000e+00> : vector<2x8xf32>
    %110 = vector.multi_reduction <add>, %109, %cst_33 [2] : vector<2x8x8xf32> to vector<2x8xf32>
    %111 = vector.shape_cast %110 : vector<2x8xf32> to vector<2x8x1xf32>
    %112 = tpu.reciprocal %111 {approx = true} : vector<2x8x1xf32> -> vector<2x8x1xf32>
    "tpu.trace_start"() <{level = 10 : i32, message = "bqk,bkd->bqd"}> : () -> ()
    %cst_34 = arith.constant dense<0.000000e+00> : vector<2x8x4xf32>
    %113 = tpu.matmul %109, %103, %cst_34 {dimension_numbers = #tpu.dot_dimension_numbers<[2], [1], [1], [2], [0, 0, 0, 1, 1, 2], [0], [0]>} : vector<2x8x8xf32>, vector<2x8x4xf32>, vector<2x8x4xf32> -> vector<2x8x4xf32>
    "tpu.trace_stop"() : () -> ()
    %114 = vector.broadcast %112 : vector<2x8x1xf32> to vector<2x8x4xf32>
    %115 = arith.mulf %113, %114 : vector<2x8x4xf32>
    %116 = vector.shape_cast %115 : vector<2x8x4xf32> to vector<16x4xf32>
    %117 = vector.extract_strided_slice %4 {offsets = [20, 0], sizes = [4, 32], strides = [1, 1]} : vector<32x32xf32> to vector<4x32xf32>
    %cst_35 = arith.constant dense<0.000000e+00> : vector<16x32xf32>
    %118 = tpu.matmul %116, %117, %cst_35 {dimension_numbers = #tpu.dot_dimension_numbers<[1], [0], [0], [1], [0, 0, 1, 1], [], []>} : vector<16x4xf32>, vector<4x32xf32>, vector<16x32xf32> -> vector<16x32xf32>
    %119 = arith.addf %100, %118 : vector<16x32xf32>
    %120 = vector.extract_strided_slice %3 {offsets = [0, 0, 24], sizes = [2, 8, 4], strides = [1, 1, 1]} : vector<2x8x96xf32> to vector<2x8x4xf32>
    %121 = vector.extract_strided_slice %3 {offsets = [0, 0, 56], sizes = [2, 8, 4], strides = [1, 1, 1]} : vector<2x8x96xf32> to vector<2x8x4xf32>
    %122 = vector.extract_strided_slice %3 {offsets = [0, 0, 88], sizes = [2, 8, 4], strides = [1, 1, 1]} : vector<2x8x96xf32> to vector<2x8x4xf32>
    "tpu.trace_start"() <{level = 10 : i32, message = "bqd,bkd->bqk"}> : () -> ()
    %cst_36 = arith.constant dense<0.000000e+00> : vector<2x8x8xf32>
    %123 = tpu.matmul %120, %121, %cst_36 {dimension_numbers = #tpu.dot_dimension_numbers<[2], [2], [1], [1], [0, 0, 0, 1, 1, 1], [0], [0]>} : vector<2x8x4xf32>, vector<2x8x4xf32>, vector<2x8x8xf32> -> vector<2x8x8xf32>
    "tpu.trace_stop"() : () -> ()
    %cst_37 = arith.constant dense<0xFF800000> : vector<2x8xf32>
    %124 = vector.multi_reduction <maximumf>, %123, %cst_37 [2] : vector<2x8x8xf32> to vector<2x8xf32>
    %125 = vector.shape_cast %124 : vector<2x8xf32> to vector<2x8x1xf32>
    %126 = vector.broadcast %125 : vector<2x8x1xf32> to vector<2x8x8xf32>
    %127 = arith.subf %123, %126 : vector<2x8x8xf32>
    %128 = math.exp %127 : vector<2x8x8xf32>
    %cst_38 = arith.constant dense<0.000000e+00> : vector<2x8xf32>
    %129 = vector.multi_reduction <add>, %128, %cst_38 [2] : vector<2x8x8xf32> to vector<2x8xf32>
    %130 = vector.shape_cast %129 : vector<2x8xf32> to vector<2x8x1xf32>
    %131 = tpu.reciprocal %130 {approx = true} : vector<2x8x1xf32> -> vector<2x8x1xf32>
    "tpu.trace_start"() <{level = 10 : i32, message = "bqk,bkd->bqd"}> : () -> ()
    %cst_39 = arith.constant dense<0.000000e+00> : vector<2x8x4xf32>
    %132 = tpu.matmul %128, %122, %cst_39 {dimension_numbers = #tpu.dot_dimension_numbers<[2], [1], [1], [2], [0, 0, 0, 1, 1, 2], [0], [0]>} : vector<2x8x8xf32>, vector<2x8x4xf32>, vector<2x8x4xf32> -> vector<2x8x4xf32>
    "tpu.trace_stop"() : () -> ()
    %133 = vector.broadcast %131 : vector<2x8x1xf32> to vector<2x8x4xf32>
    %134 = arith.mulf %132, %133 : vector<2x8x4xf32>
    %135 = vector.shape_cast %134 : vector<2x8x4xf32> to vector<16x4xf32>
    %136 = vector.extract_strided_slice %4 {offsets = [24, 0], sizes = [4, 32], strides = [1, 1]} : vector<32x32xf32> to vector<4x32xf32>
    %cst_40 = arith.constant dense<0.000000e+00> : vector<16x32xf32>
    %137 = tpu.matmul %135, %136, %cst_40 {dimension_numbers = #tpu.dot_dimension_numbers<[1], [0], [0], [1], [0, 0, 1, 1], [], []>} : vector<16x4xf32>, vector<4x32xf32>, vector<16x32xf32> -> vector<16x32xf32>
    %138 = arith.addf %119, %137 : vector<16x32xf32>
    %139 = vector.extract_strided_slice %3 {offsets = [0, 0, 28], sizes = [2, 8, 4], strides = [1, 1, 1]} : vector<2x8x96xf32> to vector<2x8x4xf32>
    %140 = vector.extract_strided_slice %3 {offsets = [0, 0, 60], sizes = [2, 8, 4], strides = [1, 1, 1]} : vector<2x8x96xf32> to vector<2x8x4xf32>
    %141 = vector.extract_strided_slice %3 {offsets = [0, 0, 92], sizes = [2, 8, 4], strides = [1, 1, 1]} : vector<2x8x96xf32> to vector<2x8x4xf32>
    "tpu.trace_start"() <{level = 10 : i32, message = "bqd,bkd->bqk"}> : () -> ()
    %cst_41 = arith.constant dense<0.000000e+00> : vector<2x8x8xf32>
    %142 = tpu.matmul %139, %140, %cst_41 {dimension_numbers = #tpu.dot_dimension_numbers<[2], [2], [1], [1], [0, 0, 0, 1, 1, 1], [0], [0]>} : vector<2x8x4xf32>, vector<2x8x4xf32>, vector<2x8x8xf32> -> vector<2x8x8xf32>
    "tpu.trace_stop"() : () -> ()
    %cst_42 = arith.constant dense<0xFF800000> : vector<2x8xf32>
    %143 = vector.multi_reduction <maximumf>, %142, %cst_42 [2] : vector<2x8x8xf32> to vector<2x8xf32>
    %144 = vector.shape_cast %143 : vector<2x8xf32> to vector<2x8x1xf32>
    %145 = vector.broadcast %144 : vector<2x8x1xf32> to vector<2x8x8xf32>
    %146 = arith.subf %142, %145 : vector<2x8x8xf32>
    %147 = math.exp %146 : vector<2x8x8xf32>
    %cst_43 = arith.constant dense<0.000000e+00> : vector<2x8xf32>
    %148 = vector.multi_reduction <add>, %147, %cst_43 [2] : vector<2x8x8xf32> to vector<2x8xf32>
    %149 = vector.shape_cast %148 : vector<2x8xf32> to vector<2x8x1xf32>
    %150 = tpu.reciprocal %149 {approx = true} : vector<2x8x1xf32> -> vector<2x8x1xf32>
    "tpu.trace_start"() <{level = 10 : i32, message = "bqk,bkd->bqd"}> : () -> ()
    %cst_44 = arith.constant dense<0.000000e+00> : vector<2x8x4xf32>
    %151 = tpu.matmul %147, %141, %cst_44 {dimension_numbers = #tpu.dot_dimension_numbers<[2], [1], [1], [2], [0, 0, 0, 1, 1, 2], [0], [0]>} : vector<2x8x8xf32>, vector<2x8x4xf32>, vector<2x8x4xf32> -> vector<2x8x4xf32>
    "tpu.trace_stop"() : () -> ()
    %152 = vector.broadcast %150 : vector<2x8x1xf32> to vector<2x8x4xf32>
    %153 = arith.mulf %151, %152 : vector<2x8x4xf32>
    %154 = vector.shape_cast %153 : vector<2x8x4xf32> to vector<16x4xf32>
    %155 = vector.extract_strided_slice %4 {offsets = [28, 0], sizes = [4, 32], strides = [1, 1]} : vector<32x32xf32> to vector<4x32xf32>
    %cst_45 = arith.constant dense<0.000000e+00> : vector<16x32xf32>
    %156 = tpu.matmul %154, %155, %cst_45 {dimension_numbers = #tpu.dot_dimension_numbers<[1], [0], [0], [1], [0, 0, 1, 1], [], []>} : vector<16x4xf32>, vector<4x32xf32>, vector<16x32xf32> -> vector<16x32xf32>
    %157 = arith.addf %138, %156 : vector<16x32xf32>
    %c0_46 = arith.constant 0 : index
    %c0_47 = arith.constant 0 : index
    %158 = vector.load %arg4[%c0_46, %c0_47] : memref<1x32xf32, #tpu.memory_space<vmem>>, vector<1x32xf32>
    %159 = vector.broadcast %158 : vector<1x32xf32> to vector<16x32xf32>
    %160 = arith.addf %157, %159 : vector<16x32xf32>
    %c0_48 = arith.constant 0 : index
    %c0_49 = arith.constant 0 : index
    %161 = vector.load %arg5[%c0_48, %c0_49] : memref<16x32xf32, #tpu.memory_space<vmem>>, vector<16x32xf32>
    tpu.vector_store %arg5[%c0_48, %c0_49], %160 {strides = array<i32>} : memref<16x32xf32, #tpu.memory_space<vmem>>, vector<16x32xf32>,
    return
  }
  func.func @transform_0(%arg0: i32) -> (i32, i32) {
    %c0_i32 = arith.constant 0 : i32
    %c0_i32_0 = arith.constant 0 : i32
    %c0_i32_1 = arith.constant 0 : i32
    return %c0_i32, %c0_i32_0 : i32, i32
  }
  func.func @transform_1(%arg0: i32) -> (i32, i32) {
    %c0_i32 = arith.constant 0 : i32
    %c0_i32_0 = arith.constant 0 : i32
    %c0_i32_1 = arith.constant 0 : i32
    return %c0_i32, %c0_i32_0 : i32, i32
  }
  func.func @transform_2(%arg0: i32) -> (i32, i32) {
    %c0_i32 = arith.constant 0 : i32
    %c0_i32_0 = arith.constant 0 : i32
    %c0_i32_1 = arith.constant 0 : i32
    return %c0_i32, %c0_i32_0 : i32, i32
  }
  func.func @transform_3(%arg0: i32) -> (i32, i32) {
    %c0_i32 = arith.constant 0 : i32
    %c0_i32_0 = arith.constant 0 : i32
    %c0_i32_1 = arith.constant 0 : i32
    return %c0_i32, %c0_i32_0 : i32, i32
  }
  func.func @transform_4(%arg0: i32) -> (i32, i32) {
    %c0_i32 = arith.constant 0 : i32
    %c0_i32_0 = arith.constant 0 : i32
    %c0_i32_1 = arith.constant 0 : i32
    return %c0_i32, %c0_i32_0 : i32, i32
  }
}

</mosaic_0001>

<llo_original>
// kernel: tpu_custom_call.1
$region0: #{tpu_custom_call.1}
  #allocation0 [shape = 'u32[]', space=smem, size = 0x4, offset = 0x4, fixed_abs, tag = 'smem constant byte address 0x4 - core index']
  #allocation1 [shape = 'u32[144,128]{1,0:T(1,128)}', space=vmem, size = 0x12000, scoped, tag = 'internal scratch']
  %s0 = inlined_call_operand.hbm [shape: f32[16,32], index: 0, kind: input, shape index: {}]
  %s1 = inlined_call_operand.hbm [shape: f32[32,96], index: 1, kind: input, shape index: {}]
  %s2 = inlined_call_operand.hbm [shape: f32[32,32], index: 2, kind: input, shape index: {}]
  %s3 = inlined_call_operand.vmem [shape: f32[1,32], index: 3, kind: input, shape index: {}]
  %s4 = inlined_call_operand.hbm [shape: f32[16,32], index: 4, kind: output, shape index: {}]
  %s5 = sld [smem:[#allocation0]]
  $region38: #{tpu_custom_call.1} parent=0
    _
  %s7 = ssub.s32 1, %s5
  %s8 = scalar_select 0, %s7, %s5
  $region1: #{tpu_custom_call.1} parent=0
    #allocation2 [shape = 'u8[8192]{0}', space=vmem, size = 0x2000, scoped, tag = 'input window, operand 0, single buffered']
    #allocation3 [shape = 's32[1]{0}', space=sflag, size = 0x4, scoped, tag = 'scoped memory for tpu_custom_call.1']
    #allocation4 [shape = 's32[1]{0}', space=sflag, size = 0x4, scoped, tag = 'scoped memory for tpu_custom_call.1']
    #allocation5 [shape = 'u8[16384]{0}', space=vmem, size = 0x4000, scoped, tag = 'input window, operand 1, single buffered']
    #allocation6 [shape = 's32[1]{0}', space=sflag, size = 0x4, scoped, tag = 'scoped memory for tpu_custom_call.1']
    #allocation7 [shape = 'u8[16384]{0}', space=vmem, size = 0x4000, scoped, tag = 'input window, operand 2, single buffered']
    #allocation8 [shape = 'u8[8192]{0}', space=vmem, size = 0x2000, scoped, tag = 'output window, operand 0, single buffered']
    %9 = vsyncpa [#allocation3], 0
    %10 = vsyncpa [#allocation6], 0
    %11 = vsyncpa [#allocation4], 0
    // Predicated region
    $region2: #{tpu_custom_call.1} parent=1 // pred_check
      _
    $region3: #{tpu_custom_call.1} parent=1 // pred_check_branch
      %13 = sbr.rel (0) target = $region5
    $region4: #{tpu_custom_call.1} parent=1 // pred_region
      %s15 = ssub.s32 256, 256
      %16 = vsyncadd [#allocation3], %s15
      %s17 = sshll.u32 [#allocation2], 4
      %s18 = int_to_ptr.vmem [resolvable:$true] %s17
      %23 = dma.hbm_to_vmem [thread:$0]  %s0, 256, %s18, [#allocation3], 128, 128, 8
    $region5: #{tpu_custom_call.1} parent=1 // pred_fallthru
      _
    // Predicated region
    $region6: #{tpu_custom_call.1} parent=1 // pred_check
      _
    $region7: #{tpu_custom_call.1} parent=1 // pred_check_branch
      %25 = sbr.rel (0) target = $region9
    $region8: #{tpu_custom_call.1} parent=1 // pred_region
      %s27 = ssub.s32 512, 512
      %28 = vsyncadd [#allocation6], %s27
      %s29 = sshll.u32 [#allocation5], 4
      %s30 = int_to_ptr.vmem [resolvable:$true] %s29
      %35 = dma.hbm_to_vmem [thread:$0]  %s1, 512, %s30, [#allocation6], 128, 128, 8
    $region9: #{tpu_custom_call.1} parent=1 // pred_fallthru
      _
    // Predicated region
    $region10: #{tpu_custom_call.1} parent=1 // pred_check
      _
    $region11: #{tpu_custom_call.1} parent=1 // pred_check_branch
      %37 = sbr.rel (0) target = $region13
    $region12: #{tpu_custom_call.1} parent=1 // pred_region
      %s39 = ssub.s32 512, 512
      %40 = vsyncadd [#allocation6], %s39
      %s41 = sshll.u32 [#allocation7], 4
      %s42 = int_to_ptr.vmem [resolvable:$true] %s41
      %47 = dma.hbm_to_vmem [thread:$0]  %s2, 512, %s42, [#allocation6], 128, 128, 8
    $region13: #{tpu_custom_call.1} parent=1 // pred_fallthru
      _
    // Predicated region
    $region14: #{tpu_custom_call.1} parent=1 // pred_check
      _
    $region15: #{tpu_custom_call.1} parent=1 // pred_check_branch
      %49 = sbr.rel (0) target = $region17
    $region16: #{tpu_custom_call.1} parent=1 // pred_region
      _
    $region17: #{tpu_custom_call.1} parent=1 // pred_fallthru
      _
    // Predicated region
    $region18: #{tpu_custom_call.1} parent=1 // pred_check
      _
    $region19: #{tpu_custom_call.1} parent=1 // pred_check_branch
      %51 = sbr.rel (0) target = $region21
    $region20: #{tpu_custom_call.1} parent=1 // pred_region
      %52 = dma.done [#allocation3], 256
    $region21: #{tpu_custom_call.1} parent=1 // pred_fallthru
      _
    // Predicated region
    $region22: #{tpu_custom_call.1} parent=1 // pred_check
      _
    $region23: #{tpu_custom_call.1} parent=1 // pred_check_branch
      %54 = sbr.rel (0) target = $region25
    $region24: #{tpu_custom_call.1} parent=1 // pred_region
      %55 = dma.done [#allocation6], 512
    $region25: #{tpu_custom_call.1} parent=1 // pred_fallthru
      _
    // Predicated region
    $region26: #{tpu_custom_call.1} parent=1 // pred_check
      _
    $region27: #{tpu_custom_call.1} parent=1 // pred_check_branch
      %57 = sbr.rel (0) target = $region29
    $region28: #{tpu_custom_call.1} parent=1 // pred_region
      %58 = dma.done [#allocation6], 512
    $region29: #{tpu_custom_call.1} parent=1 // pred_fallthru
      _
    %v59 = vld [vmem:[#allocation2] sm:$0xff]
    %v60 = vld [vmem:[#allocation2 + $0x8] sm:$0xff]
    %v61 = vld [vmem:[#allocation5] sm:$0xff]
    %v62 = vld [vmem:[#allocation5 + $0x8] sm:$0xff]
    %v63 = vld [vmem:[#allocation5 + $0x10] sm:$0xff]
    %v64 = vld [vmem:[#allocation5 + $0x18] sm:$0xff]
    %vm65 = vcmask 261120
    %v67 = vsel %vm65, %v59, 0
    %v70 = vsel %vm65, %v60, 0
    %72 = vmatprep.subr.mxu0 0.0
    %73 = vmatpush1.msra.mxu0 0.0
    %74 = vmatprep.subr.mxu0 0.0
    %75 = vmatpush1.msra.mxu0 0.0
    %76 = vmatprep.subr.mxu0 0.0
    %77 = vmatpush1.msra.mxu0 0.0
    %78 = vmatprep.subr.mxu0 0.0
    %79 = vmatpush1.msra.mxu0 0.0
    %80 = vmatprep.subr.mxu0 0.0
    %81 = vmatpush1.msra.mxu0 0.0
    %82 = vmatprep.subr.mxu0 0.0
    %83 = vmatpush1.msra.mxu0 0.0
    %84 = vmatprep.subr.mxu0 0.0
    %85 = vmatpush1.msra.mxu0 0.0
    %86 = vmatprep.subr.mxu0 0.0
    %87 = vmatpush1.msra.mxu0 0.0
    %88 = vmatprep.subr.mxu0 0.0
    %89 = vmatpush1.msra.mxu0 0.0
    %90 = vmatprep.subr.mxu0 0.0
    %91 = vmatpush1.msra.mxu0 0.0
    %92 = vmatprep.subr.mxu0 0.0
    %93 = vmatpush1.msra.mxu0 0.0
    %94 = vmatprep.subr.mxu0 0.0
    %95 = vmatpush1.msra.mxu0 0.0
    %96 = vmatprep.subr.mxu0 0.0
    %97 = vmatpush1.msra.mxu0 %v64
    %98 = vmatprep.subr.mxu0 0.0
    %99 = vmatpush1.msra.mxu0 %v63
    %100 = vmatprep.subr.mxu0 0.0
    %101 = vmatpush1.msra.mxu0 %v62
    %102 = vmatprep.subr.mxu0 0.0
    %103 = vmatpush1.msra.mxu0 %v61
    %104 = vmatprep.subr.mxu0 0.0
    %105 = vmatpush2.msra.mxu0 0.0
    %106 = vmatprep.subr.mxu0 0.0
    %107 = vmatpush2.msra.mxu0 0.0
    %108 = vmatprep.subr.mxu0 0.0
    %109 = vmatpush2.msra.mxu0 0.0
    %110 = vmatprep.subr.mxu0 0.0
    %111 = vmatpush2.msra.mxu0 0.0
    %112 = vmatprep.subr.mxu0 0.0
    %113 = vmatpush2.msra.mxu0 0.0
    %114 = vmatprep.subr.mxu0 0.0
    %115 = vmatpush2.msra.mxu0 0.0
    %116 = vmatprep.subr.mxu0 0.0
    %117 = vmatpush2.msra.mxu0 0.0
    %118 = vmatprep.subr.mxu0 0.0
    %119 = vmatpush2.msra.mxu0 0.0
    %120 = vmatprep.subr.mxu0 0.0
    %121 = vmatpush2.msra.mxu0 0.0
    %122 = vmatprep.subr.mxu0 0.0
    %123 = vmatpush2.msra.mxu0 0.0
    %124 = vmatprep.subr.mxu0 0.0
    %125 = vmatpush2.msra.mxu0 0.0
    %126 = vmatprep.subr.mxu0 0.0
    %127 = vmatpush2.msra.mxu0 0.0
    %128 = vmatprep.subr.mxu0 0.0
    %129 = vmatpush2.msra.mxu0 0.0
    %130 = vmatprep.subr.mxu0 0.0
    %131 = vmatpush2.msra.mxu0 0.0
    %132 = vmatprep.subr.mxu0 0.0
    %133 = vmatpush2.msra.mxu0 0.0
    %134 = vmatprep.subr.mxu0 0.0
    %135 = vmatpush2.msra.mxu0 0.0
    %136 = vmatprep.mubr.f32.mxu0 0.0
    %137 = vmatmul.mubr.f32.gmra.mxu0 %v67
    %v138 = vpop.f32.mrf.mxu0
    %v139 = vadd.f32 0.0, %v138
    %v140 = vpop.f32.mrf.mxu0
    %141 = vmatprep.mubr.f32.mxu0 0.0
    %142 = vmatmul.mubr.f32.gmra.mxu0 %v70
    %v143 = vpop.f32.mrf.mxu0
    %v144 = vadd.f32 0.0, %v143
    %v145 = vpop.f32.mrf.mxu0
    %146 = vdwg.mxu0
    %v147 = vld [vmem:[#allocation7] sm:$0xff]
    %v148 = vld [vmem:[#allocation7 + $0x8] sm:$0xff]
    %v149 = vld [vmem:[#allocation7 + $0x10] sm:$0xff]
    %v150 = vld [vmem:[#allocation7 + $0x18] sm:$0xff]
    %152 = vrot.lane.b32.xlu0 %v139, 96
    %v153 = vpop.permute.xlu0 %152
    %vm154 = vcmask 31744
    %v155 = vsel %vm154, %v139, 0
    %v157 = vsel %vm154, %v153, 0
    %159 = vmatprep.subr.mxu0 0.0
    %160 = vmatpush1.xpose.msra.mxu0 0.0
    %161 = vmatprep.subr.mxu0 0.0
    %162 = vmatpush1.xpose.msra.mxu0 0.0
    %163 = vmatprep.subr.mxu0 0.0
    %164 = vmatpush1.xpose.msra.mxu0 0.0
    %165 = vmatprep.subr.mxu0 0.0
    %166 = vmatpush1.xpose.msra.mxu0 0.0
    %167 = vmatprep.subr.mxu0 0.0
    %168 = vmatpush1.xpose.msra.mxu0 0.0
    %169 = vmatprep.subr.mxu0 0.0
    %170 = vmatpush1.xpose.msra.mxu0 0.0
    %171 = vmatprep.subr.mxu0 0.0
    %172 = vmatpush1.xpose.msra.mxu0 0.0
    %173 = vmatprep.subr.mxu0 0.0
    %174 = vmatpush1.xpose.msra.mxu0 0.0
    %175 = vmatprep.subr.mxu0 0.0
    %176 = vmatpush1.xpose.msra.mxu0 0.0
    %177 = vmatprep.subr.mxu0 0.0
    %178 = vmatpush1.xpose.msra.mxu0 0.0
    %179 = vmatprep.subr.mxu0 0.0
    %180 = vmatpush1.xpose.msra.mxu0 0.0
    %181 = vmatprep.subr.mxu0 0.0
    %182 = vmatpush1.xpose.msra.mxu0 0.0
    %183 = vmatprep.subr.mxu0 0.0
    %184 = vmatpush1.xpose.msra.mxu0 0.0
    %185 = vmatprep.subr.mxu0 0.0
    %186 = vmatpush1.xpose.msra.mxu0 0.0
    %187 = vmatprep.subr.mxu0 0.0
    %188 = vmatpush1.xpose.msra.mxu0 0.0
    %189 = vmatprep.subr.mxu0 0.0
    %190 = vmatpush1.xpose.msra.mxu0 %v157
    %191 = vmatprep.subr.mxu0 0.0
    %192 = vmatpush2.xpose.msra.mxu0 0.0
    %193 = vmatprep.subr.mxu0 0.0
    %194 = vmatpush2.xpose.msra.mxu0 0.0
    %195 = vmatprep.subr.mxu0 0.0
    %196 = vmatpush2.xpose.msra.mxu0 0.0
    %197 = vmatprep.subr.mxu0 0.0
    %198 = vmatpush2.xpose.msra.mxu0 0.0
    %199 = vmatprep.subr.mxu0 0.0
    %200 = vmatpush2.xpose.msra.mxu0 0.0
    %201 = vmatprep.subr.mxu0 0.0
    %202 = vmatpush2.xpose.msra.mxu0 0.0
    %203 = vmatprep.subr.mxu0 0.0
    %204 = vmatpush2.xpose.msra.mxu0 0.0
    %205 = vmatprep.subr.mxu0 0.0
    %206 = vmatpush2.xpose.msra.mxu0 0.0
    %207 = vmatprep.subr.mxu0 0.0
    %208 = vmatpush2.xpose.msra.mxu0 0.0
    %209 = vmatprep.subr.mxu0 0.0
    %210 = vmatpush2.xpose.msra.mxu0 0.0
    %211 = vmatprep.subr.mxu0 0.0
    %212 = vmatpush2.xpose.msra.mxu0 0.0
    %213 = vmatprep.subr.mxu0 0.0
    %214 = vmatpush2.xpose.msra.mxu0 0.0
    %215 = vmatprep.subr.mxu0 0.0
    %216 = vmatpush2.xpose.msra.mxu0 0.0
    %217 = vmatprep.subr.mxu0 0.0
    %218 = vmatpush2.xpose.msra.mxu0 0.0
    %219 = vmatprep.subr.mxu0 0.0
    %220 = vmatpush2.xpose.msra.mxu0 0.0
    %221 = vmatprep.subr.mxu0 0.0
    %222 = vmatpush2.xpose.msra.mxu0 0.0
    %223 = vmatprep.mubr.f32.mxu0 0.0
    %224 = vmatmul.mubr.f32.gmra.mxu0 %v155
    %v225 = vpop.f32.mrf.mxu0
    %v226 = vadd.f32 0.0, %v225
    %v227 = vpop.f32.mrf.mxu0
    %228 = vdwg.mxu0
    %230 = vrot.lane.b32.xlu0 %v144, 96
    %v231 = vpop.permute.xlu0 %230
    %v232 = vsel %vm154, %v144, 0
    %v234 = vsel %vm154, %v231, 0
    %236 = vmatprep.subr.mxu0 0.0
    %237 = vmatpush1.xpose.msra.mxu0 0.0
    %238 = vmatprep.subr.mxu0 0.0
    %239 = vmatpush1.xpose.msra.mxu0 0.0
    %240 = vmatprep.subr.mxu0 0.0
    %241 = vmatpush1.xpose.msra.mxu0 0.0
    %242 = vmatprep.subr.mxu0 0.0
    %243 = vmatpush1.xpose.msra.mxu0 0.0
    %244 = vmatprep.subr.mxu0 0.0
    %245 = vmatpush1.xpose.msra.mxu0 0.0
    %246 = vmatprep.subr.mxu0 0.0
    %247 = vmatpush1.xpose.msra.mxu0 0.0
    %248 = vmatprep.subr.mxu0 0.0
    %249 = vmatpush1.xpose.msra.mxu0 0.0
    %250 = vmatprep.subr.mxu0 0.0
    %251 = vmatpush1.xpose.msra.mxu0 0.0
    %252 = vmatprep.subr.mxu0 0.0
    %253 = vmatpush1.xpose.msra.mxu0 0.0
    %254 = vmatprep.subr.mxu0 0.0
    %255 = vmatpush1.xpose.msra.mxu0 0.0
    %256 = vmatprep.subr.mxu0 0.0
    %257 = vmatpush1.xpose.msra.mxu0 0.0
    %258 = vmatprep.subr.mxu0 0.0
    %259 = vmatpush1.xpose.msra.mxu0 0.0
    %260 = vmatprep.subr.mxu0 0.0
    %261 = vmatpush1.xpose.msra.mxu0 0.0
    %262 = vmatprep.subr.mxu0 0.0
    %263 = vmatpush1.xpose.msra.mxu0 0.0
    %264 = vmatprep.subr.mxu0 0.0
    %265 = vmatpush1.xpose.msra.mxu0 0.0
    %266 = vmatprep.subr.mxu0 0.0
    %267 = vmatpush1.xpose.msra.mxu0 %v234
    %268 = vmatprep.subr.mxu0 0.0
    %269 = vmatpush2.xpose.msra.mxu0 0.0
    %270 = vmatprep.subr.mxu0 0.0
    %271 = vmatpush2.xpose.msra.mxu0 0.0
    %272 = vmatprep.subr.mxu0 0.0
    %273 = vmatpush2.xpose.msra.mxu0 0.0
    %274 = vmatprep.subr.mxu0 0.0
    %275 = vmatpush2.xpose.msra.mxu0 0.0
    %276 = vmatprep.subr.mxu0 0.0
    %277 = vmatpush2.xpose.msra.mxu0 0.0
    %278 = vmatprep.subr.mxu0 0.0
    %279 = vmatpush2.xpose.msra.mxu0 0.0
    %280 = vmatprep.subr.mxu0 0.0
    %281 = vmatpush2.xpose.msra.mxu0 0.0
    %282 = vmatprep.subr.mxu0 0.0
    %283 = vmatpush2.xpose.msra.mxu0 0.0
    %284 = vmatprep.subr.mxu0 0.0
    %285 = vmatpush2.xpose.msra.mxu0 0.0
    %286 = vmatprep.subr.mxu0 0.0
    %287 = vmatpush2.xpose.msra.mxu0 0.0
    %288 = vmatprep.subr.mxu0 0.0
    %289 = vmatpush2.xpose.msra.mxu0 0.0
    %290 = vmatprep.subr.mxu0 0.0
    %291 = vmatpush2.xpose.msra.mxu0 0.0
    %292 = vmatprep.subr.mxu0 0.0
    %293 = vmatpush2.xpose.msra.mxu0 0.0
    %294 = vmatprep.subr.mxu0 0.0
    %295 = vmatpush2.xpose.msra.mxu0 0.0
    %296 = vmatprep.subr.mxu0 0.0
    %297 = vmatpush2.xpose.msra.mxu0 0.0
    %298 = vmatprep.subr.mxu0 0.0
    %299 = vmatpush2.xpose.msra.mxu0 0.0
    %300 = vmatprep.mubr.f32.mxu0 0.0
    %301 = vmatmul.mubr.f32.gmra.mxu0 %v232
    %v302 = vpop.f32.mrf.mxu0
    %v303 = vadd.f32 0.0, %v302
    %v304 = vpop.f32.mrf.mxu0
    %305 = vdwg.mxu0
    %vm306 = vcmask 64512
    %v307 = vsel %vm306, %v226, -inf
    %308 = vmax.xlane.f32.xlu0 %v307
    %v309 = vpop.xlane.xlu0 %308
    %v310 = vsel %vm306, %v303, -inf
    %311 = vmax.xlane.f32.xlu0 %v310
    %v312 = vpop.xlane.xlu0 %311
    %v313 = vsub.f32 %v226, %v309
    %v314 = vsub.f32 %v303, %v312
    %v315 = vmul.f32 %v313, 1.442695
    %v316 = vpow.pop %v315
    %v317 = vmul.f32 %v314, 1.442695
    %v318 = vpow.pop %v317
    %v319 = vsel %vm306, %v316, 0.0
    %320 = vadd.xlane.f32.xlu0 %v319
    %v321 = vpop.xlane.xlu0 %320
    %v322 = vsel %vm306, %v318, 0.0
    %323 = vadd.xlane.f32.xlu0 %v322
    %v324 = vpop.xlane.xlu0 %323
    %v325 = vrcp.pop %v321
    %v326 = vrcp.pop %v324
    %327 = vrot.lane.b32.xlu0 %v139, 64
    %v328 = vpop.permute.xlu0 %327
    %v331 = vsel %vm306, %v316, 0
    %333 = vmatprep.subr.mxu0 0.0
    %334 = vmatpush1.msra.mxu0 0.0
    %335 = vmatprep.subr.mxu0 0.0
    %336 = vmatpush1.msra.mxu0 0.0
    %337 = vmatprep.subr.mxu0 0.0
    %338 = vmatpush1.msra.mxu0 0.0
    %339 = vmatprep.subr.mxu0 0.0
    %340 = vmatpush1.msra.mxu0 0.0
    %341 = vmatprep.subr.mxu0 0.0
    %342 = vmatpush1.msra.mxu0 0.0
    %343 = vmatprep.subr.mxu0 0.0
    %344 = vmatpush1.msra.mxu0 0.0
    %345 = vmatprep.subr.mxu0 0.0
    %346 = vmatpush1.msra.mxu0 0.0
    %347 = vmatprep.subr.mxu0 0.0
    %348 = vmatpush1.msra.mxu0 0.0
    %349 = vmatprep.subr.mxu0 0.0
    %350 = vmatpush1.msra.mxu0 0.0
    %351 = vmatprep.subr.mxu0 0.0
    %352 = vmatpush1.msra.mxu0 0.0
    %353 = vmatprep.subr.mxu0 0.0
    %354 = vmatpush1.msra.mxu0 0.0
    %355 = vmatprep.subr.mxu0 0.0
    %356 = vmatpush1.msra.mxu0 0.0
    %357 = vmatprep.subr.mxu0 0.0
    %358 = vmatpush1.msra.mxu0 0.0
    %359 = vmatprep.subr.mxu0 0.0
    %360 = vmatpush1.msra.mxu0 0.0
    %361 = vmatprep.subr.mxu0 0.0
    %362 = vmatpush1.msra.mxu0 0.0
    %363 = vmatprep.subr.mxu0 0.0
    %364 = vmatpush1.msra.mxu0 %v328
    %365 = vmatprep.subr.mxu0 0.0
    %366 = vmatpush2.msra.mxu0 0.0
    %367 = vmatprep.subr.mxu0 0.0
    %368 = vmatpush2.msra.mxu0 0.0
    %369 = vmatprep.subr.mxu0 0.0
    %370 = vmatpush2.msra.mxu0 0.0
    %371 = vmatprep.subr.mxu0 0.0
    %372 = vmatpush2.msra.mxu0 0.0
    %373 = vmatprep.subr.mxu0 0.0
    %374 = vmatpush2.msra.mxu0 0.0
    %375 = vmatprep.subr.mxu0 0.0
    %376 = vmatpush2.msra.mxu0 0.0
    %377 = vmatprep.subr.mxu0 0.0
    %378 = vmatpush2.msra.mxu0 0.0
    %379 = vmatprep.subr.mxu0 0.0
    %380 = vmatpush2.msra.mxu0 0.0
    %381 = vmatprep.subr.mxu0 0.0
    %382 = vmatpush2.msra.mxu0 0.0
    %383 = vmatprep.subr.mxu0 0.0
    %384 = vmatpush2.msra.mxu0 0.0
    %385 = vmatprep.subr.mxu0 0.0
    %386 = vmatpush2.msra.mxu0 0.0
    %387 = vmatprep.subr.mxu0 0.0
    %388 = vmatpush2.msra.mxu0 0.0
    %389 = vmatprep.subr.mxu0 0.0
    %390 = vmatpush2.msra.mxu0 0.0
    %391 = vmatprep.subr.mxu0 0.0
    %392 = vmatpush2.msra.mxu0 0.0
    %393 = vmatprep.subr.mxu0 0.0
    %394 = vmatpush2.msra.mxu0 0.0
    %395 = vmatprep.subr.mxu0 0.0
    %396 = vmatpush2.msra.mxu0 0.0
    %397 = vmatprep.mubr.f32.mxu0 0.0
    %398 = vmatmul.mubr.f32.gmra.mxu0 %v331
    %v399 = vpop.f32.mrf.mxu0
    %v400 = vadd.f32 0.0, %v399
    %v401 = vpop.f32.mrf.mxu0
    %402 = vdwg.mxu0
    %403 = vrot.lane.b32.xlu0 %v144, 64
    %v404 = vpop.permute.xlu0 %403
    %v407 = vsel %vm306, %v318, 0
    %409 = vmatprep.subr.mxu0 0.0
    %410 = vmatpush1.msra.mxu0 0.0
    %411 = vmatprep.subr.mxu0 0.0
    %412 = vmatpush1.msra.mxu0 0.0
    %413 = vmatprep.subr.mxu0 0.0
    %414 = vmatpush1.msra.mxu0 0.0
    %415 = vmatprep.subr.mxu0 0.0
    %416 = vmatpush1.msra.mxu0 0.0
    %417 = vmatprep.subr.mxu0 0.0
    %418 = vmatpush1.msra.mxu0 0.0
    %419 = vmatprep.subr.mxu0 0.0
    %420 = vmatpush1.msra.mxu0 0.0
    %421 = vmatprep.subr.mxu0 0.0
    %422 = vmatpush1.msra.mxu0 0.0
    %423 = vmatprep.subr.mxu0 0.0
    %424 = vmatpush1.msra.mxu0 0.0
    %425 = vmatprep.subr.mxu0 0.0
    %426 = vmatpush1.msra.mxu0 0.0
    %427 = vmatprep.subr.mxu0 0.0
    %428 = vmatpush1.msra.mxu0 0.0
    %429 = vmatprep.subr.mxu0 0.0
    %430 = vmatpush1.msra.mxu0 0.0
    %431 = vmatprep.subr.mxu0 0.0
    %432 = vmatpush1.msra.mxu0 0.0
    %433 = vmatprep.subr.mxu0 0.0
    %434 = vmatpush1.msra.mxu0 0.0
    %435 = vmatprep.subr.mxu0 0.0
    %436 = vmatpush1.msra.mxu0 0.0
    %437 = vmatprep.subr.mxu0 0.0
    %438 = vmatpush1.msra.mxu0 0.0
    %439 = vmatprep.subr.mxu0 0.0
    %440 = vmatpush1.msra.mxu0 %v404
    %441 = vmatprep.subr.mxu0 0.0
    %442 = vmatpush2.msra.mxu0 0.0
    %443 = vmatprep.subr.mxu0 0.0
    %444 = vmatpush2.msra.mxu0 0.0
    %445 = vmatprep.subr.mxu0 0.0
    %446 = vmatpush2.msra.mxu0 0.0
    %447 = vmatprep.subr.mxu0 0.0
    %448 = vmatpush2.msra.mxu0 0.0
    %449 = vmatprep.subr.mxu0 0.0
    %450 = vmatpush2.msra.mxu0 0.0
    %451 = vmatprep.subr.mxu0 0.0
    %452 = vmatpush2.msra.mxu0 0.0
    %453 = vmatprep.subr.mxu0 0.0
    %454 = vmatpush2.msra.mxu0 0.0
    %455 = vmatprep.subr.mxu0 0.0
    %456 = vmatpush2.msra.mxu0 0.0
    %457 = vmatprep.subr.mxu0 0.0
    %458 = vmatpush2.msra.mxu0 0.0
    %459 = vmatprep.subr.mxu0 0.0
    %460 = vmatpush2.msra.mxu0 0.0
    %461 = vmatprep.subr.mxu0 0.0
    %462 = vmatpush2.msra.mxu0 0.0
    %463 = vmatprep.subr.mxu0 0.0
    %464 = vmatpush2.msra.mxu0 0.0
    %465 = vmatprep.subr.mxu0 0.0
    %466 = vmatpush2.msra.mxu0 0.0
    %467 = vmatprep.subr.mxu0 0.0
    %468 = vmatpush2.msra.mxu0 0.0
    %469 = vmatprep.subr.mxu0 0.0
    %470 = vmatpush2.msra.mxu0 0.0
    %471 = vmatprep.subr.mxu0 0.0
    %472 = vmatpush2.msra.mxu0 0.0
    %473 = vmatprep.mubr.f32.mxu0 0.0
    %474 = vmatmul.mubr.f32.gmra.mxu0 %v407
    %v475 = vpop.f32.mrf.mxu0
    %v476 = vadd.f32 0.0, %v475
    %v477 = vpop.f32.mrf.mxu0
    %478 = vdwg.mxu0
    %v479 = vmul.f32 %v400, %v325
    %v480 = vmul.f32 %v476, %v326
    %481 = vrot.lane.b32.xlu0 %v139, 124
    %v482 = vpop.permute.xlu0 %481
    %483 = vrot.lane.b32.xlu0 %v139, 92
    %v484 = vpop.permute.xlu0 %483
    %v485 = vsel %vm154, %v482, 0
    %v487 = vsel %vm154, %v484, 0
    %489 = vmatprep.subr.mxu0 0.0
    %490 = vmatpush1.xpose.msra.mxu0 0.0
    %491 = vmatprep.subr.mxu0 0.0
    %492 = vmatpush1.xpose.msra.mxu0 0.0
    %493 = vmatprep.subr.mxu0 0.0
    %494 = vmatpush1.xpose.msra.mxu0 0.0
    %495 = vmatprep.subr.mxu0 0.0
    %496 = vmatpush1.xpose.msra.mxu0 0.0
    %497 = vmatprep.subr.mxu0 0.0
    %498 = vmatpush1.xpose.msra.mxu0 0.0
    %499 = vmatprep.subr.mxu0 0.0
    %500 = vmatpush1.xpose.msra.mxu0 0.0
    %501 = vmatprep.subr.mxu0 0.0
    %502 = vmatpush1.xpose.msra.mxu0 0.0
    %503 = vmatprep.subr.mxu0 0.0
    %504 = vmatpush1.xpose.msra.mxu0 0.0
    %505 = vmatprep.subr.mxu0 0.0
    %506 = vmatpush1.xpose.msra.mxu0 0.0
    %507 = vmatprep.subr.mxu0 0.0
    %508 = vmatpush1.xpose.msra.mxu0 0.0
    %509 = vmatprep.subr.mxu0 0.0
    %510 = vmatpush1.xpose.msra.mxu0 0.0
    %511 = vmatprep.subr.mxu0 0.0
    %512 = vmatpush1.xpose.msra.mxu0 0.0
    %513 = vmatprep.subr.mxu0 0.0
    %514 = vmatpush1.xpose.msra.mxu0 0.0
    %515 = vmatprep.subr.mxu0 0.0
    %516 = vmatpush1.xpose.msra.mxu0 0.0
    %517 = vmatprep.subr.mxu0 0.0
    %518 = vmatpush1.xpose.msra.mxu0 0.0
    %519 = vmatprep.subr.mxu0 0.0
    %520 = vmatpush1.xpose.msra.mxu0 %v487
    %521 = vmatprep.subr.mxu0 0.0
    %522 = vmatpush2.xpose.msra.mxu0 0.0
    %523 = vmatprep.subr.mxu0 0.0
    %524 = vmatpush2.xpose.msra.mxu0 0.0
    %525 = vmatprep.subr.mxu0 0.0
    %526 = vmatpush2.xpose.msra.mxu0 0.0
    %527 = vmatprep.subr.mxu0 0.0
    %528 = vmatpush2.xpose.msra.mxu0 0.0
    %529 = vmatprep.subr.mxu0 0.0
    %530 = vmatpush2.xpose.msra.mxu0 0.0
    %531 = vmatprep.subr.mxu0 0.0
    %532 = vmatpush2.xpose.msra.mxu0 0.0
    %533 = vmatprep.subr.mxu0 0.0
    %534 = vmatpush2.xpose.msra.mxu0 0.0
    %535 = vmatprep.subr.mxu0 0.0
    %536 = vmatpush2.xpose.msra.mxu0 0.0
    %537 = vmatprep.subr.mxu0 0.0
    %538 = vmatpush2.xpose.msra.mxu0 0.0
    %539 = vmatprep.subr.mxu0 0.0
    %540 = vmatpush2.xpose.msra.mxu0 0.0
    %541 = vmatprep.subr.mxu0 0.0
    %542 = vmatpush2.xpose.msra.mxu0 0.0
    %543 = vmatprep.subr.mxu0 0.0
    %544 = vmatpush2.xpose.msra.mxu0 0.0
    %545 = vmatprep.subr.mxu0 0.0
    %546 = vmatpush2.xpose.msra.mxu0 0.0
    %547 = vmatprep.subr.mxu0 0.0
    %548 = vmatpush2.xpose.msra.mxu0 0.0
    %549 = vmatprep.subr.mxu0 0.0
    %550 = vmatpush2.xpose.msra.mxu0 0.0
    %551 = vmatprep.subr.mxu0 0.0
    %552 = vmatpush2.xpose.msra.mxu0 0.0
    %553 = vmatprep.mubr.f32.mxu0 0.0
    %554 = vmatmul.mubr.f32.gmra.mxu0 %v485
    %v555 = vpop.f32.mrf.mxu0
    %v556 = vadd.f32 0.0, %v555
    %v557 = vpop.f32.mrf.mxu0
    %558 = vdwg.mxu0
    %559 = vrot.lane.b32.xlu0 %v144, 124
    %v560 = vpop.permute.xlu0 %559
    %561 = vrot.lane.b32.xlu0 %v144, 92
    %v562 = vpop.permute.xlu0 %561
    %v563 = vsel %vm154, %v560, 0
    %v565 = vsel %vm154, %v562, 0
    %567 = vmatprep.subr.mxu0 0.0
    %568 = vmatpush1.xpose.msra.mxu0 0.0
    %569 = vmatprep.subr.mxu0 0.0
    %570 = vmatpush1.xpose.msra.mxu0 0.0
    %571 = vmatprep.subr.mxu0 0.0
    %572 = vmatpush1.xpose.msra.mxu0 0.0
    %573 = vmatprep.subr.mxu0 0.0
    %574 = vmatpush1.xpose.msra.mxu0 0.0
    %575 = vmatprep.subr.mxu0 0.0
    %576 = vmatpush1.xpose.msra.mxu0 0.0
    %577 = vmatprep.subr.mxu0 0.0
    %578 = vmatpush1.xpose.msra.mxu0 0.0
    %579 = vmatprep.subr.mxu0 0.0
    %580 = vmatpush1.xpose.msra.mxu0 0.0
    %581 = vmatprep.subr.mxu0 0.0
    %582 = vmatpush1.xpose.msra.mxu0 0.0
    %583 = vmatprep.subr.mxu0 0.0
    %584 = vmatpush1.xpose.msra.mxu0 0.0
    %585 = vmatprep.subr.mxu0 0.0
    %586 = vmatpush1.xpose.msra.mxu0 0.0
    %587 = vmatprep.subr.mxu0 0.0
    %588 = vmatpush1.xpose.msra.mxu0 0.0
    %589 = vmatprep.subr.mxu0 0.0
    %590 = vmatpush1.xpose.msra.mxu0 0.0
    %591 = vmatprep.subr.mxu0 0.0
    %592 = vmatpush1.xpose.msra.mxu0 0.0
    %593 = vmatprep.subr.mxu0 0.0
    %594 = vmatpush1.xpose.msra.mxu0 0.0
    %595 = vmatprep.subr.mxu0 0.0
    %596 = vmatpush1.xpose.msra.mxu0 0.0
    %597 = vmatprep.subr.mxu0 0.0
    %598 = vmatpush1.xpose.msra.mxu0 %v565
    %599 = vmatprep.subr.mxu0 0.0
    %600 = vmatpush2.xpose.msra.mxu0 0.0
    %601 = vmatprep.subr.mxu0 0.0
    %602 = vmatpush2.xpose.msra.mxu0 0.0
    %603 = vmatprep.subr.mxu0 0.0
    %604 = vmatpush2.xpose.msra.mxu0 0.0
    %605 = vmatprep.subr.mxu0 0.0
    %606 = vmatpush2.xpose.msra.mxu0 0.0
    %607 = vmatprep.subr.mxu0 0.0
    %608 = vmatpush2.xpose.msra.mxu0 0.0
    %609 = vmatprep.subr.mxu0 0.0
    %610 = vmatpush2.xpose.msra.mxu0 0.0
    %611 = vmatprep.subr.mxu0 0.0
    %612 = vmatpush2.xpose.msra.mxu0 0.0
    %613 = vmatprep.subr.mxu0 0.0
    %614 = vmatpush2.xpose.msra.mxu0 0.0
    %615 = vmatprep.subr.mxu0 0.0
    %616 = vmatpush2.xpose.msra.mxu0 0.0
    %617 = vmatprep.subr.mxu0 0.0
    %618 = vmatpush2.xpose.msra.mxu0 0.0
    %619 = vmatprep.subr.mxu0 0.0
    %620 = vmatpush2.xpose.msra.mxu0 0.0
    %621 = vmatprep.subr.mxu0 0.0
    %622 = vmatpush2.xpose.msra.mxu0 0.0
    %623 = vmatprep.subr.mxu0 0.0
    %624 = vmatpush2.xpose.msra.mxu0 0.0
    %625 = vmatprep.subr.mxu0 0.0
    %626 = vmatpush2.xpose.msra.mxu0 0.0
    %627 = vmatprep.subr.mxu0 0.0
    %628 = vmatpush2.xpose.msra.mxu0 0.0
    %629 = vmatprep.subr.mxu0 0.0
    %630 = vmatpush2.xpose.msra.mxu0 0.0
    %631 = vmatprep.mubr.f32.mxu0 0.0
    %632 = vmatmul.mubr.f32.gmra.mxu0 %v563
    %v633 = vpop.f32.mrf.mxu0
    %v634 = vadd.f32 0.0, %v633
    %v635 = vpop.f32.mrf.mxu0
    %636 = vdwg.mxu0
    %v637 = vsel %vm306, %v556, -inf
    %638 = vmax.xlane.f32.xlu0 %v637
    %v639 = vpop.xlane.xlu0 %638
    %v640 = vsel %vm306, %v634, -inf
    %641 = vmax.xlane.f32.xlu0 %v640
    %v642 = vpop.xlane.xlu0 %641
    %v643 = vsub.f32 %v556, %v639
    %v644 = vsub.f32 %v634, %v642
    %v645 = vmul.f32 %v643, 1.442695
    %v646 = vpow.pop %v645
    %v647 = vmul.f32 %v644, 1.442695
    %v648 = vpow.pop %v647
    %v649 = vsel %vm306, %v646, 0.0
    %650 = vadd.xlane.f32.xlu0 %v649
    %v651 = vpop.xlane.xlu0 %650
    %v652 = vsel %vm306, %v648, 0.0
    %653 = vadd.xlane.f32.xlu0 %v652
    %v654 = vpop.xlane.xlu0 %653
    %v655 = vrcp.pop %v651
    %v656 = vrcp.pop %v654
    %657 = vrot.lane.b32.xlu0 %v139, 60
    %v658 = vpop.permute.xlu0 %657
    %v661 = vsel %vm306, %v646, 0
    %663 = vmatprep.subr.mxu0 0.0
    %664 = vmatpush1.msra.mxu0 0.0
    %665 = vmatprep.subr.mxu0 0.0
    %666 = vmatpush1.msra.mxu0 0.0
    %667 = vmatprep.subr.mxu0 0.0
    %668 = vmatpush1.msra.mxu0 0.0
    %669 = vmatprep.subr.mxu0 0.0
    %670 = vmatpush1.msra.mxu0 0.0
    %671 = vmatprep.subr.mxu0 0.0
    %672 = vmatpush1.msra.mxu0 0.0
    %673 = vmatprep.subr.mxu0 0.0
    %674 = vmatpush1.msra.mxu0 0.0
    %675 = vmatprep.subr.mxu0 0.0
    %676 = vmatpush1.msra.mxu0 0.0
    %677 = vmatprep.subr.mxu0 0.0
    %678 = vmatpush1.msra.mxu0 0.0
    %679 = vmatprep.subr.mxu0 0.0
    %680 = vmatpush1.msra.mxu0 0.0
    %681 = vmatprep.subr.mxu0 0.0
    %682 = vmatpush1.msra.mxu0 0.0
    %683 = vmatprep.subr.mxu0 0.0
    %684 = vmatpush1.msra.mxu0 0.0
    %685 = vmatprep.subr.mxu0 0.0
    %686 = vmatpush1.msra.mxu0 0.0
    %687 = vmatprep.subr.mxu0 0.0
    %688 = vmatpush1.msra.mxu0 0.0
    %689 = vmatprep.subr.mxu0 0.0
    %690 = vmatpush1.msra.mxu0 0.0
    %691 = vmatprep.subr.mxu0 0.0
    %692 = vmatpush1.msra.mxu0 0.0
    %693 = vmatprep.subr.mxu0 0.0
    %694 = vmatpush1.msra.mxu0 %v658
    %695 = vmatprep.subr.mxu0 0.0
    %696 = vmatpush2.msra.mxu0 0.0
    %697 = vmatprep.subr.mxu0 0.0
    %698 = vmatpush2.msra.mxu0 0.0
    %699 = vmatprep.subr.mxu0 0.0
    %700 = vmatpush2.msra.mxu0 0.0
    %701 = vmatprep.subr.mxu0 0.0
    %702 = vmatpush2.msra.mxu0 0.0
    %703 = vmatprep.subr.mxu0 0.0
    %704 = vmatpush2.msra.mxu0 0.0
    %705 = vmatprep.subr.mxu0 0.0
    %706 = vmatpush2.msra.mxu0 0.0
    %707 = vmatprep.subr.mxu0 0.0
    %708 = vmatpush2.msra.mxu0 0.0
    %709 = vmatprep.subr.mxu0 0.0
    %710 = vmatpush2.msra.mxu0 0.0
    %711 = vmatprep.subr.mxu0 0.0
    %712 = vmatpush2.msra.mxu0 0.0
    %713 = vmatprep.subr.mxu0 0.0
    %714 = vmatpush2.msra.mxu0 0.0
    %715 = vmatprep.subr.mxu0 0.0
    %716 = vmatpush2.msra.mxu0 0.0
    %717 = vmatprep.subr.mxu0 0.0
    %718 = vmatpush2.msra.mxu0 0.0
    %719 = vmatprep.subr.mxu0 0.0
    %720 = vmatpush2.msra.mxu0 0.0
    %721 = vmatprep.subr.mxu0 0.0
    %722 = vmatpush2.msra.mxu0 0.0
    %723 = vmatprep.subr.mxu0 0.0
    %724 = vmatpush2.msra.mxu0 0.0
    %725 = vmatprep.subr.mxu0 0.0
    %726 = vmatpush2.msra.mxu0 0.0
    %727 = vmatprep.mubr.f32.mxu0 0.0
    %728 = vmatmul.mubr.f32.gmra.mxu0 %v661
    %v729 = vpop.f32.mrf.mxu0
    %v730 = vadd.f32 0.0, %v729
    %v731 = vpop.f32.mrf.mxu0
    %732 = vdwg.mxu0
    %733 = vrot.lane.b32.xlu0 %v144, 60
    %v734 = vpop.permute.xlu0 %733
    %v737 = vsel %vm306, %v648, 0
    %739 = vmatprep.subr.mxu0 0.0
    %740 = vmatpush1.msra.mxu0 0.0
    %741 = vmatprep.subr.mxu0 0.0
    %742 = vmatpush1.msra.mxu0 0.0
    %743 = vmatprep.subr.mxu0 0.0
    %744 = vmatpush1.msra.mxu0 0.0
    %745 = vmatprep.subr.mxu0 0.0
    %746 = vmatpush1.msra.mxu0 0.0
    %747 = vmatprep.subr.mxu0 0.0
    %748 = vmatpush1.msra.mxu0 0.0
    %749 = vmatprep.subr.mxu0 0.0
    %750 = vmatpush1.msra.mxu0 0.0
    %751 = vmatprep.subr.mxu0 0.0
    %752 = vmatpush1.msra.mxu0 0.0
    %753 = vmatprep.subr.mxu0 0.0
    %754 = vmatpush1.msra.mxu0 0.0
    %755 = vmatprep.subr.mxu0 0.0
    %756 = vmatpush1.msra.mxu0 0.0
    %757 = vmatprep.subr.mxu0 0.0
    %758 = vmatpush1.msra.mxu0 0.0
    %759 = vmatprep.subr.mxu0 0.0
    %760 = vmatpush1.msra.mxu0 0.0
    %761 = vmatprep.subr.mxu0 0.0
    %762 = vmatpush1.msra.mxu0 0.0
    %763 = vmatprep.subr.mxu0 0.0
    %764 = vmatpush1.msra.mxu0 0.0
    %765 = vmatprep.subr.mxu0 0.0
    %766 = vmatpush1.msra.mxu0 0.0
    %767 = vmatprep.subr.mxu0 0.0
    %768 = vmatpush1.msra.mxu0 0.0
    %769 = vmatprep.subr.mxu0 0.0
    %770 = vmatpush1.msra.mxu0 %v734
    %771 = vmatprep.subr.mxu0 0.0
    %772 = vmatpush2.msra.mxu0 0.0
    %773 = vmatprep.subr.mxu0 0.0
    %774 = vmatpush2.msra.mxu0 0.0
    %775 = vmatprep.subr.mxu0 0.0
    %776 = vmatpush2.msra.mxu0 0.0
    %777 = vmatprep.subr.mxu0 0.0
    %778 = vmatpush2.msra.mxu0 0.0
    %779 = vmatprep.subr.mxu0 0.0
    %780 = vmatpush2.msra.mxu0 0.0
    %781 = vmatprep.subr.mxu0 0.0
    %782 = vmatpush2.msra.mxu0 0.0
    %783 = vmatprep.subr.mxu0 0.0
    %784 = vmatpush2.msra.mxu0 0.0
    %785 = vmatprep.subr.mxu0 0.0
    %786 = vmatpush2.msra.mxu0 0.0
    %787 = vmatprep.subr.mxu0 0.0
    %788 = vmatpush2.msra.mxu0 0.0
    %789 = vmatprep.subr.mxu0 0.0
    %790 = vmatpush2.msra.mxu0 0.0
    %791 = vmatprep.subr.mxu0 0.0
    %792 = vmatpush2.msra.mxu0 0.0
    %793 = vmatprep.subr.mxu0 0.0
    %794 = vmatpush2.msra.mxu0 0.0
    %795 = vmatprep.subr.mxu0 0.0
    %796 = vmatpush2.msra.mxu0 0.0
    %797 = vmatprep.subr.mxu0 0.0
    %798 = vmatpush2.msra.mxu0 0.0
    %799 = vmatprep.subr.mxu0 0.0
    %800 = vmatpush2.msra.mxu0 0.0
    %801 = vmatprep.subr.mxu0 0.0
    %802 = vmatpush2.msra.mxu0 0.0
    %803 = vmatprep.mubr.f32.mxu0 0.0
    %804 = vmatmul.mubr.f32.gmra.mxu0 %v737
    %v805 = vpop.f32.mrf.mxu0
    %v806 = vadd.f32 0.0, %v805
    %v807 = vpop.f32.mrf.mxu0
    %808 = vdwg.mxu0
    %v809 = vmul.f32 %v730, %v655
    %v810 = vmul.f32 %v806, %v656
    %v812 = vrot.slane %v147, 4
    %v814 = vsel %vm154, %v809, 0
    %v817 = vsel %vm154, %v810, 0
    %vm819 = vcmask 1043456
    %v820 = vsel %vm819, %v812, 0
    %822 = vmatprep.subr.mxu0 0.0
    %823 = vmatpush1.msra.mxu0 0.0
    %824 = vmatprep.subr.mxu0 0.0
    %825 = vmatpush1.msra.mxu0 0.0
    %826 = vmatprep.subr.mxu0 0.0
    %827 = vmatpush1.msra.mxu0 0.0
    %828 = vmatprep.subr.mxu0 0.0
    %829 = vmatpush1.msra.mxu0 0.0
    %830 = vmatprep.subr.mxu0 0.0
    %831 = vmatpush1.msra.mxu0 0.0
    %832 = vmatprep.subr.mxu0 0.0
    %833 = vmatpush1.msra.mxu0 0.0
    %834 = vmatprep.subr.mxu0 0.0
    %835 = vmatpush1.msra.mxu0 0.0
    %836 = vmatprep.subr.mxu0 0.0
    %837 = vmatpush1.msra.mxu0 0.0
    %838 = vmatprep.subr.mxu0 0.0
    %839 = vmatpush1.msra.mxu0 0.0
    %840 = vmatprep.subr.mxu0 0.0
    %841 = vmatpush1.msra.mxu0 0.0
    %842 = vmatprep.subr.mxu0 0.0
    %843 = vmatpush1.msra.mxu0 0.0
    %844 = vmatprep.subr.mxu0 0.0
    %845 = vmatpush1.msra.mxu0 0.0
    %846 = vmatprep.subr.mxu0 0.0
    %847 = vmatpush1.msra.mxu0 0.0
    %848 = vmatprep.subr.mxu0 0.0
    %849 = vmatpush1.msra.mxu0 0.0
    %850 = vmatprep.subr.mxu0 0.0
    %851 = vmatpush1.msra.mxu0 0.0
    %852 = vmatprep.subr.mxu0 0.0
    %853 = vmatpush1.msra.mxu0 %v820
    %854 = vmatprep.subr.mxu0 0.0
    %855 = vmatpush2.msra.mxu0 0.0
    %856 = vmatprep.subr.mxu0 0.0
    %857 = vmatpush2.msra.mxu0 0.0
    %858 = vmatprep.subr.mxu0 0.0
    %859 = vmatpush2.msra.mxu0 0.0
    %860 = vmatprep.subr.mxu0 0.0
    %861 = vmatpush2.msra.mxu0 0.0
    %862 = vmatprep.subr.mxu0 0.0
    %863 = vmatpush2.msra.mxu0 0.0
    %864 = vmatprep.subr.mxu0 0.0
    %865 = vmatpush2.msra.mxu0 0.0
    %866 = vmatprep.subr.mxu0 0.0
    %867 = vmatpush2.msra.mxu0 0.0
    %868 = vmatprep.subr.mxu0 0.0
    %869 = vmatpush2.msra.mxu0 0.0
    %870 = vmatprep.subr.mxu0 0.0
    %871 = vmatpush2.msra.mxu0 0.0
    %872 = vmatprep.subr.mxu0 0.0
    %873 = vmatpush2.msra.mxu0 0.0
    %874 = vmatprep.subr.mxu0 0.0
    %875 = vmatpush2.msra.mxu0 0.0
    %876 = vmatprep.subr.mxu0 0.0
    %877 = vmatpush2.msra.mxu0 0.0
    %878 = vmatprep.subr.mxu0 0.0
    %879 = vmatpush2.msra.mxu0 0.0
    %880 = vmatprep.subr.mxu0 0.0
    %881 = vmatpush2.msra.mxu0 0.0
    %882 = vmatprep.subr.mxu0 0.0
    %883 = vmatpush2.msra.mxu0 0.0
    %884 = vmatprep.subr.mxu0 0.0
    %885 = vmatpush2.msra.mxu0 0.0
    %886 = vmatprep.mubr.f32.mxu0 0.0
    %887 = vmatmul.mubr.f32.gmra.mxu0 %v814
    %v888 = vpop.f32.mrf.mxu0
    %v889 = vadd.f32 0.0, %v888
    %v890 = vpop.f32.mrf.mxu0
    %891 = vmatprep.mubr.f32.mxu0 0.0
    %892 = vmatmul.mubr.f32.gmra.mxu0 %v817
    %v893 = vpop.f32.mrf.mxu0
    %v894 = vadd.f32 0.0, %v893
    %v895 = vpop.f32.mrf.mxu0
    %896 = vdwg.mxu0
    %v898 = vsel %vm154, %v479, 0
    %v901 = vsel %vm154, %v480, 0
    %v903 = vsel %vm819, %v147, 0
    %905 = vmatprep.subr.mxu0 0.0
    %906 = vmatpush1.msra.mxu0 0.0
    %907 = vmatprep.subr.mxu0 0.0
    %908 = vmatpush1.msra.mxu0 0.0
    %909 = vmatprep.subr.mxu0 0.0
    %910 = vmatpush1.msra.mxu0 0.0
    %911 = vmatprep.subr.mxu0 0.0
    %912 = vmatpush1.msra.mxu0 0.0
    %913 = vmatprep.subr.mxu0 0.0
    %914 = vmatpush1.msra.mxu0 0.0
    %915 = vmatprep.subr.mxu0 0.0
    %916 = vmatpush1.msra.mxu0 0.0
    %917 = vmatprep.subr.mxu0 0.0
    %918 = vmatpush1.msra.mxu0 0.0
    %919 = vmatprep.subr.mxu0 0.0
    %920 = vmatpush1.msra.mxu0 0.0
    %921 = vmatprep.subr.mxu0 0.0
    %922 = vmatpush1.msra.mxu0 0.0
    %923 = vmatprep.subr.mxu0 0.0
    %924 = vmatpush1.msra.mxu0 0.0
    %925 = vmatprep.subr.mxu0 0.0
    %926 = vmatpush1.msra.mxu0 0.0
    %927 = vmatprep.subr.mxu0 0.0
    %928 = vmatpush1.msra.mxu0 0.0
    %929 = vmatprep.subr.mxu0 0.0
    %930 = vmatpush1.msra.mxu0 0.0
    %931 = vmatprep.subr.mxu0 0.0
    %932 = vmatpush1.msra.mxu0 0.0
    %933 = vmatprep.subr.mxu0 0.0
    %934 = vmatpush1.msra.mxu0 0.0
    %935 = vmatprep.subr.mxu0 0.0
    %936 = vmatpush1.msra.mxu0 %v903
    %937 = vmatprep.subr.mxu0 0.0
    %938 = vmatpush2.msra.mxu0 0.0
    %939 = vmatprep.subr.mxu0 0.0
    %940 = vmatpush2.msra.mxu0 0.0
    %941 = vmatprep.subr.mxu0 0.0
    %942 = vmatpush2.msra.mxu0 0.0
    %943 = vmatprep.subr.mxu0 0.0
    %944 = vmatpush2.msra.mxu0 0.0
    %945 = vmatprep.subr.mxu0 0.0
    %946 = vmatpush2.msra.mxu0 0.0
    %947 = vmatprep.subr.mxu0 0.0
    %948 = vmatpush2.msra.mxu0 0.0
    %949 = vmatprep.subr.mxu0 0.0
    %950 = vmatpush2.msra.mxu0 0.0
    %951 = vmatprep.subr.mxu0 0.0
    %952 = vmatpush2.msra.mxu0 0.0
    %953 = vmatprep.subr.mxu0 0.0
    %954 = vmatpush2.msra.mxu0 0.0
    %955 = vmatprep.subr.mxu0 0.0
    %956 = vmatpush2.msra.mxu0 0.0
    %957 = vmatprep.subr.mxu0 0.0
    %958 = vmatpush2.msra.mxu0 0.0
    %959 = vmatprep.subr.mxu0 0.0
    %960 = vmatpush2.msra.mxu0 0.0
    %961 = vmatprep.subr.mxu0 0.0
    %962 = vmatpush2.msra.mxu0 0.0
    %963 = vmatprep.subr.mxu0 0.0
    %964 = vmatpush2.msra.mxu0 0.0
    %965 = vmatprep.subr.mxu0 0.0
    %966 = vmatpush2.msra.mxu0 0.0
    %967 = vmatprep.subr.mxu0 0.0
    %968 = vmatpush2.msra.mxu0 0.0
    %969 = vmatprep.mubr.f32.mxu0 0.0
    %970 = vmatmul.mubr.f32.gmra.mxu0 %v898
    %v971 = vpop.f32.mrf.mxu0
    %v972 = vadd.f32 %v889, %v971
    %v973 = vpop.f32.mrf.mxu0
    %974 = vmatprep.mubr.f32.mxu0 0.0
    %975 = vmatmul.mubr.f32.gmra.mxu0 %v901
    %v976 = vpop.f32.mrf.mxu0
    %v977 = vadd.f32 %v894, %v976
    %v978 = vpop.f32.mrf.mxu0
    %979 = vdwg.mxu0
    %980 = vrot.lane.b32.xlu0 %v139, 120
    %v981 = vpop.permute.xlu0 %980
    %982 = vrot.lane.b32.xlu0 %v139, 88
    %v983 = vpop.permute.xlu0 %982
    %v984 = vsel %vm154, %v981, 0
    %v986 = vsel %vm154, %v983, 0
    %988 = vmatprep.subr.mxu0 0.0
    %989 = vmatpush1.xpose.msra.mxu0 0.0
    %990 = vmatprep.subr.mxu0 0.0
    %991 = vmatpush1.xpose.msra.mxu0 0.0
    %992 = vmatprep.subr.mxu0 0.0
    %993 = vmatpush1.xpose.msra.mxu0 0.0
    %994 = vmatprep.subr.mxu0 0.0
    %995 = vmatpush1.xpose.msra.mxu0 0.0
    %996 = vmatprep.subr.mxu0 0.0
    %997 = vmatpush1.xpose.msra.mxu0 0.0
    %998 = vmatprep.subr.mxu0 0.0
    %999 = vmatpush1.xpose.msra.mxu0 0.0
    %1000 = vmatprep.subr.mxu0 0.0
    %1001 = vmatpush1.xpose.msra.mxu0 0.0
    %1002 = vmatprep.subr.mxu0 0.0
    %1003 = vmatpush1.xpose.msra.mxu0 0.0
    %1004 = vmatprep.subr.mxu0 0.0
    %1005 = vmatpush1.xpose.msra.mxu0 0.0
    %1006 = vmatprep.subr.mxu0 0.0
    %1007 = vmatpush1.xpose.msra.mxu0 0.0
    %1008 = vmatprep.subr.mxu0 0.0
    %1009 = vmatpush1.xpose.msra.mxu0 0.0
    %1010 = vmatprep.subr.mxu0 0.0
    %1011 = vmatpush1.xpose.msra.mxu0 0.0
    %1012 = vmatprep.subr.mxu0 0.0
    %1013 = vmatpush1.xpose.msra.mxu0 0.0
    %1014 = vmatprep.subr.mxu0 0.0
    %1015 = vmatpush1.xpose.msra.mxu0 0.0
    %1016 = vmatprep.subr.mxu0 0.0
    %1017 = vmatpush1.xpose.msra.mxu0 0.0
    %1018 = vmatprep.subr.mxu0 0.0
    %1019 = vmatpush1.xpose.msra.mxu0 %v986
    %1020 = vmatprep.subr.mxu0 0.0
    %1021 = vmatpush2.xpose.msra.mxu0 0.0
    %1022 = vmatprep.subr.mxu0 0.0
    %1023 = vmatpush2.xpose.msra.mxu0 0.0
    %1024 = vmatprep.subr.mxu0 0.0
    %1025 = vmatpush2.xpose.msra.mxu0 0.0
    %1026 = vmatprep.subr.mxu0 0.0
    %1027 = vmatpush2.xpose.msra.mxu0 0.0
    %1028 = vmatprep.subr.mxu0 0.0
    %1029 = vmatpush2.xpose.msra.mxu0 0.0
    %1030 = vmatprep.subr.mxu0 0.0
    %1031 = vmatpush2.xpose.msra.mxu0 0.0
    %1032 = vmatprep.subr.mxu0 0.0
    %1033 = vmatpush2.xpose.msra.mxu0 0.0
    %1034 = vmatprep.subr.mxu0 0.0
    %1035 = vmatpush2.xpose.msra.mxu0 0.0
    %1036 = vmatprep.subr.mxu0 0.0
    %1037 = vmatpush2.xpose.msra.mxu0 0.0
    %1038 = vmatprep.subr.mxu0 0.0
    %1039 = vmatpush2.xpose.msra.mxu0 0.0
    %1040 = vmatprep.subr.mxu0 0.0
    %1041 = vmatpush2.xpose.msra.mxu0 0.0
    %1042 = vmatprep.subr.mxu0 0.0
    %1043 = vmatpush2.xpose.msra.mxu0 0.0
    %1044 = vmatprep.subr.mxu0 0.0
    %1045 = vmatpush2.xpose.msra.mxu0 0.0
    %1046 = vmatprep.subr.mxu0 0.0
    %1047 = vmatpush2.xpose.msra.mxu0 0.0
    %1048 = vmatprep.subr.mxu0 0.0
    %1049 = vmatpush2.xpose.msra.mxu0 0.0
    %1050 = vmatprep.subr.mxu0 0.0
    %1051 = vmatpush2.xpose.msra.mxu0 0.0
    %1052 = vmatprep.mubr.f32.mxu0 0.0
    %1053 = vmatmul.mubr.f32.gmra.mxu0 %v984
    %v1054 = vpop.f32.mrf.mxu0
    %v1055 = vadd.f32 0.0, %v1054
    %v1056 = vpop.f32.mrf.mxu0
    %1057 = vdwg.mxu0
    %1058 = vrot.lane.b32.xlu0 %v144, 120
    %v1059 = vpop.permute.xlu0 %1058
    %1060 = vrot.lane.b32.xlu0 %v144, 88
    %v1061 = vpop.permute.xlu0 %1060
    %v1062 = vsel %vm154, %v1059, 0
    %v1064 = vsel %vm154, %v1061, 0
    %1066 = vmatprep.subr.mxu0 0.0
    %1067 = vmatpush1.xpose.msra.mxu0 0.0
    %1068 = vmatprep.subr.mxu0 0.0
    %1069 = vmatpush1.xpose.msra.mxu0 0.0
    %1070 = vmatprep.subr.mxu0 0.0
    %1071 = vmatpush1.xpose.msra.mxu0 0.0
    %1072 = vmatprep.subr.mxu0 0.0
    %1073 = vmatpush1.xpose.msra.mxu0 0.0
    %1074 = vmatprep.subr.mxu0 0.0
    %1075 = vmatpush1.xpose.msra.mxu0 0.0
    %1076 = vmatprep.subr.mxu0 0.0
    %1077 = vmatpush1.xpose.msra.mxu0 0.0
    %1078 = vmatprep.subr.mxu0 0.0
    %1079 = vmatpush1.xpose.msra.mxu0 0.0
    %1080 = vmatprep.subr.mxu0 0.0
    %1081 = vmatpush1.xpose.msra.mxu0 0.0
    %1082 = vmatprep.subr.mxu0 0.0
    %1083 = vmatpush1.xpose.msra.mxu0 0.0
    %1084 = vmatprep.subr.mxu0 0.0
    %1085 = vmatpush1.xpose.msra.mxu0 0.0
    %1086 = vmatprep.subr.mxu0 0.0
    %1087 = vmatpush1.xpose.msra.mxu0 0.0
    %1088 = vmatprep.subr.mxu0 0.0
    %1089 = vmatpush1.xpose.msra.mxu0 0.0
    %1090 = vmatprep.subr.mxu0 0.0
    %1091 = vmatpush1.xpose.msra.mxu0 0.0
    %1092 = vmatprep.subr.mxu0 0.0
    %1093 = vmatpush1.xpose.msra.mxu0 0.0
    %1094 = vmatprep.subr.mxu0 0.0
    %1095 = vmatpush1.xpose.msra.mxu0 0.0
    %1096 = vmatprep.subr.mxu0 0.0
    %1097 = vmatpush1.xpose.msra.mxu0 %v1064
    %1098 = vmatprep.subr.mxu0 0.0
    %1099 = vmatpush2.xpose.msra.mxu0 0.0
    %1100 = vmatprep.subr.mxu0 0.0
    %1101 = vmatpush2.xpose.msra.mxu0 0.0
    %1102 = vmatprep.subr.mxu0 0.0
    %1103 = vmatpush2.xpose.msra.mxu0 0.0
    %1104 = vmatprep.subr.mxu0 0.0
    %1105 = vmatpush2.xpose.msra.mxu0 0.0
    %1106 = vmatprep.subr.mxu0 0.0
    %1107 = vmatpush2.xpose.msra.mxu0 0.0
    %1108 = vmatprep.subr.mxu0 0.0
    %1109 = vmatpush2.xpose.msra.mxu0 0.0
    %1110 = vmatprep.subr.mxu0 0.0
    %1111 = vmatpush2.xpose.msra.mxu0 0.0
    %1112 = vmatprep.subr.mxu0 0.0
    %1113 = vmatpush2.xpose.msra.mxu0 0.0
    %1114 = vmatprep.subr.mxu0 0.0
    %1115 = vmatpush2.xpose.msra.mxu0 0.0
    %1116 = vmatprep.subr.mxu0 0.0
    %1117 = vmatpush2.xpose.msra.mxu0 0.0
    %1118 = vmatprep.subr.mxu0 0.0
    %1119 = vmatpush2.xpose.msra.mxu0 0.0
    %1120 = vmatprep.subr.mxu0 0.0
    %1121 = vmatpush2.xpose.msra.mxu0 0.0
    %1122 = vmatprep.subr.mxu0 0.0
    %1123 = vmatpush2.xpose.msra.mxu0 0.0
    %1124 = vmatprep.subr.mxu0 0.0
    %1125 = vmatpush2.xpose.msra.mxu0 0.0
    %1126 = vmatprep.subr.mxu0 0.0
    %1127 = vmatpush2.xpose.msra.mxu0 0.0
    %1128 = vmatprep.subr.mxu0 0.0
    %1129 = vmatpush2.xpose.msra.mxu0 0.0
    %1130 = vmatprep.mubr.f32.mxu0 0.0
    %1131 = vmatmul.mubr.f32.gmra.mxu0 %v1062
    %v1132 = vpop.f32.mrf.mxu0
    %v1133 = vadd.f32 0.0, %v1132
    %v1134 = vpop.f32.mrf.mxu0
    %1135 = vdwg.mxu0
    %v1136 = vsel %vm306, %v1055, -inf
    %1137 = vmax.xlane.f32.xlu0 %v1136
    %v1138 = vpop.xlane.xlu0 %1137
    %v1139 = vsel %vm306, %v1133, -inf
    %1140 = vmax.xlane.f32.xlu0 %v1139
    %v1141 = vpop.xlane.xlu0 %1140
    %v1142 = vsub.f32 %v1055, %v1138
    %v1143 = vsub.f32 %v1133, %v1141
    %v1144 = vmul.f32 %v1142, 1.442695
    %v1145 = vpow.pop %v1144
    %v1146 = vmul.f32 %v1143, 1.442695
    %v1147 = vpow.pop %v1146
    %v1148 = vsel %vm306, %v1145, 0.0
    %1149 = vadd.xlane.f32.xlu0 %v1148
    %v1150 = vpop.xlane.xlu0 %1149
    %v1151 = vsel %vm306, %v1147, 0.0
    %1152 = vadd.xlane.f32.xlu0 %v1151
    %v1153 = vpop.xlane.xlu0 %1152
    %v1154 = vrcp.pop %v1150
    %v1155 = vrcp.pop %v1153
    %1156 = vrot.lane.b32.xlu0 %v139, 56
    %v1157 = vpop.permute.xlu0 %1156
    %v1160 = vsel %vm306, %v1145, 0
    %1162 = vmatprep.subr.mxu0 0.0
    %1163 = vmatpush1.msra.mxu0 0.0
    %1164 = vmatprep.subr.mxu0 0.0
    %1165 = vmatpush1.msra.mxu0 0.0
    %1166 = vmatprep.subr.mxu0 0.0
    %1167 = vmatpush1.msra.mxu0 0.0
    %1168 = vmatprep.subr.mxu0 0.0
    %1169 = vmatpush1.msra.mxu0 0.0
    %1170 = vmatprep.subr.mxu0 0.0
    %1171 = vmatpush1.msra.mxu0 0.0
    %1172 = vmatprep.subr.mxu0 0.0
    %1173 = vmatpush1.msra.mxu0 0.0
    %1174 = vmatprep.subr.mxu0 0.0
    %1175 = vmatpush1.msra.mxu0 0.0
    %1176 = vmatprep.subr.mxu0 0.0
    %1177 = vmatpush1.msra.mxu0 0.0
    %1178 = vmatprep.subr.mxu0 0.0
    %1179 = vmatpush1.msra.mxu0 0.0
    %1180 = vmatprep.subr.mxu0 0.0
    %1181 = vmatpush1.msra.mxu0 0.0
    %1182 = vmatprep.subr.mxu0 0.0
    %1183 = vmatpush1.msra.mxu0 0.0
    %1184 = vmatprep.subr.mxu0 0.0
    %1185 = vmatpush1.msra.mxu0 0.0
    %1186 = vmatprep.subr.mxu0 0.0
    %1187 = vmatpush1.msra.mxu0 0.0
    %1188 = vmatprep.subr.mxu0 0.0
    %1189 = vmatpush1.msra.mxu0 0.0
    %1190 = vmatprep.subr.mxu0 0.0
    %1191 = vmatpush1.msra.mxu0 0.0
    %1192 = vmatprep.subr.mxu0 0.0
    %1193 = vmatpush1.msra.mxu0 %v1157
    %1194 = vmatprep.subr.mxu0 0.0
    %1195 = vmatpush2.msra.mxu0 0.0
    %1196 = vmatprep.subr.mxu0 0.0
    %1197 = vmatpush2.msra.mxu0 0.0
    %1198 = vmatprep.subr.mxu0 0.0
    %1199 = vmatpush2.msra.mxu0 0.0
    %1200 = vmatprep.subr.mxu0 0.0
    %1201 = vmatpush2.msra.mxu0 0.0
    %1202 = vmatprep.subr.mxu0 0.0
    %1203 = vmatpush2.msra.mxu0 0.0
    %1204 = vmatprep.subr.mxu0 0.0
    %1205 = vmatpush2.msra.mxu0 0.0
    %1206 = vmatprep.subr.mxu0 0.0
    %1207 = vmatpush2.msra.mxu0 0.0
    %1208 = vmatprep.subr.mxu0 0.0
    %1209 = vmatpush2.msra.mxu0 0.0
    %1210 = vmatprep.subr.mxu0 0.0
    %1211 = vmatpush2.msra.mxu0 0.0
    %1212 = vmatprep.subr.mxu0 0.0
    %1213 = vmatpush2.msra.mxu0 0.0
    %1214 = vmatprep.subr.mxu0 0.0
    %1215 = vmatpush2.msra.mxu0 0.0
    %1216 = vmatprep.subr.mxu0 0.0
    %1217 = vmatpush2.msra.mxu0 0.0
    %1218 = vmatprep.subr.mxu0 0.0
    %1219 = vmatpush2.msra.mxu0 0.0
    %1220 = vmatprep.subr.mxu0 0.0
    %1221 = vmatpush2.msra.mxu0 0.0
    %1222 = vmatprep.subr.mxu0 0.0
    %1223 = vmatpush2.msra.mxu0 0.0
    %1224 = vmatprep.subr.mxu0 0.0
    %1225 = vmatpush2.msra.mxu0 0.0
    %1226 = vmatprep.mubr.f32.mxu0 0.0
    %1227 = vmatmul.mubr.f32.gmra.mxu0 %v1160
    %v1228 = vpop.f32.mrf.mxu0
    %v1229 = vadd.f32 0.0, %v1228
    %v1230 = vpop.f32.mrf.mxu0
    %1231 = vdwg.mxu0
    %1232 = vrot.lane.b32.xlu0 %v144, 56
    %v1233 = vpop.permute.xlu0 %1232
    %v1236 = vsel %vm306, %v1147, 0
    %1238 = vmatprep.subr.mxu0 0.0
    %1239 = vmatpush1.msra.mxu0 0.0
    %1240 = vmatprep.subr.mxu0 0.0
    %1241 = vmatpush1.msra.mxu0 0.0
    %1242 = vmatprep.subr.mxu0 0.0
    %1243 = vmatpush1.msra.mxu0 0.0
    %1244 = vmatprep.subr.mxu0 0.0
    %1245 = vmatpush1.msra.mxu0 0.0
    %1246 = vmatprep.subr.mxu0 0.0
    %1247 = vmatpush1.msra.mxu0 0.0
    %1248 = vmatprep.subr.mxu0 0.0
    %1249 = vmatpush1.msra.mxu0 0.0
    %1250 = vmatprep.subr.mxu0 0.0
    %1251 = vmatpush1.msra.mxu0 0.0
    %1252 = vmatprep.subr.mxu0 0.0
    %1253 = vmatpush1.msra.mxu0 0.0
    %1254 = vmatprep.subr.mxu0 0.0
    %1255 = vmatpush1.msra.mxu0 0.0
    %1256 = vmatprep.subr.mxu0 0.0
    %1257 = vmatpush1.msra.mxu0 0.0
    %1258 = vmatprep.subr.mxu0 0.0
    %1259 = vmatpush1.msra.mxu0 0.0
    %1260 = vmatprep.subr.mxu0 0.0
    %1261 = vmatpush1.msra.mxu0 0.0
    %1262 = vmatprep.subr.mxu0 0.0
    %1263 = vmatpush1.msra.mxu0 0.0
    %1264 = vmatprep.subr.mxu0 0.0
    %1265 = vmatpush1.msra.mxu0 0.0
    %1266 = vmatprep.subr.mxu0 0.0
    %1267 = vmatpush1.msra.mxu0 0.0
    %1268 = vmatprep.subr.mxu0 0.0
    %1269 = vmatpush1.msra.mxu0 %v1233
    %1270 = vmatprep.subr.mxu0 0.0
    %1271 = vmatpush2.msra.mxu0 0.0
    %1272 = vmatprep.subr.mxu0 0.0
    %1273 = vmatpush2.msra.mxu0 0.0
    %1274 = vmatprep.subr.mxu0 0.0
    %1275 = vmatpush2.msra.mxu0 0.0
    %1276 = vmatprep.subr.mxu0 0.0
    %1277 = vmatpush2.msra.mxu0 0.0
    %1278 = vmatprep.subr.mxu0 0.0
    %1279 = vmatpush2.msra.mxu0 0.0
    %1280 = vmatprep.subr.mxu0 0.0
    %1281 = vmatpush2.msra.mxu0 0.0
    %1282 = vmatprep.subr.mxu0 0.0
    %1283 = vmatpush2.msra.mxu0 0.0
    %1284 = vmatprep.subr.mxu0 0.0
    %1285 = vmatpush2.msra.mxu0 0.0
    %1286 = vmatprep.subr.mxu0 0.0
    %1287 = vmatpush2.msra.mxu0 0.0
    %1288 = vmatprep.subr.mxu0 0.0
    %1289 = vmatpush2.msra.mxu0 0.0
    %1290 = vmatprep.subr.mxu0 0.0
    %1291 = vmatpush2.msra.mxu0 0.0
    %1292 = vmatprep.subr.mxu0 0.0
    %1293 = vmatpush2.msra.mxu0 0.0
    %1294 = vmatprep.subr.mxu0 0.0
    %1295 = vmatpush2.msra.mxu0 0.0
    %1296 = vmatprep.subr.mxu0 0.0
    %1297 = vmatpush2.msra.mxu0 0.0
    %1298 = vmatprep.subr.mxu0 0.0
    %1299 = vmatpush2.msra.mxu0 0.0
    %1300 = vmatprep.subr.mxu0 0.0
    %1301 = vmatpush2.msra.mxu0 0.0
    %1302 = vmatprep.mubr.f32.mxu0 0.0
    %1303 = vmatmul.mubr.f32.gmra.mxu0 %v1236
    %v1304 = vpop.f32.mrf.mxu0
    %v1305 = vadd.f32 0.0, %v1304
    %v1306 = vpop.f32.mrf.mxu0
    %1307 = vdwg.mxu0
    %v1308 = vmul.f32 %v1229, %v1154
    %v1309 = vmul.f32 %v1305, %v1155
    %v1311 = vsel %vm154, %v1308, 0
    %v1314 = vsel %vm154, %v1309, 0
    %v1317 = vsel %vm819, %v148, 0
    %1319 = vmatprep.subr.mxu0 0.0
    %1320 = vmatpush1.msra.mxu0 0.0
    %1321 = vmatprep.subr.mxu0 0.0
    %1322 = vmatpush1.msra.mxu0 0.0
    %1323 = vmatprep.subr.mxu0 0.0
    %1324 = vmatpush1.msra.mxu0 0.0
    %1325 = vmatprep.subr.mxu0 0.0
    %1326 = vmatpush1.msra.mxu0 0.0
    %1327 = vmatprep.subr.mxu0 0.0
    %1328 = vmatpush1.msra.mxu0 0.0
    %1329 = vmatprep.subr.mxu0 0.0
    %1330 = vmatpush1.msra.mxu0 0.0
    %1331 = vmatprep.subr.mxu0 0.0
    %1332 = vmatpush1.msra.mxu0 0.0
    %1333 = vmatprep.subr.mxu0 0.0
    %1334 = vmatpush1.msra.mxu0 0.0
    %1335 = vmatprep.subr.mxu0 0.0
    %1336 = vmatpush1.msra.mxu0 0.0
    %1337 = vmatprep.subr.mxu0 0.0
    %1338 = vmatpush1.msra.mxu0 0.0
    %1339 = vmatprep.subr.mxu0 0.0
    %1340 = vmatpush1.msra.mxu0 0.0
    %1341 = vmatprep.subr.mxu0 0.0
    %1342 = vmatpush1.msra.mxu0 0.0
    %1343 = vmatprep.subr.mxu0 0.0
    %1344 = vmatpush1.msra.mxu0 0.0
    %1345 = vmatprep.subr.mxu0 0.0
    %1346 = vmatpush1.msra.mxu0 0.0
    %1347 = vmatprep.subr.mxu0 0.0
    %1348 = vmatpush1.msra.mxu0 0.0
    %1349 = vmatprep.subr.mxu0 0.0
    %1350 = vmatpush1.msra.mxu0 %v1317
    %1351 = vmatprep.subr.mxu0 0.0
    %1352 = vmatpush2.msra.mxu0 0.0
    %1353 = vmatprep.subr.mxu0 0.0
    %1354 = vmatpush2.msra.mxu0 0.0
    %1355 = vmatprep.subr.mxu0 0.0
    %1356 = vmatpush2.msra.mxu0 0.0
    %1357 = vmatprep.subr.mxu0 0.0
    %1358 = vmatpush2.msra.mxu0 0.0
    %1359 = vmatprep.subr.mxu0 0.0
    %1360 = vmatpush2.msra.mxu0 0.0
    %1361 = vmatprep.subr.mxu0 0.0
    %1362 = vmatpush2.msra.mxu0 0.0
    %1363 = vmatprep.subr.mxu0 0.0
    %1364 = vmatpush2.msra.mxu0 0.0
    %1365 = vmatprep.subr.mxu0 0.0
    %1366 = vmatpush2.msra.mxu0 0.0
    %1367 = vmatprep.subr.mxu0 0.0
    %1368 = vmatpush2.msra.mxu0 0.0
    %1369 = vmatprep.subr.mxu0 0.0
    %1370 = vmatpush2.msra.mxu0 0.0
    %1371 = vmatprep.subr.mxu0 0.0
    %1372 = vmatpush2.msra.mxu0 0.0
    %1373 = vmatprep.subr.mxu0 0.0
    %1374 = vmatpush2.msra.mxu0 0.0
    %1375 = vmatprep.subr.mxu0 0.0
    %1376 = vmatpush2.msra.mxu0 0.0
    %1377 = vmatprep.subr.mxu0 0.0
    %1378 = vmatpush2.msra.mxu0 0.0
    %1379 = vmatprep.subr.mxu0 0.0
    %1380 = vmatpush2.msra.mxu0 0.0
    %1381 = vmatprep.subr.mxu0 0.0
    %1382 = vmatpush2.msra.mxu0 0.0
    %1383 = vmatprep.mubr.f32.mxu0 0.0
    %1384 = vmatmul.mubr.f32.gmra.mxu0 %v1311
    %v1385 = vpop.f32.mrf.mxu0
    %v1386 = vadd.f32 0.0, %v1385
    %v1387 = vpop.f32.mrf.mxu0
    %1388 = vmatprep.mubr.f32.mxu0 0.0
    %1389 = vmatmul.mubr.f32.gmra.mxu0 %v1314
    %v1390 = vpop.f32.mrf.mxu0
    %v1391 = vadd.f32 0.0, %v1390
    %v1392 = vpop.f32.mrf.mxu0
    %1393 = vdwg.mxu0
    %v1394 = vadd.f32 %v972, %v1386
    %v1395 = vadd.f32 %v977, %v1391
    %1396 = vrot.lane.b32.xlu0 %v139, 116
    %v1397 = vpop.permute.xlu0 %1396
    %1398 = vrot.lane.b32.xlu0 %v139, 84
    %v1399 = vpop.permute.xlu0 %1398
    %v1400 = vsel %vm154, %v1397, 0
    %v1402 = vsel %vm154, %v1399, 0
    %1404 = vmatprep.subr.mxu0 0.0
    %1405 = vmatpush1.xpose.msra.mxu0 0.0
    %1406 = vmatprep.subr.mxu0 0.0
    %1407 = vmatpush1.xpose.msra.mxu0 0.0
    %1408 = vmatprep.subr.mxu0 0.0
    %1409 = vmatpush1.xpose.msra.mxu0 0.0
    %1410 = vmatprep.subr.mxu0 0.0
    %1411 = vmatpush1.xpose.msra.mxu0 0.0
    %1412 = vmatprep.subr.mxu0 0.0
    %1413 = vmatpush1.xpose.msra.mxu0 0.0
    %1414 = vmatprep.subr.mxu0 0.0
    %1415 = vmatpush1.xpose.msra.mxu0 0.0
    %1416 = vmatprep.subr.mxu0 0.0
    %1417 = vmatpush1.xpose.msra.mxu0 0.0
    %1418 = vmatprep.subr.mxu0 0.0
    %1419 = vmatpush1.xpose.msra.mxu0 0.0
    %1420 = vmatprep.subr.mxu0 0.0
    %1421 = vmatpush1.xpose.msra.mxu0 0.0
    %1422 = vmatprep.subr.mxu0 0.0
    %1423 = vmatpush1.xpose.msra.mxu0 0.0
    %1424 = vmatprep.subr.mxu0 0.0
    %1425 = vmatpush1.xpose.msra.mxu0 0.0
    %1426 = vmatprep.subr.mxu0 0.0
    %1427 = vmatpush1.xpose.msra.mxu0 0.0
    %1428 = vmatprep.subr.mxu0 0.0
    %1429 = vmatpush1.xpose.msra.mxu0 0.0
    %1430 = vmatprep.subr.mxu0 0.0
    %1431 = vmatpush1.xpose.msra.mxu0 0.0
    %1432 = vmatprep.subr.mxu0 0.0
    %1433 = vmatpush1.xpose.msra.mxu0 0.0
    %1434 = vmatprep.subr.mxu0 0.0
    %1435 = vmatpush1.xpose.msra.mxu0 %v1402
    %1436 = vmatprep.subr.mxu0 0.0
    %1437 = vmatpush2.xpose.msra.mxu0 0.0
    %1438 = vmatprep.subr.mxu0 0.0
    %1439 = vmatpush2.xpose.msra.mxu0 0.0
    %1440 = vmatprep.subr.mxu0 0.0
    %1441 = vmatpush2.xpose.msra.mxu0 0.0
    %1442 = vmatprep.subr.mxu0 0.0
    %1443 = vmatpush2.xpose.msra.mxu0 0.0
    %1444 = vmatprep.subr.mxu0 0.0
    %1445 = vmatpush2.xpose.msra.mxu0 0.0
    %1446 = vmatprep.subr.mxu0 0.0
    %1447 = vmatpush2.xpose.msra.mxu0 0.0
    %1448 = vmatprep.subr.mxu0 0.0
    %1449 = vmatpush2.xpose.msra.mxu0 0.0
    %1450 = vmatprep.subr.mxu0 0.0
    %1451 = vmatpush2.xpose.msra.mxu0 0.0
    %1452 = vmatprep.subr.mxu0 0.0
    %1453 = vmatpush2.xpose.msra.mxu0 0.0
    %1454 = vmatprep.subr.mxu0 0.0
    %1455 = vmatpush2.xpose.msra.mxu0 0.0
    %1456 = vmatprep.subr.mxu0 0.0
    %1457 = vmatpush2.xpose.msra.mxu0 0.0
    %1458 = vmatprep.subr.mxu0 0.0
    %1459 = vmatpush2.xpose.msra.mxu0 0.0
    %1460 = vmatprep.subr.mxu0 0.0
    %1461 = vmatpush2.xpose.msra.mxu0 0.0
    %1462 = vmatprep.subr.mxu0 0.0
    %1463 = vmatpush2.xpose.msra.mxu0 0.0
    %1464 = vmatprep.subr.mxu0 0.0
    %1465 = vmatpush2.xpose.msra.mxu0 0.0
    %1466 = vmatprep.subr.mxu0 0.0
    %1467 = vmatpush2.xpose.msra.mxu0 0.0
    %1468 = vmatprep.mubr.f32.mxu0 0.0
    %1469 = vmatmul.mubr.f32.gmra.mxu0 %v1400
    %v1470 = vpop.f32.mrf.mxu0
    %v1471 = vadd.f32 0.0, %v1470
    %v1472 = vpop.f32.mrf.mxu0
    %1473 = vdwg.mxu0
    %1474 = vrot.lane.b32.xlu0 %v144, 116
    %v1475 = vpop.permute.xlu0 %1474
    %1476 = vrot.lane.b32.xlu0 %v144, 84
    %v1477 = vpop.permute.xlu0 %1476
    %v1478 = vsel %vm154, %v1475, 0
    %v1480 = vsel %vm154, %v1477, 0
    %1482 = vmatprep.subr.mxu0 0.0
    %1483 = vmatpush1.xpose.msra.mxu0 0.0
    %1484 = vmatprep.subr.mxu0 0.0
    %1485 = vmatpush1.xpose.msra.mxu0 0.0
    %1486 = vmatprep.subr.mxu0 0.0
    %1487 = vmatpush1.xpose.msra.mxu0 0.0
    %1488 = vmatprep.subr.mxu0 0.0
    %1489 = vmatpush1.xpose.msra.mxu0 0.0
    %1490 = vmatprep.subr.mxu0 0.0
    %1491 = vmatpush1.xpose.msra.mxu0 0.0
    %1492 = vmatprep.subr.mxu0 0.0
    %1493 = vmatpush1.xpose.msra.mxu0 0.0
    %1494 = vmatprep.subr.mxu0 0.0
    %1495 = vmatpush1.xpose.msra.mxu0 0.0
    %1496 = vmatprep.subr.mxu0 0.0
    %1497 = vmatpush1.xpose.msra.mxu0 0.0
    %1498 = vmatprep.subr.mxu0 0.0
    %1499 = vmatpush1.xpose.msra.mxu0 0.0
    %1500 = vmatprep.subr.mxu0 0.0
    %1501 = vmatpush1.xpose.msra.mxu0 0.0
    %1502 = vmatprep.subr.mxu0 0.0
    %1503 = vmatpush1.xpose.msra.mxu0 0.0
    %1504 = vmatprep.subr.mxu0 0.0
    %1505 = vmatpush1.xpose.msra.mxu0 0.0
    %1506 = vmatprep.subr.mxu0 0.0
    %1507 = vmatpush1.xpose.msra.mxu0 0.0
    %1508 = vmatprep.subr.mxu0 0.0
    %1509 = vmatpush1.xpose.msra.mxu0 0.0
    %1510 = vmatprep.subr.mxu0 0.0
    %1511 = vmatpush1.xpose.msra.mxu0 0.0
    %1512 = vmatprep.subr.mxu0 0.0
    %1513 = vmatpush1.xpose.msra.mxu0 %v1480
    %1514 = vmatprep.subr.mxu0 0.0
    %1515 = vmatpush2.xpose.msra.mxu0 0.0
    %1516 = vmatprep.subr.mxu0 0.0
    %1517 = vmatpush2.xpose.msra.mxu0 0.0
    %1518 = vmatprep.subr.mxu0 0.0
    %1519 = vmatpush2.xpose.msra.mxu0 0.0
    %1520 = vmatprep.subr.mxu0 0.0
    %1521 = vmatpush2.xpose.msra.mxu0 0.0
    %1522 = vmatprep.subr.mxu0 0.0
    %1523 = vmatpush2.xpose.msra.mxu0 0.0
    %1524 = vmatprep.subr.mxu0 0.0
    %1525 = vmatpush2.xpose.msra.mxu0 0.0
    %1526 = vmatprep.subr.mxu0 0.0
    %1527 = vmatpush2.xpose.msra.mxu0 0.0
    %1528 = vmatprep.subr.mxu0 0.0
    %1529 = vmatpush2.xpose.msra.mxu0 0.0
    %1530 = vmatprep.subr.mxu0 0.0
    %1531 = vmatpush2.xpose.msra.mxu0 0.0
    %1532 = vmatprep.subr.mxu0 0.0
    %1533 = vmatpush2.xpose.msra.mxu0 0.0
    %1534 = vmatprep.subr.mxu0 0.0
    %1535 = vmatpush2.xpose.msra.mxu0 0.0
    %1536 = vmatprep.subr.mxu0 0.0
    %1537 = vmatpush2.xpose.msra.mxu0 0.0
    %1538 = vmatprep.subr.mxu0 0.0
    %1539 = vmatpush2.xpose.msra.mxu0 0.0
    %1540 = vmatprep.subr.mxu0 0.0
    %1541 = vmatpush2.xpose.msra.mxu0 0.0
    %1542 = vmatprep.subr.mxu0 0.0
    %1543 = vmatpush2.xpose.msra.mxu0 0.0
    %1544 = vmatprep.subr.mxu0 0.0
    %1545 = vmatpush2.xpose.msra.mxu0 0.0
    %1546 = vmatprep.mubr.f32.mxu0 0.0
    %1547 = vmatmul.mubr.f32.gmra.mxu0 %v1478
    %v1548 = vpop.f32.mrf.mxu0
    %v1549 = vadd.f32 0.0, %v1548
    %v1550 = vpop.f32.mrf.mxu0
    %1551 = vdwg.mxu0
    %v1552 = vsel %vm306, %v1471, -inf
    %1553 = vmax.xlane.f32.xlu0 %v1552
    %v1554 = vpop.xlane.xlu0 %1553
    %v1555 = vsel %vm306, %v1549, -inf
    %1556 = vmax.xlane.f32.xlu0 %v1555
    %v1557 = vpop.xlane.xlu0 %1556
    %v1558 = vsub.f32 %v1471, %v1554
    %v1559 = vsub.f32 %v1549, %v1557
    %v1560 = vmul.f32 %v1558, 1.442695
    %v1561 = vpow.pop %v1560
    %v1562 = vmul.f32 %v1559, 1.442695
    %v1563 = vpow.pop %v1562
    %v1564 = vsel %vm306, %v1561, 0.0
    %1565 = vadd.xlane.f32.xlu0 %v1564
    %v1566 = vpop.xlane.xlu0 %1565
    %v1567 = vsel %vm306, %v1563, 0.0
    %1568 = vadd.xlane.f32.xlu0 %v1567
    %v1569 = vpop.xlane.xlu0 %1568
    %v1570 = vrcp.pop %v1566
    %v1571 = vrcp.pop %v1569
    %1572 = vrot.lane.b32.xlu0 %v139, 52
    %v1573 = vpop.permute.xlu0 %1572
    %v1576 = vsel %vm306, %v1561, 0
    %1578 = vmatprep.subr.mxu0 0.0
    %1579 = vmatpush1.msra.mxu0 0.0
    %1580 = vmatprep.subr.mxu0 0.0
    %1581 = vmatpush1.msra.mxu0 0.0
    %1582 = vmatprep.subr.mxu0 0.0
    %1583 = vmatpush1.msra.mxu0 0.0
    %1584 = vmatprep.subr.mxu0 0.0
    %1585 = vmatpush1.msra.mxu0 0.0
    %1586 = vmatprep.subr.mxu0 0.0
    %1587 = vmatpush1.msra.mxu0 0.0
    %1588 = vmatprep.subr.mxu0 0.0
    %1589 = vmatpush1.msra.mxu0 0.0
    %1590 = vmatprep.subr.mxu0 0.0
    %1591 = vmatpush1.msra.mxu0 0.0
    %1592 = vmatprep.subr.mxu0 0.0
    %1593 = vmatpush1.msra.mxu0 0.0
    %1594 = vmatprep.subr.mxu0 0.0
    %1595 = vmatpush1.msra.mxu0 0.0
    %1596 = vmatprep.subr.mxu0 0.0
    %1597 = vmatpush1.msra.mxu0 0.0
    %1598 = vmatprep.subr.mxu0 0.0
    %1599 = vmatpush1.msra.mxu0 0.0
    %1600 = vmatprep.subr.mxu0 0.0
    %1601 = vmatpush1.msra.mxu0 0.0
    %1602 = vmatprep.subr.mxu0 0.0
    %1603 = vmatpush1.msra.mxu0 0.0
    %1604 = vmatprep.subr.mxu0 0.0
    %1605 = vmatpush1.msra.mxu0 0.0
    %1606 = vmatprep.subr.mxu0 0.0
    %1607 = vmatpush1.msra.mxu0 0.0
    %1608 = vmatprep.subr.mxu0 0.0
    %1609 = vmatpush1.msra.mxu0 %v1573
    %1610 = vmatprep.subr.mxu0 0.0
    %1611 = vmatpush2.msra.mxu0 0.0
    %1612 = vmatprep.subr.mxu0 0.0
    %1613 = vmatpush2.msra.mxu0 0.0
    %1614 = vmatprep.subr.mxu0 0.0
    %1615 = vmatpush2.msra.mxu0 0.0
    %1616 = vmatprep.subr.mxu0 0.0
    %1617 = vmatpush2.msra.mxu0 0.0
    %1618 = vmatprep.subr.mxu0 0.0
    %1619 = vmatpush2.msra.mxu0 0.0
    %1620 = vmatprep.subr.mxu0 0.0
    %1621 = vmatpush2.msra.mxu0 0.0
    %1622 = vmatprep.subr.mxu0 0.0
    %1623 = vmatpush2.msra.mxu0 0.0
    %1624 = vmatprep.subr.mxu0 0.0
    %1625 = vmatpush2.msra.mxu0 0.0
    %1626 = vmatprep.subr.mxu0 0.0
    %1627 = vmatpush2.msra.mxu0 0.0
    %1628 = vmatprep.subr.mxu0 0.0
    %1629 = vmatpush2.msra.mxu0 0.0
    %1630 = vmatprep.subr.mxu0 0.0
    %1631 = vmatpush2.msra.mxu0 0.0
    %1632 = vmatprep.subr.mxu0 0.0
    %1633 = vmatpush2.msra.mxu0 0.0
    %1634 = vmatprep.subr.mxu0 0.0
    %1635 = vmatpush2.msra.mxu0 0.0
    %1636 = vmatprep.subr.mxu0 0.0
    %1637 = vmatpush2.msra.mxu0 0.0
    %1638 = vmatprep.subr.mxu0 0.0
    %1639 = vmatpush2.msra.mxu0 0.0
    %1640 = vmatprep.subr.mxu0 0.0
    %1641 = vmatpush2.msra.mxu0 0.0
    %1642 = vmatprep.mubr.f32.mxu0 0.0
    %1643 = vmatmul.mubr.f32.gmra.mxu0 %v1576
    %v1644 = vpop.f32.mrf.mxu0
    %v1645 = vadd.f32 0.0, %v1644
    %v1646 = vpop.f32.mrf.mxu0
    %1647 = vdwg.mxu0
    %1648 = vrot.lane.b32.xlu0 %v144, 52
    %v1649 = vpop.permute.xlu0 %1648
    %v1652 = vsel %vm306, %v1563, 0
    %1654 = vmatprep.subr.mxu0 0.0
    %1655 = vmatpush1.msra.mxu0 0.0
    %1656 = vmatprep.subr.mxu0 0.0
    %1657 = vmatpush1.msra.mxu0 0.0
    %1658 = vmatprep.subr.mxu0 0.0
    %1659 = vmatpush1.msra.mxu0 0.0
    %1660 = vmatprep.subr.mxu0 0.0
    %1661 = vmatpush1.msra.mxu0 0.0
    %1662 = vmatprep.subr.mxu0 0.0
    %1663 = vmatpush1.msra.mxu0 0.0
    %1664 = vmatprep.subr.mxu0 0.0
    %1665 = vmatpush1.msra.mxu0 0.0
    %1666 = vmatprep.subr.mxu0 0.0
    %1667 = vmatpush1.msra.mxu0 0.0
    %1668 = vmatprep.subr.mxu0 0.0
    %1669 = vmatpush1.msra.mxu0 0.0
    %1670 = vmatprep.subr.mxu0 0.0
    %1671 = vmatpush1.msra.mxu0 0.0
    %1672 = vmatprep.subr.mxu0 0.0
    %1673 = vmatpush1.msra.mxu0 0.0
    %1674 = vmatprep.subr.mxu0 0.0
    %1675 = vmatpush1.msra.mxu0 0.0
    %1676 = vmatprep.subr.mxu0 0.0
    %1677 = vmatpush1.msra.mxu0 0.0
    %1678 = vmatprep.subr.mxu0 0.0
    %1679 = vmatpush1.msra.mxu0 0.0
    %1680 = vmatprep.subr.mxu0 0.0
    %1681 = vmatpush1.msra.mxu0 0.0
    %1682 = vmatprep.subr.mxu0 0.0
    %1683 = vmatpush1.msra.mxu0 0.0
    %1684 = vmatprep.subr.mxu0 0.0
    %1685 = vmatpush1.msra.mxu0 %v1649
    %1686 = vmatprep.subr.mxu0 0.0
    %1687 = vmatpush2.msra.mxu0 0.0
    %1688 = vmatprep.subr.mxu0 0.0
    %1689 = vmatpush2.msra.mxu0 0.0
    %1690 = vmatprep.subr.mxu0 0.0
    %1691 = vmatpush2.msra.mxu0 0.0
    %1692 = vmatprep.subr.mxu0 0.0
    %1693 = vmatpush2.msra.mxu0 0.0
    %1694 = vmatprep.subr.mxu0 0.0
    %1695 = vmatpush2.msra.mxu0 0.0
    %1696 = vmatprep.subr.mxu0 0.0
    %1697 = vmatpush2.msra.mxu0 0.0
    %1698 = vmatprep.subr.mxu0 0.0
    %1699 = vmatpush2.msra.mxu0 0.0
    %1700 = vmatprep.subr.mxu0 0.0
    %1701 = vmatpush2.msra.mxu0 0.0
    %1702 = vmatprep.subr.mxu0 0.0
    %1703 = vmatpush2.msra.mxu0 0.0
    %1704 = vmatprep.subr.mxu0 0.0
    %1705 = vmatpush2.msra.mxu0 0.0
    %1706 = vmatprep.subr.mxu0 0.0
    %1707 = vmatpush2.msra.mxu0 0.0
    %1708 = vmatprep.subr.mxu0 0.0
    %1709 = vmatpush2.msra.mxu0 0.0
    %1710 = vmatprep.subr.mxu0 0.0
    %1711 = vmatpush2.msra.mxu0 0.0
    %1712 = vmatprep.subr.mxu0 0.0
    %1713 = vmatpush2.msra.mxu0 0.0
    %1714 = vmatprep.subr.mxu0 0.0
    %1715 = vmatpush2.msra.mxu0 0.0
    %1716 = vmatprep.subr.mxu0 0.0
    %1717 = vmatpush2.msra.mxu0 0.0
    %1718 = vmatprep.mubr.f32.mxu0 0.0
    %1719 = vmatmul.mubr.f32.gmra.mxu0 %v1652
    %v1720 = vpop.f32.mrf.mxu0
    %v1721 = vadd.f32 0.0, %v1720
    %v1722 = vpop.f32.mrf.mxu0
    %1723 = vdwg.mxu0
    %v1724 = vmul.f32 %v1645, %v1570
    %v1725 = vmul.f32 %v1721, %v1571
    %v1726 = vrot.slane %v148, 4
    %v1728 = vsel %vm154, %v1724, 0
    %v1731 = vsel %vm154, %v1725, 0
    %v1733 = vsel %vm819, %v1726, 0
    %1735 = vmatprep.subr.mxu0 0.0
    %1736 = vmatpush1.msra.mxu0 0.0
    %1737 = vmatprep.subr.mxu0 0.0
    %1738 = vmatpush1.msra.mxu0 0.0
    %1739 = vmatprep.subr.mxu0 0.0
    %1740 = vmatpush1.msra.mxu0 0.0
    %1741 = vmatprep.subr.mxu0 0.0
    %1742 = vmatpush1.msra.mxu0 0.0
    %1743 = vmatprep.subr.mxu0 0.0
    %1744 = vmatpush1.msra.mxu0 0.0
    %1745 = vmatprep.subr.mxu0 0.0
    %1746 = vmatpush1.msra.mxu0 0.0
    %1747 = vmatprep.subr.mxu0 0.0
    %1748 = vmatpush1.msra.mxu0 0.0
    %1749 = vmatprep.subr.mxu0 0.0
    %1750 = vmatpush1.msra.mxu0 0.0
    %1751 = vmatprep.subr.mxu0 0.0
    %1752 = vmatpush1.msra.mxu0 0.0
    %1753 = vmatprep.subr.mxu0 0.0
    %1754 = vmatpush1.msra.mxu0 0.0
    %1755 = vmatprep.subr.mxu0 0.0
    %1756 = vmatpush1.msra.mxu0 0.0
    %1757 = vmatprep.subr.mxu0 0.0
    %1758 = vmatpush1.msra.mxu0 0.0
    %1759 = vmatprep.subr.mxu0 0.0
    %1760 = vmatpush1.msra.mxu0 0.0
    %1761 = vmatprep.subr.mxu0 0.0
    %1762 = vmatpush1.msra.mxu0 0.0
    %1763 = vmatprep.subr.mxu0 0.0
    %1764 = vmatpush1.msra.mxu0 0.0
    %1765 = vmatprep.subr.mxu0 0.0
    %1766 = vmatpush1.msra.mxu0 %v1733
    %1767 = vmatprep.subr.mxu0 0.0
    %1768 = vmatpush2.msra.mxu0 0.0
    %1769 = vmatprep.subr.mxu0 0.0
    %1770 = vmatpush2.msra.mxu0 0.0
    %1771 = vmatprep.subr.mxu0 0.0
    %1772 = vmatpush2.msra.mxu0 0.0
    %1773 = vmatprep.subr.mxu0 0.0
    %1774 = vmatpush2.msra.mxu0 0.0
    %1775 = vmatprep.subr.mxu0 0.0
    %1776 = vmatpush2.msra.mxu0 0.0
    %1777 = vmatprep.subr.mxu0 0.0
    %1778 = vmatpush2.msra.mxu0 0.0
    %1779 = vmatprep.subr.mxu0 0.0
    %1780 = vmatpush2.msra.mxu0 0.0
    %1781 = vmatprep.subr.mxu0 0.0
    %1782 = vmatpush2.msra.mxu0 0.0
    %1783 = vmatprep.subr.mxu0 0.0
    %1784 = vmatpush2.msra.mxu0 0.0
    %1785 = vmatprep.subr.mxu0 0.0
    %1786 = vmatpush2.msra.mxu0 0.0
    %1787 = vmatprep.subr.mxu0 0.0
    %1788 = vmatpush2.msra.mxu0 0.0
    %1789 = vmatprep.subr.mxu0 0.0
    %1790 = vmatpush2.msra.mxu0 0.0
    %1791 = vmatprep.subr.mxu0 0.0
    %1792 = vmatpush2.msra.mxu0 0.0
    %1793 = vmatprep.subr.mxu0 0.0
    %1794 = vmatpush2.msra.mxu0 0.0
    %1795 = vmatprep.subr.mxu0 0.0
    %1796 = vmatpush2.msra.mxu0 0.0
    %1797 = vmatprep.subr.mxu0 0.0
    %1798 = vmatpush2.msra.mxu0 0.0
    %1799 = vmatprep.mubr.f32.mxu0 0.0
    %1800 = vmatmul.mubr.f32.gmra.mxu0 %v1728
    %v1801 = vpop.f32.mrf.mxu0
    %v1802 = vadd.f32 0.0, %v1801
    %v1803 = vpop.f32.mrf.mxu0
    %1804 = vmatprep.mubr.f32.mxu0 0.0
    %1805 = vmatmul.mubr.f32.gmra.mxu0 %v1731
    %v1806 = vpop.f32.mrf.mxu0
    %v1807 = vadd.f32 0.0, %v1806
    %v1808 = vpop.f32.mrf.mxu0
    %1809 = vdwg.mxu0
    %v1810 = vadd.f32 %v1394, %v1802
    %v1811 = vadd.f32 %v1395, %v1807
    %1812 = vrot.lane.b32.xlu0 %v139, 112
    %v1813 = vpop.permute.xlu0 %1812
    %1814 = vrot.lane.b32.xlu0 %v139, 80
    %v1815 = vpop.permute.xlu0 %1814
    %v1816 = vsel %vm154, %v1813, 0
    %v1818 = vsel %vm154, %v1815, 0
    %1820 = vmatprep.subr.mxu0 0.0
    %1821 = vmatpush1.xpose.msra.mxu0 0.0
    %1822 = vmatprep.subr.mxu0 0.0
    %1823 = vmatpush1.xpose.msra.mxu0 0.0
    %1824 = vmatprep.subr.mxu0 0.0
    %1825 = vmatpush1.xpose.msra.mxu0 0.0
    %1826 = vmatprep.subr.mxu0 0.0
    %1827 = vmatpush1.xpose.msra.mxu0 0.0
    %1828 = vmatprep.subr.mxu0 0.0
    %1829 = vmatpush1.xpose.msra.mxu0 0.0
    %1830 = vmatprep.subr.mxu0 0.0
    %1831 = vmatpush1.xpose.msra.mxu0 0.0
    %1832 = vmatprep.subr.mxu0 0.0
    %1833 = vmatpush1.xpose.msra.mxu0 0.0
    %1834 = vmatprep.subr.mxu0 0.0
    %1835 = vmatpush1.xpose.msra.mxu0 0.0
    %1836 = vmatprep.subr.mxu0 0.0
    %1837 = vmatpush1.xpose.msra.mxu0 0.0
    %1838 = vmatprep.subr.mxu0 0.0
    %1839 = vmatpush1.xpose.msra.mxu0 0.0
    %1840 = vmatprep.subr.mxu0 0.0
    %1841 = vmatpush1.xpose.msra.mxu0 0.0
    %1842 = vmatprep.subr.mxu0 0.0
    %1843 = vmatpush1.xpose.msra.mxu0 0.0
    %1844 = vmatprep.subr.mxu0 0.0
    %1845 = vmatpush1.xpose.msra.mxu0 0.0
    %1846 = vmatprep.subr.mxu0 0.0
    %1847 = vmatpush1.xpose.msra.mxu0 0.0
    %1848 = vmatprep.subr.mxu0 0.0
    %1849 = vmatpush1.xpose.msra.mxu0 0.0
    %1850 = vmatprep.subr.mxu0 0.0
    %1851 = vmatpush1.xpose.msra.mxu0 %v1818
    %1852 = vmatprep.subr.mxu0 0.0
    %1853 = vmatpush2.xpose.msra.mxu0 0.0
    %1854 = vmatprep.subr.mxu0 0.0
    %1855 = vmatpush2.xpose.msra.mxu0 0.0
    %1856 = vmatprep.subr.mxu0 0.0
    %1857 = vmatpush2.xpose.msra.mxu0 0.0
    %1858 = vmatprep.subr.mxu0 0.0
    %1859 = vmatpush2.xpose.msra.mxu0 0.0
    %1860 = vmatprep.subr.mxu0 0.0
    %1861 = vmatpush2.xpose.msra.mxu0 0.0
    %1862 = vmatprep.subr.mxu0 0.0
    %1863 = vmatpush2.xpose.msra.mxu0 0.0
    %1864 = vmatprep.subr.mxu0 0.0
    %1865 = vmatpush2.xpose.msra.mxu0 0.0
    %1866 = vmatprep.subr.mxu0 0.0
    %1867 = vmatpush2.xpose.msra.mxu0 0.0
    %1868 = vmatprep.subr.mxu0 0.0
    %1869 = vmatpush2.xpose.msra.mxu0 0.0
    %1870 = vmatprep.subr.mxu0 0.0
    %1871 = vmatpush2.xpose.msra.mxu0 0.0
    %1872 = vmatprep.subr.mxu0 0.0
    %1873 = vmatpush2.xpose.msra.mxu0 0.0
    %1874 = vmatprep.subr.mxu0 0.0
    %1875 = vmatpush2.xpose.msra.mxu0 0.0
    %1876 = vmatprep.subr.mxu0 0.0
    %1877 = vmatpush2.xpose.msra.mxu0 0.0
    %1878 = vmatprep.subr.mxu0 0.0
    %1879 = vmatpush2.xpose.msra.mxu0 0.0
    %1880 = vmatprep.subr.mxu0 0.0
    %1881 = vmatpush2.xpose.msra.mxu0 0.0
    %1882 = vmatprep.subr.mxu0 0.0
    %1883 = vmatpush2.xpose.msra.mxu0 0.0
    %1884 = vmatprep.mubr.f32.mxu0 0.0
    %1885 = vmatmul.mubr.f32.gmra.mxu0 %v1816
    %v1886 = vpop.f32.mrf.mxu0
    %v1887 = vadd.f32 0.0, %v1886
    %v1888 = vpop.f32.mrf.mxu0
    %1889 = vdwg.mxu0
    %1890 = vrot.lane.b32.xlu0 %v144, 112
    %v1891 = vpop.permute.xlu0 %1890
    %1892 = vrot.lane.b32.xlu0 %v144, 80
    %v1893 = vpop.permute.xlu0 %1892
    %v1894 = vsel %vm154, %v1891, 0
    %v1896 = vsel %vm154, %v1893, 0
    %1898 = vmatprep.subr.mxu0 0.0
    %1899 = vmatpush1.xpose.msra.mxu0 0.0
    %1900 = vmatprep.subr.mxu0 0.0
    %1901 = vmatpush1.xpose.msra.mxu0 0.0
    %1902 = vmatprep.subr.mxu0 0.0
    %1903 = vmatpush1.xpose.msra.mxu0 0.0
    %1904 = vmatprep.subr.mxu0 0.0
    %1905 = vmatpush1.xpose.msra.mxu0 0.0
    %1906 = vmatprep.subr.mxu0 0.0
    %1907 = vmatpush1.xpose.msra.mxu0 0.0
    %1908 = vmatprep.subr.mxu0 0.0
    %1909 = vmatpush1.xpose.msra.mxu0 0.0
    %1910 = vmatprep.subr.mxu0 0.0
    %1911 = vmatpush1.xpose.msra.mxu0 0.0
    %1912 = vmatprep.subr.mxu0 0.0
    %1913 = vmatpush1.xpose.msra.mxu0 0.0
    %1914 = vmatprep.subr.mxu0 0.0
    %1915 = vmatpush1.xpose.msra.mxu0 0.0
    %1916 = vmatprep.subr.mxu0 0.0
    %1917 = vmatpush1.xpose.msra.mxu0 0.0
    %1918 = vmatprep.subr.mxu0 0.0
    %1919 = vmatpush1.xpose.msra.mxu0 0.0
    %1920 = vmatprep.subr.mxu0 0.0
    %1921 = vmatpush1.xpose.msra.mxu0 0.0
    %1922 = vmatprep.subr.mxu0 0.0
    %1923 = vmatpush1.xpose.msra.mxu0 0.0
    %1924 = vmatprep.subr.mxu0 0.0
    %1925 = vmatpush1.xpose.msra.mxu0 0.0
    %1926 = vmatprep.subr.mxu0 0.0
    %1927 = vmatpush1.xpose.msra.mxu0 0.0
    %1928 = vmatprep.subr.mxu0 0.0
    %1929 = vmatpush1.xpose.msra.mxu0 %v1896
    %1930 = vmatprep.subr.mxu0 0.0
    %1931 = vmatpush2.xpose.msra.mxu0 0.0
    %1932 = vmatprep.subr.mxu0 0.0
    %1933 = vmatpush2.xpose.msra.mxu0 0.0
    %1934 = vmatprep.subr.mxu0 0.0
    %1935 = vmatpush2.xpose.msra.mxu0 0.0
    %1936 = vmatprep.subr.mxu0 0.0
    %1937 = vmatpush2.xpose.msra.mxu0 0.0
    %1938 = vmatprep.subr.mxu0 0.0
    %1939 = vmatpush2.xpose.msra.mxu0 0.0
    %1940 = vmatprep.subr.mxu0 0.0
    %1941 = vmatpush2.xpose.msra.mxu0 0.0
    %1942 = vmatprep.subr.mxu0 0.0
    %1943 = vmatpush2.xpose.msra.mxu0 0.0
    %1944 = vmatprep.subr.mxu0 0.0
    %1945 = vmatpush2.xpose.msra.mxu0 0.0
    %1946 = vmatprep.subr.mxu0 0.0
    %1947 = vmatpush2.xpose.msra.mxu0 0.0
    %1948 = vmatprep.subr.mxu0 0.0
    %1949 = vmatpush2.xpose.msra.mxu0 0.0
    %1950 = vmatprep.subr.mxu0 0.0
    %1951 = vmatpush2.xpose.msra.mxu0 0.0
    %1952 = vmatprep.subr.mxu0 0.0
    %1953 = vmatpush2.xpose.msra.mxu0 0.0
    %1954 = vmatprep.subr.mxu0 0.0
    %1955 = vmatpush2.xpose.msra.mxu0 0.0
    %1956 = vmatprep.subr.mxu0 0.0
    %1957 = vmatpush2.xpose.msra.mxu0 0.0
    %1958 = vmatprep.subr.mxu0 0.0
    %1959 = vmatpush2.xpose.msra.mxu0 0.0
    %1960 = vmatprep.subr.mxu0 0.0
    %1961 = vmatpush2.xpose.msra.mxu0 0.0
    %1962 = vmatprep.mubr.f32.mxu0 0.0
    %1963 = vmatmul.mubr.f32.gmra.mxu0 %v1894
    %v1964 = vpop.f32.mrf.mxu0
    %v1965 = vadd.f32 0.0, %v1964
    %v1966 = vpop.f32.mrf.mxu0
    %1967 = vdwg.mxu0
    %v1968 = vsel %vm306, %v1887, -inf
    %1969 = vmax.xlane.f32.xlu0 %v1968
    %v1970 = vpop.xlane.xlu0 %1969
    %v1971 = vsel %vm306, %v1965, -inf
    %1972 = vmax.xlane.f32.xlu0 %v1971
    %v1973 = vpop.xlane.xlu0 %1972
    %v1974 = vsub.f32 %v1887, %v1970
    %v1975 = vsub.f32 %v1965, %v1973
    %v1976 = vmul.f32 %v1974, 1.442695
    %v1977 = vpow.pop %v1976
    %v1978 = vmul.f32 %v1975, 1.442695
    %v1979 = vpow.pop %v1978
    %v1980 = vsel %vm306, %v1977, 0.0
    %1981 = vadd.xlane.f32.xlu0 %v1980
    %v1982 = vpop.xlane.xlu0 %1981
    %v1983 = vsel %vm306, %v1979, 0.0
    %1984 = vadd.xlane.f32.xlu0 %v1983
    %v1985 = vpop.xlane.xlu0 %1984
    %v1986 = vrcp.pop %v1982
    %v1987 = vrcp.pop %v1985
    %1988 = vrot.lane.b32.xlu0 %v139, 48
    %v1989 = vpop.permute.xlu0 %1988
    %v1992 = vsel %vm306, %v1977, 0
    %1994 = vmatprep.subr.mxu0 0.0
    %1995 = vmatpush1.msra.mxu0 0.0
    %1996 = vmatprep.subr.mxu0 0.0
    %1997 = vmatpush1.msra.mxu0 0.0
    %1998 = vmatprep.subr.mxu0 0.0
    %1999 = vmatpush1.msra.mxu0 0.0
    %2000 = vmatprep.subr.mxu0 0.0
    %2001 = vmatpush1.msra.mxu0 0.0
    %2002 = vmatprep.subr.mxu0 0.0
    %2003 = vmatpush1.msra.mxu0 0.0
    %2004 = vmatprep.subr.mxu0 0.0
    %2005 = vmatpush1.msra.mxu0 0.0
    %2006 = vmatprep.subr.mxu0 0.0
    %2007 = vmatpush1.msra.mxu0 0.0
    %2008 = vmatprep.subr.mxu0 0.0
    %2009 = vmatpush1.msra.mxu0 0.0
    %2010 = vmatprep.subr.mxu0 0.0
    %2011 = vmatpush1.msra.mxu0 0.0
    %2012 = vmatprep.subr.mxu0 0.0
    %2013 = vmatpush1.msra.mxu0 0.0
    %2014 = vmatprep.subr.mxu0 0.0
    %2015 = vmatpush1.msra.mxu0 0.0
    %2016 = vmatprep.subr.mxu0 0.0
    %2017 = vmatpush1.msra.mxu0 0.0
    %2018 = vmatprep.subr.mxu0 0.0
    %2019 = vmatpush1.msra.mxu0 0.0
    %2020 = vmatprep.subr.mxu0 0.0
    %2021 = vmatpush1.msra.mxu0 0.0
    %2022 = vmatprep.subr.mxu0 0.0
    %2023 = vmatpush1.msra.mxu0 0.0
    %2024 = vmatprep.subr.mxu0 0.0
    %2025 = vmatpush1.msra.mxu0 %v1989
    %2026 = vmatprep.subr.mxu0 0.0
    %2027 = vmatpush2.msra.mxu0 0.0
    %2028 = vmatprep.subr.mxu0 0.0
    %2029 = vmatpush2.msra.mxu0 0.0
    %2030 = vmatprep.subr.mxu0 0.0
    %2031 = vmatpush2.msra.mxu0 0.0
    %2032 = vmatprep.subr.mxu0 0.0
    %2033 = vmatpush2.msra.mxu0 0.0
    %2034 = vmatprep.subr.mxu0 0.0
    %2035 = vmatpush2.msra.mxu0 0.0
    %2036 = vmatprep.subr.mxu0 0.0
    %2037 = vmatpush2.msra.mxu0 0.0
    %2038 = vmatprep.subr.mxu0 0.0
    %2039 = vmatpush2.msra.mxu0 0.0
    %2040 = vmatprep.subr.mxu0 0.0
    %2041 = vmatpush2.msra.mxu0 0.0
    %2042 = vmatprep.subr.mxu0 0.0
    %2043 = vmatpush2.msra.mxu0 0.0
    %2044 = vmatprep.subr.mxu0 0.0
    %2045 = vmatpush2.msra.mxu0 0.0
    %2046 = vmatprep.subr.mxu0 0.0
    %2047 = vmatpush2.msra.mxu0 0.0
    %2048 = vmatprep.subr.mxu0 0.0
    %2049 = vmatpush2.msra.mxu0 0.0
    %2050 = vmatprep.subr.mxu0 0.0
    %2051 = vmatpush2.msra.mxu0 0.0
    %2052 = vmatprep.subr.mxu0 0.0
    %2053 = vmatpush2.msra.mxu0 0.0
    %2054 = vmatprep.subr.mxu0 0.0
    %2055 = vmatpush2.msra.mxu0 0.0
    %2056 = vmatprep.subr.mxu0 0.0
    %2057 = vmatpush2.msra.mxu0 0.0
    %2058 = vmatprep.mubr.f32.mxu0 0.0
    %2059 = vmatmul.mubr.f32.gmra.mxu0 %v1992
    %v2060 = vpop.f32.mrf.mxu0
    %v2061 = vadd.f32 0.0, %v2060
    %v2062 = vpop.f32.mrf.mxu0
    %2063 = vdwg.mxu0
    %2064 = vrot.lane.b32.xlu0 %v144, 48
    %v2065 = vpop.permute.xlu0 %2064
    %v2068 = vsel %vm306, %v1979, 0
    %2070 = vmatprep.subr.mxu0 0.0
    %2071 = vmatpush1.msra.mxu0 0.0
    %2072 = vmatprep.subr.mxu0 0.0
    %2073 = vmatpush1.msra.mxu0 0.0
    %2074 = vmatprep.subr.mxu0 0.0
    %2075 = vmatpush1.msra.mxu0 0.0
    %2076 = vmatprep.subr.mxu0 0.0
    %2077 = vmatpush1.msra.mxu0 0.0
    %2078 = vmatprep.subr.mxu0 0.0
    %2079 = vmatpush1.msra.mxu0 0.0
    %2080 = vmatprep.subr.mxu0 0.0
    %2081 = vmatpush1.msra.mxu0 0.0
    %2082 = vmatprep.subr.mxu0 0.0
    %2083 = vmatpush1.msra.mxu0 0.0
    %2084 = vmatprep.subr.mxu0 0.0
    %2085 = vmatpush1.msra.mxu0 0.0
    %2086 = vmatprep.subr.mxu0 0.0
    %2087 = vmatpush1.msra.mxu0 0.0
    %2088 = vmatprep.subr.mxu0 0.0
    %2089 = vmatpush1.msra.mxu0 0.0
    %2090 = vmatprep.subr.mxu0 0.0
    %2091 = vmatpush1.msra.mxu0 0.0
    %2092 = vmatprep.subr.mxu0 0.0
    %2093 = vmatpush1.msra.mxu0 0.0
    %2094 = vmatprep.subr.mxu0 0.0
    %2095 = vmatpush1.msra.mxu0 0.0
    %2096 = vmatprep.subr.mxu0 0.0
    %2097 = vmatpush1.msra.mxu0 0.0
    %2098 = vmatprep.subr.mxu0 0.0
    %2099 = vmatpush1.msra.mxu0 0.0
    %2100 = vmatprep.subr.mxu0 0.0
    %2101 = vmatpush1.msra.mxu0 %v2065
    %2102 = vmatprep.subr.mxu0 0.0
    %2103 = vmatpush2.msra.mxu0 0.0
    %2104 = vmatprep.subr.mxu0 0.0
    %2105 = vmatpush2.msra.mxu0 0.0
    %2106 = vmatprep.subr.mxu0 0.0
    %2107 = vmatpush2.msra.mxu0 0.0
    %2108 = vmatprep.subr.mxu0 0.0
    %2109 = vmatpush2.msra.mxu0 0.0
    %2110 = vmatprep.subr.mxu0 0.0
    %2111 = vmatpush2.msra.mxu0 0.0
    %2112 = vmatprep.subr.mxu0 0.0
    %2113 = vmatpush2.msra.mxu0 0.0
    %2114 = vmatprep.subr.mxu0 0.0
    %2115 = vmatpush2.msra.mxu0 0.0
    %2116 = vmatprep.subr.mxu0 0.0
    %2117 = vmatpush2.msra.mxu0 0.0
    %2118 = vmatprep.subr.mxu0 0.0
    %2119 = vmatpush2.msra.mxu0 0.0
    %2120 = vmatprep.subr.mxu0 0.0
    %2121 = vmatpush2.msra.mxu0 0.0
    %2122 = vmatprep.subr.mxu0 0.0
    %2123 = vmatpush2.msra.mxu0 0.0
    %2124 = vmatprep.subr.mxu0 0.0
    %2125 = vmatpush2.msra.mxu0 0.0
    %2126 = vmatprep.subr.mxu0 0.0
    %2127 = vmatpush2.msra.mxu0 0.0
    %2128 = vmatprep.subr.mxu0 0.0
    %2129 = vmatpush2.msra.mxu0 0.0
    %2130 = vmatprep.subr.mxu0 0.0
    %2131 = vmatpush2.msra.mxu0 0.0
    %2132 = vmatprep.subr.mxu0 0.0
    %2133 = vmatpush2.msra.mxu0 0.0
    %2134 = vmatprep.mubr.f32.mxu0 0.0
    %2135 = vmatmul.mubr.f32.gmra.mxu0 %v2068
    %v2136 = vpop.f32.mrf.mxu0
    %v2137 = vadd.f32 0.0, %v2136
    %v2138 = vpop.f32.mrf.mxu0
    %2139 = vdwg.mxu0
    %v2140 = vmul.f32 %v2061, %v1986
    %v2141 = vmul.f32 %v2137, %v1987
    %v2143 = vsel %vm154, %v2140, 0
    %v2146 = vsel %vm154, %v2141, 0
    %v2149 = vsel %vm819, %v149, 0
    %2151 = vmatprep.subr.mxu0 0.0
    %2152 = vmatpush1.msra.mxu0 0.0
    %2153 = vmatprep.subr.mxu0 0.0
    %2154 = vmatpush1.msra.mxu0 0.0
    %2155 = vmatprep.subr.mxu0 0.0
    %2156 = vmatpush1.msra.mxu0 0.0
    %2157 = vmatprep.subr.mxu0 0.0
    %2158 = vmatpush1.msra.mxu0 0.0
    %2159 = vmatprep.subr.mxu0 0.0
    %2160 = vmatpush1.msra.mxu0 0.0
    %2161 = vmatprep.subr.mxu0 0.0
    %2162 = vmatpush1.msra.mxu0 0.0
    %2163 = vmatprep.subr.mxu0 0.0
    %2164 = vmatpush1.msra.mxu0 0.0
    %2165 = vmatprep.subr.mxu0 0.0
    %2166 = vmatpush1.msra.mxu0 0.0
    %2167 = vmatprep.subr.mxu0 0.0
    %2168 = vmatpush1.msra.mxu0 0.0
    %2169 = vmatprep.subr.mxu0 0.0
    %2170 = vmatpush1.msra.mxu0 0.0
    %2171 = vmatprep.subr.mxu0 0.0
    %2172 = vmatpush1.msra.mxu0 0.0
    %2173 = vmatprep.subr.mxu0 0.0
    %2174 = vmatpush1.msra.mxu0 0.0
    %2175 = vmatprep.subr.mxu0 0.0
    %2176 = vmatpush1.msra.mxu0 0.0
    %2177 = vmatprep.subr.mxu0 0.0
    %2178 = vmatpush1.msra.mxu0 0.0
    %2179 = vmatprep.subr.mxu0 0.0
    %2180 = vmatpush1.msra.mxu0 0.0
    %2181 = vmatprep.subr.mxu0 0.0
    %2182 = vmatpush1.msra.mxu0 %v2149
    %2183 = vmatprep.subr.mxu0 0.0
    %2184 = vmatpush2.msra.mxu0 0.0
    %2185 = vmatprep.subr.mxu0 0.0
    %2186 = vmatpush2.msra.mxu0 0.0
    %2187 = vmatprep.subr.mxu0 0.0
    %2188 = vmatpush2.msra.mxu0 0.0
    %2189 = vmatprep.subr.mxu0 0.0
    %2190 = vmatpush2.msra.mxu0 0.0
    %2191 = vmatprep.subr.mxu0 0.0
    %2192 = vmatpush2.msra.mxu0 0.0
    %2193 = vmatprep.subr.mxu0 0.0
    %2194 = vmatpush2.msra.mxu0 0.0
    %2195 = vmatprep.subr.mxu0 0.0
    %2196 = vmatpush2.msra.mxu0 0.0
    %2197 = vmatprep.subr.mxu0 0.0
    %2198 = vmatpush2.msra.mxu0 0.0
    %2199 = vmatprep.subr.mxu0 0.0
    %2200 = vmatpush2.msra.mxu0 0.0
    %2201 = vmatprep.subr.mxu0 0.0
    %2202 = vmatpush2.msra.mxu0 0.0
    %2203 = vmatprep.subr.mxu0 0.0
    %2204 = vmatpush2.msra.mxu0 0.0
    %2205 = vmatprep.subr.mxu0 0.0
    %2206 = vmatpush2.msra.mxu0 0.0
    %2207 = vmatprep.subr.mxu0 0.0
    %2208 = vmatpush2.msra.mxu0 0.0
    %2209 = vmatprep.subr.mxu0 0.0
    %2210 = vmatpush2.msra.mxu0 0.0
    %2211 = vmatprep.subr.mxu0 0.0
    %2212 = vmatpush2.msra.mxu0 0.0
    %2213 = vmatprep.subr.mxu0 0.0
    %2214 = vmatpush2.msra.mxu0 0.0
    %2215 = vmatprep.mubr.f32.mxu0 0.0
    %2216 = vmatmul.mubr.f32.gmra.mxu0 %v2143
    %v2217 = vpop.f32.mrf.mxu0
    %v2218 = vadd.f32 0.0, %v2217
    %v2219 = vpop.f32.mrf.mxu0
    %2220 = vmatprep.mubr.f32.mxu0 0.0
    %2221 = vmatmul.mubr.f32.gmra.mxu0 %v2146
    %v2222 = vpop.f32.mrf.mxu0
    %v2223 = vadd.f32 0.0, %v2222
    %v2224 = vpop.f32.mrf.mxu0
    %2225 = vdwg.mxu0
    %v2226 = vadd.f32 %v1810, %v2218
    %v2227 = vadd.f32 %v1811, %v2223
    %2228 = vrot.lane.b32.xlu0 %v139, 108
    %v2229 = vpop.permute.xlu0 %2228
    %2230 = vrot.lane.b32.xlu0 %v139, 76
    %v2231 = vpop.permute.xlu0 %2230
    %v2232 = vsel %vm154, %v2229, 0
    %v2234 = vsel %vm154, %v2231, 0
    %2236 = vmatprep.subr.mxu0 0.0
    %2237 = vmatpush1.xpose.msra.mxu0 0.0
    %2238 = vmatprep.subr.mxu0 0.0
    %2239 = vmatpush1.xpose.msra.mxu0 0.0
    %2240 = vmatprep.subr.mxu0 0.0
    %2241 = vmatpush1.xpose.msra.mxu0 0.0
    %2242 = vmatprep.subr.mxu0 0.0
    %2243 = vmatpush1.xpose.msra.mxu0 0.0
    %2244 = vmatprep.subr.mxu0 0.0
    %2245 = vmatpush1.xpose.msra.mxu0 0.0
    %2246 = vmatprep.subr.mxu0 0.0
    %2247 = vmatpush1.xpose.msra.mxu0 0.0
    %2248 = vmatprep.subr.mxu0 0.0
    %2249 = vmatpush1.xpose.msra.mxu0 0.0
    %2250 = vmatprep.subr.mxu0 0.0
    %2251 = vmatpush1.xpose.msra.mxu0 0.0
    %2252 = vmatprep.subr.mxu0 0.0
    %2253 = vmatpush1.xpose.msra.mxu0 0.0
    %2254 = vmatprep.subr.mxu0 0.0
    %2255 = vmatpush1.xpose.msra.mxu0 0.0
    %2256 = vmatprep.subr.mxu0 0.0
    %2257 = vmatpush1.xpose.msra.mxu0 0.0
    %2258 = vmatprep.subr.mxu0 0.0
    %2259 = vmatpush1.xpose.msra.mxu0 0.0
    %2260 = vmatprep.subr.mxu0 0.0
    %2261 = vmatpush1.xpose.msra.mxu0 0.0
    %2262 = vmatprep.subr.mxu0 0.0
    %2263 = vmatpush1.xpose.msra.mxu0 0.0
    %2264 = vmatprep.subr.mxu0 0.0
    %2265 = vmatpush1.xpose.msra.mxu0 0.0
    %2266 = vmatprep.subr.mxu0 0.0
    %2267 = vmatpush1.xpose.msra.mxu0 %v2234
    %2268 = vmatprep.subr.mxu0 0.0
    %2269 = vmatpush2.xpose.msra.mxu0 0.0
    %2270 = vmatprep.subr.mxu0 0.0
    %2271 = vmatpush2.xpose.msra.mxu0 0.0
    %2272 = vmatprep.subr.mxu0 0.0
    %2273 = vmatpush2.xpose.msra.mxu0 0.0
    %2274 = vmatprep.subr.mxu0 0.0
    %2275 = vmatpush2.xpose.msra.mxu0 0.0
    %2276 = vmatprep.subr.mxu0 0.0
    %2277 = vmatpush2.xpose.msra.mxu0 0.0
    %2278 = vmatprep.subr.mxu0 0.0
    %2279 = vmatpush2.xpose.msra.mxu0 0.0
    %2280 = vmatprep.subr.mxu0 0.0
    %2281 = vmatpush2.xpose.msra.mxu0 0.0
    %2282 = vmatprep.subr.mxu0 0.0
    %2283 = vmatpush2.xpose.msra.mxu0 0.0
    %2284 = vmatprep.subr.mxu0 0.0
    %2285 = vmatpush2.xpose.msra.mxu0 0.0
    %2286 = vmatprep.subr.mxu0 0.0
    %2287 = vmatpush2.xpose.msra.mxu0 0.0
    %2288 = vmatprep.subr.mxu0 0.0
    %2289 = vmatpush2.xpose.msra.mxu0 0.0
    %2290 = vmatprep.subr.mxu0 0.0
    %2291 = vmatpush2.xpose.msra.mxu0 0.0
    %2292 = vmatprep.subr.mxu0 0.0
    %2293 = vmatpush2.xpose.msra.mxu0 0.0
    %2294 = vmatprep.subr.mxu0 0.0
    %2295 = vmatpush2.xpose.msra.mxu0 0.0
    %2296 = vmatprep.subr.mxu0 0.0
    %2297 = vmatpush2.xpose.msra.mxu0 0.0
    %2298 = vmatprep.subr.mxu0 0.0
    %2299 = vmatpush2.xpose.msra.mxu0 0.0
    %2300 = vmatprep.mubr.f32.mxu0 0.0
    %2301 = vmatmul.mubr.f32.gmra.mxu0 %v2232
    %v2302 = vpop.f32.mrf.mxu0
    %v2303 = vadd.f32 0.0, %v2302
    %v2304 = vpop.f32.mrf.mxu0
    %2305 = vdwg.mxu0
    %2306 = vrot.lane.b32.xlu0 %v144, 108
    %v2307 = vpop.permute.xlu0 %2306
    %2308 = vrot.lane.b32.xlu0 %v144, 76
    %v2309 = vpop.permute.xlu0 %2308
    %v2310 = vsel %vm154, %v2307, 0
    %v2312 = vsel %vm154, %v2309, 0
    %2314 = vmatprep.subr.mxu0 0.0
    %2315 = vmatpush1.xpose.msra.mxu0 0.0
    %2316 = vmatprep.subr.mxu0 0.0
    %2317 = vmatpush1.xpose.msra.mxu0 0.0
    %2318 = vmatprep.subr.mxu0 0.0
    %2319 = vmatpush1.xpose.msra.mxu0 0.0
    %2320 = vmatprep.subr.mxu0 0.0
    %2321 = vmatpush1.xpose.msra.mxu0 0.0
    %2322 = vmatprep.subr.mxu0 0.0
    %2323 = vmatpush1.xpose.msra.mxu0 0.0
    %2324 = vmatprep.subr.mxu0 0.0
    %2325 = vmatpush1.xpose.msra.mxu0 0.0
    %2326 = vmatprep.subr.mxu0 0.0
    %2327 = vmatpush1.xpose.msra.mxu0 0.0
    %2328 = vmatprep.subr.mxu0 0.0
    %2329 = vmatpush1.xpose.msra.mxu0 0.0
    %2330 = vmatprep.subr.mxu0 0.0
    %2331 = vmatpush1.xpose.msra.mxu0 0.0
    %2332 = vmatprep.subr.mxu0 0.0
    %2333 = vmatpush1.xpose.msra.mxu0 0.0
    %2334 = vmatprep.subr.mxu0 0.0
    %2335 = vmatpush1.xpose.msra.mxu0 0.0
    %2336 = vmatprep.subr.mxu0 0.0
    %2337 = vmatpush1.xpose.msra.mxu0 0.0
    %2338 = vmatprep.subr.mxu0 0.0
    %2339 = vmatpush1.xpose.msra.mxu0 0.0
    %2340 = vmatprep.subr.mxu0 0.0
    %2341 = vmatpush1.xpose.msra.mxu0 0.0
    %2342 = vmatprep.subr.mxu0 0.0
    %2343 = vmatpush1.xpose.msra.mxu0 0.0
    %2344 = vmatprep.subr.mxu0 0.0
    %2345 = vmatpush1.xpose.msra.mxu0 %v2312
    %2346 = vmatprep.subr.mxu0 0.0
    %2347 = vmatpush2.xpose.msra.mxu0 0.0
    %2348 = vmatprep.subr.mxu0 0.0
    %2349 = vmatpush2.xpose.msra.mxu0 0.0
    %2350 = vmatprep.subr.mxu0 0.0
    %2351 = vmatpush2.xpose.msra.mxu0 0.0
    %2352 = vmatprep.subr.mxu0 0.0
    %2353 = vmatpush2.xpose.msra.mxu0 0.0
    %2354 = vmatprep.subr.mxu0 0.0
    %2355 = vmatpush2.xpose.msra.mxu0 0.0
    %2356 = vmatprep.subr.mxu0 0.0
    %2357 = vmatpush2.xpose.msra.mxu0 0.0
    %2358 = vmatprep.subr.mxu0 0.0
    %2359 = vmatpush2.xpose.msra.mxu0 0.0
    %2360 = vmatprep.subr.mxu0 0.0
    %2361 = vmatpush2.xpose.msra.mxu0 0.0
    %2362 = vmatprep.subr.mxu0 0.0
    %2363 = vmatpush2.xpose.msra.mxu0 0.0
    %2364 = vmatprep.subr.mxu0 0.0
    %2365 = vmatpush2.xpose.msra.mxu0 0.0
    %2366 = vmatprep.subr.mxu0 0.0
    %2367 = vmatpush2.xpose.msra.mxu0 0.0
    %2368 = vmatprep.subr.mxu0 0.0
    %2369 = vmatpush2.xpose.msra.mxu0 0.0
    %2370 = vmatprep.subr.mxu0 0.0
    %2371 = vmatpush2.xpose.msra.mxu0 0.0
    %2372 = vmatprep.subr.mxu0 0.0
    %2373 = vmatpush2.xpose.msra.mxu0 0.0
    %2374 = vmatprep.subr.mxu0 0.0
    %2375 = vmatpush2.xpose.msra.mxu0 0.0
    %2376 = vmatprep.subr.mxu0 0.0
    %2377 = vmatpush2.xpose.msra.mxu0 0.0
    %2378 = vmatprep.mubr.f32.mxu0 0.0
    %2379 = vmatmul.mubr.f32.gmra.mxu0 %v2310
    %v2380 = vpop.f32.mrf.mxu0
    %v2381 = vadd.f32 0.0, %v2380
    %v2382 = vpop.f32.mrf.mxu0
    %2383 = vdwg.mxu0
    %v2384 = vsel %vm306, %v2303, -inf
    %2385 = vmax.xlane.f32.xlu0 %v2384
    %v2386 = vpop.xlane.xlu0 %2385
    %v2387 = vsel %vm306, %v2381, -inf
    %2388 = vmax.xlane.f32.xlu0 %v2387
    %v2389 = vpop.xlane.xlu0 %2388
    %v2390 = vsub.f32 %v2303, %v2386
    %v2391 = vsub.f32 %v2381, %v2389
    %v2392 = vmul.f32 %v2390, 1.442695
    %v2393 = vpow.pop %v2392
    %v2394 = vmul.f32 %v2391, 1.442695
    %v2395 = vpow.pop %v2394
    %v2396 = vsel %vm306, %v2393, 0.0
    %2397 = vadd.xlane.f32.xlu0 %v2396
    %v2398 = vpop.xlane.xlu0 %2397
    %v2399 = vsel %vm306, %v2395, 0.0
    %2400 = vadd.xlane.f32.xlu0 %v2399
    %v2401 = vpop.xlane.xlu0 %2400
    %v2402 = vrcp.pop %v2398
    %v2403 = vrcp.pop %v2401
    %2404 = vrot.lane.b32.xlu0 %v139, 44
    %v2405 = vpop.permute.xlu0 %2404
    %v2408 = vsel %vm306, %v2393, 0
    %2410 = vmatprep.subr.mxu0 0.0
    %2411 = vmatpush1.msra.mxu0 0.0
    %2412 = vmatprep.subr.mxu0 0.0
    %2413 = vmatpush1.msra.mxu0 0.0
    %2414 = vmatprep.subr.mxu0 0.0
    %2415 = vmatpush1.msra.mxu0 0.0
    %2416 = vmatprep.subr.mxu0 0.0
    %2417 = vmatpush1.msra.mxu0 0.0
    %2418 = vmatprep.subr.mxu0 0.0
    %2419 = vmatpush1.msra.mxu0 0.0
    %2420 = vmatprep.subr.mxu0 0.0
    %2421 = vmatpush1.msra.mxu0 0.0
    %2422 = vmatprep.subr.mxu0 0.0
    %2423 = vmatpush1.msra.mxu0 0.0
    %2424 = vmatprep.subr.mxu0 0.0
    %2425 = vmatpush1.msra.mxu0 0.0
    %2426 = vmatprep.subr.mxu0 0.0
    %2427 = vmatpush1.msra.mxu0 0.0
    %2428 = vmatprep.subr.mxu0 0.0
    %2429 = vmatpush1.msra.mxu0 0.0
    %2430 = vmatprep.subr.mxu0 0.0
    %2431 = vmatpush1.msra.mxu0 0.0
    %2432 = vmatprep.subr.mxu0 0.0
    %2433 = vmatpush1.msra.mxu0 0.0
    %2434 = vmatprep.subr.mxu0 0.0
    %2435 = vmatpush1.msra.mxu0 0.0
    %2436 = vmatprep.subr.mxu0 0.0
    %2437 = vmatpush1.msra.mxu0 0.0
    %2438 = vmatprep.subr.mxu0 0.0
    %2439 = vmatpush1.msra.mxu0 0.0
    %2440 = vmatprep.subr.mxu0 0.0
    %2441 = vmatpush1.msra.mxu0 %v2405
    %2442 = vmatprep.subr.mxu0 0.0
    %2443 = vmatpush2.msra.mxu0 0.0
    %2444 = vmatprep.subr.mxu0 0.0
    %2445 = vmatpush2.msra.mxu0 0.0
    %2446 = vmatprep.subr.mxu0 0.0
    %2447 = vmatpush2.msra.mxu0 0.0
    %2448 = vmatprep.subr.mxu0 0.0
    %2449 = vmatpush2.msra.mxu0 0.0
    %2450 = vmatprep.subr.mxu0 0.0
    %2451 = vmatpush2.msra.mxu0 0.0
    %2452 = vmatprep.subr.mxu0 0.0
    %2453 = vmatpush2.msra.mxu0 0.0
    %2454 = vmatprep.subr.mxu0 0.0
    %2455 = vmatpush2.msra.mxu0 0.0
    %2456 = vmatprep.subr.mxu0 0.0
    %2457 = vmatpush2.msra.mxu0 0.0
    %2458 = vmatprep.subr.mxu0 0.0
    %2459 = vmatpush2.msra.mxu0 0.0
    %2460 = vmatprep.subr.mxu0 0.0
    %2461 = vmatpush2.msra.mxu0 0.0
    %2462 = vmatprep.subr.mxu0 0.0
    %2463 = vmatpush2.msra.mxu0 0.0
    %2464 = vmatprep.subr.mxu0 0.0
    %2465 = vmatpush2.msra.mxu0 0.0
    %2466 = vmatprep.subr.mxu0 0.0
    %2467 = vmatpush2.msra.mxu0 0.0
    %2468 = vmatprep.subr.mxu0 0.0
    %2469 = vmatpush2.msra.mxu0 0.0
    %2470 = vmatprep.subr.mxu0 0.0
    %2471 = vmatpush2.msra.mxu0 0.0
    %2472 = vmatprep.subr.mxu0 0.0
    %2473 = vmatpush2.msra.mxu0 0.0
    %2474 = vmatprep.mubr.f32.mxu0 0.0
    %2475 = vmatmul.mubr.f32.gmra.mxu0 %v2408
    %v2476 = vpop.f32.mrf.mxu0
    %v2477 = vadd.f32 0.0, %v2476
    %v2478 = vpop.f32.mrf.mxu0
    %2479 = vdwg.mxu0
    %2480 = vrot.lane.b32.xlu0 %v144, 44
    %v2481 = vpop.permute.xlu0 %2480
    %v2484 = vsel %vm306, %v2395, 0
    %2486 = vmatprep.subr.mxu0 0.0
    %2487 = vmatpush1.msra.mxu0 0.0
    %2488 = vmatprep.subr.mxu0 0.0
    %2489 = vmatpush1.msra.mxu0 0.0
    %2490 = vmatprep.subr.mxu0 0.0
    %2491 = vmatpush1.msra.mxu0 0.0
    %2492 = vmatprep.subr.mxu0 0.0
    %2493 = vmatpush1.msra.mxu0 0.0
    %2494 = vmatprep.subr.mxu0 0.0
    %2495 = vmatpush1.msra.mxu0 0.0
    %2496 = vmatprep.subr.mxu0 0.0
    %2497 = vmatpush1.msra.mxu0 0.0
    %2498 = vmatprep.subr.mxu0 0.0
    %2499 = vmatpush1.msra.mxu0 0.0
    %2500 = vmatprep.subr.mxu0 0.0
    %2501 = vmatpush1.msra.mxu0 0.0
    %2502 = vmatprep.subr.mxu0 0.0
    %2503 = vmatpush1.msra.mxu0 0.0
    %2504 = vmatprep.subr.mxu0 0.0
    %2505 = vmatpush1.msra.mxu0 0.0
    %2506 = vmatprep.subr.mxu0 0.0
    %2507 = vmatpush1.msra.mxu0 0.0
    %2508 = vmatprep.subr.mxu0 0.0
    %2509 = vmatpush1.msra.mxu0 0.0
    %2510 = vmatprep.subr.mxu0 0.0
    %2511 = vmatpush1.msra.mxu0 0.0
    %2512 = vmatprep.subr.mxu0 0.0
    %2513 = vmatpush1.msra.mxu0 0.0
    %2514 = vmatprep.subr.mxu0 0.0
    %2515 = vmatpush1.msra.mxu0 0.0
    %2516 = vmatprep.subr.mxu0 0.0
    %2517 = vmatpush1.msra.mxu0 %v2481
    %2518 = vmatprep.subr.mxu0 0.0
    %2519 = vmatpush2.msra.mxu0 0.0
    %2520 = vmatprep.subr.mxu0 0.0
    %2521 = vmatpush2.msra.mxu0 0.0
    %2522 = vmatprep.subr.mxu0 0.0
    %2523 = vmatpush2.msra.mxu0 0.0
    %2524 = vmatprep.subr.mxu0 0.0
    %2525 = vmatpush2.msra.mxu0 0.0
    %2526 = vmatprep.subr.mxu0 0.0
    %2527 = vmatpush2.msra.mxu0 0.0
    %2528 = vmatprep.subr.mxu0 0.0
    %2529 = vmatpush2.msra.mxu0 0.0
    %2530 = vmatprep.subr.mxu0 0.0
    %2531 = vmatpush2.msra.mxu0 0.0
    %2532 = vmatprep.subr.mxu0 0.0
    %2533 = vmatpush2.msra.mxu0 0.0
    %2534 = vmatprep.subr.mxu0 0.0
    %2535 = vmatpush2.msra.mxu0 0.0
    %2536 = vmatprep.subr.mxu0 0.0
    %2537 = vmatpush2.msra.mxu0 0.0
    %2538 = vmatprep.subr.mxu0 0.0
    %2539 = vmatpush2.msra.mxu0 0.0
    %2540 = vmatprep.subr.mxu0 0.0
    %2541 = vmatpush2.msra.mxu0 0.0
    %2542 = vmatprep.subr.mxu0 0.0
    %2543 = vmatpush2.msra.mxu0 0.0
    %2544 = vmatprep.subr.mxu0 0.0
    %2545 = vmatpush2.msra.mxu0 0.0
    %2546 = vmatprep.subr.mxu0 0.0
    %2547 = vmatpush2.msra.mxu0 0.0
    %2548 = vmatprep.subr.mxu0 0.0
    %2549 = vmatpush2.msra.mxu0 0.0
    %2550 = vmatprep.mubr.f32.mxu0 0.0
    %2551 = vmatmul.mubr.f32.gmra.mxu0 %v2484
    %v2552 = vpop.f32.mrf.mxu0
    %v2553 = vadd.f32 0.0, %v2552
    %v2554 = vpop.f32.mrf.mxu0
    %2555 = vdwg.mxu0
    %v2556 = vmul.f32 %v2477, %v2402
    %v2557 = vmul.f32 %v2553, %v2403
    %v2558 = vrot.slane %v149, 4
    %v2560 = vsel %vm154, %v2556, 0
    %v2563 = vsel %vm154, %v2557, 0
    %v2565 = vsel %vm819, %v2558, 0
    %2567 = vmatprep.subr.mxu0 0.0
    %2568 = vmatpush1.msra.mxu0 0.0
    %2569 = vmatprep.subr.mxu0 0.0
    %2570 = vmatpush1.msra.mxu0 0.0
    %2571 = vmatprep.subr.mxu0 0.0
    %2572 = vmatpush1.msra.mxu0 0.0
    %2573 = vmatprep.subr.mxu0 0.0
    %2574 = vmatpush1.msra.mxu0 0.0
    %2575 = vmatprep.subr.mxu0 0.0
    %2576 = vmatpush1.msra.mxu0 0.0
    %2577 = vmatprep.subr.mxu0 0.0
    %2578 = vmatpush1.msra.mxu0 0.0
    %2579 = vmatprep.subr.mxu0 0.0
    %2580 = vmatpush1.msra.mxu0 0.0
    %2581 = vmatprep.subr.mxu0 0.0
    %2582 = vmatpush1.msra.mxu0 0.0
    %2583 = vmatprep.subr.mxu0 0.0
    %2584 = vmatpush1.msra.mxu0 0.0
    %2585 = vmatprep.subr.mxu0 0.0
    %2586 = vmatpush1.msra.mxu0 0.0
    %2587 = vmatprep.subr.mxu0 0.0
    %2588 = vmatpush1.msra.mxu0 0.0
    %2589 = vmatprep.subr.mxu0 0.0
    %2590 = vmatpush1.msra.mxu0 0.0
    %2591 = vmatprep.subr.mxu0 0.0
    %2592 = vmatpush1.msra.mxu0 0.0
    %2593 = vmatprep.subr.mxu0 0.0
    %2594 = vmatpush1.msra.mxu0 0.0
    %2595 = vmatprep.subr.mxu0 0.0
    %2596 = vmatpush1.msra.mxu0 0.0
    %2597 = vmatprep.subr.mxu0 0.0
    %2598 = vmatpush1.msra.mxu0 %v2565
    %2599 = vmatprep.subr.mxu0 0.0
    %2600 = vmatpush2.msra.mxu0 0.0
    %2601 = vmatprep.subr.mxu0 0.0
    %2602 = vmatpush2.msra.mxu0 0.0
    %2603 = vmatprep.subr.mxu0 0.0
    %2604 = vmatpush2.msra.mxu0 0.0
    %2605 = vmatprep.subr.mxu0 0.0
    %2606 = vmatpush2.msra.mxu0 0.0
    %2607 = vmatprep.subr.mxu0 0.0
    %2608 = vmatpush2.msra.mxu0 0.0
    %2609 = vmatprep.subr.mxu0 0.0
    %2610 = vmatpush2.msra.mxu0 0.0
    %2611 = vmatprep.subr.mxu0 0.0
    %2612 = vmatpush2.msra.mxu0 0.0
    %2613 = vmatprep.subr.mxu0 0.0
    %2614 = vmatpush2.msra.mxu0 0.0
    %2615 = vmatprep.subr.mxu0 0.0
    %2616 = vmatpush2.msra.mxu0 0.0
    %2617 = vmatprep.subr.mxu0 0.0
    %2618 = vmatpush2.msra.mxu0 0.0
    %2619 = vmatprep.subr.mxu0 0.0
    %2620 = vmatpush2.msra.mxu0 0.0
    %2621 = vmatprep.subr.mxu0 0.0
    %2622 = vmatpush2.msra.mxu0 0.0
    %2623 = vmatprep.subr.mxu0 0.0
    %2624 = vmatpush2.msra.mxu0 0.0
    %2625 = vmatprep.subr.mxu0 0.0
    %2626 = vmatpush2.msra.mxu0 0.0
    %2627 = vmatprep.subr.mxu0 0.0
    %2628 = vmatpush2.msra.mxu0 0.0
    %2629 = vmatprep.subr.mxu0 0.0
    %2630 = vmatpush2.msra.mxu0 0.0
    %2631 = vmatprep.mubr.f32.mxu0 0.0
    %2632 = vmatmul.mubr.f32.gmra.mxu0 %v2560
    %v2633 = vpop.f32.mrf.mxu0
    %v2634 = vadd.f32 0.0, %v2633
    %v2635 = vpop.f32.mrf.mxu0
    %2636 = vmatprep.mubr.f32.mxu0 0.0
    %2637 = vmatmul.mubr.f32.gmra.mxu0 %v2563
    %v2638 = vpop.f32.mrf.mxu0
    %v2639 = vadd.f32 0.0, %v2638
    %v2640 = vpop.f32.mrf.mxu0
    %2641 = vdwg.mxu0
    %v2642 = vadd.f32 %v2226, %v2634
    %v2643 = vadd.f32 %v2227, %v2639
    %2644 = vrot.lane.b32.xlu0 %v139, 104
    %v2645 = vpop.permute.xlu0 %2644
    %2646 = vrot.lane.b32.xlu0 %v139, 72
    %v2647 = vpop.permute.xlu0 %2646
    %v2648 = vsel %vm154, %v2645, 0
    %v2650 = vsel %vm154, %v2647, 0
    %2652 = vmatprep.subr.mxu0 0.0
    %2653 = vmatpush1.xpose.msra.mxu0 0.0
    %2654 = vmatprep.subr.mxu0 0.0
    %2655 = vmatpush1.xpose.msra.mxu0 0.0
    %2656 = vmatprep.subr.mxu0 0.0
    %2657 = vmatpush1.xpose.msra.mxu0 0.0
    %2658 = vmatprep.subr.mxu0 0.0
    %2659 = vmatpush1.xpose.msra.mxu0 0.0
    %2660 = vmatprep.subr.mxu0 0.0
    %2661 = vmatpush1.xpose.msra.mxu0 0.0
    %2662 = vmatprep.subr.mxu0 0.0
    %2663 = vmatpush1.xpose.msra.mxu0 0.0
    %2664 = vmatprep.subr.mxu0 0.0
    %2665 = vmatpush1.xpose.msra.mxu0 0.0
    %2666 = vmatprep.subr.mxu0 0.0
    %2667 = vmatpush1.xpose.msra.mxu0 0.0
    %2668 = vmatprep.subr.mxu0 0.0
    %2669 = vmatpush1.xpose.msra.mxu0 0.0
    %2670 = vmatprep.subr.mxu0 0.0
    %2671 = vmatpush1.xpose.msra.mxu0 0.0
    %2672 = vmatprep.subr.mxu0 0.0
    %2673 = vmatpush1.xpose.msra.mxu0 0.0
    %2674 = vmatprep.subr.mxu0 0.0
    %2675 = vmatpush1.xpose.msra.mxu0 0.0
    %2676 = vmatprep.subr.mxu0 0.0
    %2677 = vmatpush1.xpose.msra.mxu0 0.0
    %2678 = vmatprep.subr.mxu0 0.0
    %2679 = vmatpush1.xpose.msra.mxu0 0.0
    %2680 = vmatprep.subr.mxu0 0.0
    %2681 = vmatpush1.xpose.msra.mxu0 0.0
    %2682 = vmatprep.subr.mxu0 0.0
    %2683 = vmatpush1.xpose.msra.mxu0 %v2650
    %2684 = vmatprep.subr.mxu0 0.0
    %2685 = vmatpush2.xpose.msra.mxu0 0.0
    %2686 = vmatprep.subr.mxu0 0.0
    %2687 = vmatpush2.xpose.msra.mxu0 0.0
    %2688 = vmatprep.subr.mxu0 0.0
    %2689 = vmatpush2.xpose.msra.mxu0 0.0
    %2690 = vmatprep.subr.mxu0 0.0
    %2691 = vmatpush2.xpose.msra.mxu0 0.0
    %2692 = vmatprep.subr.mxu0 0.0
    %2693 = vmatpush2.xpose.msra.mxu0 0.0
    %2694 = vmatprep.subr.mxu0 0.0
    %2695 = vmatpush2.xpose.msra.mxu0 0.0
    %2696 = vmatprep.subr.mxu0 0.0
    %2697 = vmatpush2.xpose.msra.mxu0 0.0
    %2698 = vmatprep.subr.mxu0 0.0
    %2699 = vmatpush2.xpose.msra.mxu0 0.0
    %2700 = vmatprep.subr.mxu0 0.0
    %2701 = vmatpush2.xpose.msra.mxu0 0.0
    %2702 = vmatprep.subr.mxu0 0.0
    %2703 = vmatpush2.xpose.msra.mxu0 0.0
    %2704 = vmatprep.subr.mxu0 0.0
    %2705 = vmatpush2.xpose.msra.mxu0 0.0
    %2706 = vmatprep.subr.mxu0 0.0
    %2707 = vmatpush2.xpose.msra.mxu0 0.0
    %2708 = vmatprep.subr.mxu0 0.0
    %2709 = vmatpush2.xpose.msra.mxu0 0.0
    %2710 = vmatprep.subr.mxu0 0.0
    %2711 = vmatpush2.xpose.msra.mxu0 0.0
    %2712 = vmatprep.subr.mxu0 0.0
    %2713 = vmatpush2.xpose.msra.mxu0 0.0
    %2714 = vmatprep.subr.mxu0 0.0
    %2715 = vmatpush2.xpose.msra.mxu0 0.0
    %2716 = vmatprep.mubr.f32.mxu0 0.0
    %2717 = vmatmul.mubr.f32.gmra.mxu0 %v2648
    %v2718 = vpop.f32.mrf.mxu0
    %v2719 = vadd.f32 0.0, %v2718
    %v2720 = vpop.f32.mrf.mxu0
    %2721 = vdwg.mxu0
    %2722 = vrot.lane.b32.xlu0 %v144, 104
    %v2723 = vpop.permute.xlu0 %2722
    %2724 = vrot.lane.b32.xlu0 %v144, 72
    %v2725 = vpop.permute.xlu0 %2724
    %v2726 = vsel %vm154, %v2723, 0
    %v2728 = vsel %vm154, %v2725, 0
    %2730 = vmatprep.subr.mxu0 0.0
    %2731 = vmatpush1.xpose.msra.mxu0 0.0
    %2732 = vmatprep.subr.mxu0 0.0
    %2733 = vmatpush1.xpose.msra.mxu0 0.0
    %2734 = vmatprep.subr.mxu0 0.0
    %2735 = vmatpush1.xpose.msra.mxu0 0.0
    %2736 = vmatprep.subr.mxu0 0.0
    %2737 = vmatpush1.xpose.msra.mxu0 0.0
    %2738 = vmatprep.subr.mxu0 0.0
    %2739 = vmatpush1.xpose.msra.mxu0 0.0
    %2740 = vmatprep.subr.mxu0 0.0
    %2741 = vmatpush1.xpose.msra.mxu0 0.0
    %2742 = vmatprep.subr.mxu0 0.0
    %2743 = vmatpush1.xpose.msra.mxu0 0.0
    %2744 = vmatprep.subr.mxu0 0.0
    %2745 = vmatpush1.xpose.msra.mxu0 0.0
    %2746 = vmatprep.subr.mxu0 0.0
    %2747 = vmatpush1.xpose.msra.mxu0 0.0
    %2748 = vmatprep.subr.mxu0 0.0
    %2749 = vmatpush1.xpose.msra.mxu0 0.0
    %2750 = vmatprep.subr.mxu0 0.0
    %2751 = vmatpush1.xpose.msra.mxu0 0.0
    %2752 = vmatprep.subr.mxu0 0.0
    %2753 = vmatpush1.xpose.msra.mxu0 0.0
    %2754 = vmatprep.subr.mxu0 0.0
    %2755 = vmatpush1.xpose.msra.mxu0 0.0
    %2756 = vmatprep.subr.mxu0 0.0
    %2757 = vmatpush1.xpose.msra.mxu0 0.0
    %2758 = vmatprep.subr.mxu0 0.0
    %2759 = vmatpush1.xpose.msra.mxu0 0.0
    %2760 = vmatprep.subr.mxu0 0.0
    %2761 = vmatpush1.xpose.msra.mxu0 %v2728
    %2762 = vmatprep.subr.mxu0 0.0
    %2763 = vmatpush2.xpose.msra.mxu0 0.0
    %2764 = vmatprep.subr.mxu0 0.0
    %2765 = vmatpush2.xpose.msra.mxu0 0.0
    %2766 = vmatprep.subr.mxu0 0.0
    %2767 = vmatpush2.xpose.msra.mxu0 0.0
    %2768 = vmatprep.subr.mxu0 0.0
    %2769 = vmatpush2.xpose.msra.mxu0 0.0
    %2770 = vmatprep.subr.mxu0 0.0
    %2771 = vmatpush2.xpose.msra.mxu0 0.0
    %2772 = vmatprep.subr.mxu0 0.0
    %2773 = vmatpush2.xpose.msra.mxu0 0.0
    %2774 = vmatprep.subr.mxu0 0.0
    %2775 = vmatpush2.xpose.msra.mxu0 0.0
    %2776 = vmatprep.subr.mxu0 0.0
    %2777 = vmatpush2.xpose.msra.mxu0 0.0
    %2778 = vmatprep.subr.mxu0 0.0
    %2779 = vmatpush2.xpose.msra.mxu0 0.0
    %2780 = vmatprep.subr.mxu0 0.0
    %2781 = vmatpush2.xpose.msra.mxu0 0.0
    %2782 = vmatprep.subr.mxu0 0.0
    %2783 = vmatpush2.xpose.msra.mxu0 0.0
    %2784 = vmatprep.subr.mxu0 0.0
    %2785 = vmatpush2.xpose.msra.mxu0 0.0
    %2786 = vmatprep.subr.mxu0 0.0
    %2787 = vmatpush2.xpose.msra.mxu0 0.0
    %2788 = vmatprep.subr.mxu0 0.0
    %2789 = vmatpush2.xpose.msra.mxu0 0.0
    %2790 = vmatprep.subr.mxu0 0.0
    %2791 = vmatpush2.xpose.msra.mxu0 0.0
    %2792 = vmatprep.subr.mxu0 0.0
    %2793 = vmatpush2.xpose.msra.mxu0 0.0
    %2794 = vmatprep.mubr.f32.mxu0 0.0
    %2795 = vmatmul.mubr.f32.gmra.mxu0 %v2726
    %v2796 = vpop.f32.mrf.mxu0
    %v2797 = vadd.f32 0.0, %v2796
    %v2798 = vpop.f32.mrf.mxu0
    %2799 = vdwg.mxu0
    %v2800 = vsel %vm306, %v2719, -inf
    %2801 = vmax.xlane.f32.xlu0 %v2800
    %v2802 = vpop.xlane.xlu0 %2801
    %v2803 = vsel %vm306, %v2797, -inf
    %2804 = vmax.xlane.f32.xlu0 %v2803
    %v2805 = vpop.xlane.xlu0 %2804
    %v2806 = vsub.f32 %v2719, %v2802
    %v2807 = vsub.f32 %v2797, %v2805
    %v2808 = vmul.f32 %v2806, 1.442695
    %v2809 = vpow.pop %v2808
    %v2810 = vmul.f32 %v2807, 1.442695
    %v2811 = vpow.pop %v2810
    %v2812 = vsel %vm306, %v2809, 0.0
    %2813 = vadd.xlane.f32.xlu0 %v2812
    %v2814 = vpop.xlane.xlu0 %2813
    %v2815 = vsel %vm306, %v2811, 0.0
    %2816 = vadd.xlane.f32.xlu0 %v2815
    %v2817 = vpop.xlane.xlu0 %2816
    %v2818 = vrcp.pop %v2814
    %v2819 = vrcp.pop %v2817
    %2820 = vrot.lane.b32.xlu0 %v139, 40
    %v2821 = vpop.permute.xlu0 %2820
    %v2824 = vsel %vm306, %v2809, 0
    %2826 = vmatprep.subr.mxu0 0.0
    %2827 = vmatpush1.msra.mxu0 0.0
    %2828 = vmatprep.subr.mxu0 0.0
    %2829 = vmatpush1.msra.mxu0 0.0
    %2830 = vmatprep.subr.mxu0 0.0
    %2831 = vmatpush1.msra.mxu0 0.0
    %2832 = vmatprep.subr.mxu0 0.0
    %2833 = vmatpush1.msra.mxu0 0.0
    %2834 = vmatprep.subr.mxu0 0.0
    %2835 = vmatpush1.msra.mxu0 0.0
    %2836 = vmatprep.subr.mxu0 0.0
    %2837 = vmatpush1.msra.mxu0 0.0
    %2838 = vmatprep.subr.mxu0 0.0
    %2839 = vmatpush1.msra.mxu0 0.0
    %2840 = vmatprep.subr.mxu0 0.0
    %2841 = vmatpush1.msra.mxu0 0.0
    %2842 = vmatprep.subr.mxu0 0.0
    %2843 = vmatpush1.msra.mxu0 0.0
    %2844 = vmatprep.subr.mxu0 0.0
    %2845 = vmatpush1.msra.mxu0 0.0
    %2846 = vmatprep.subr.mxu0 0.0
    %2847 = vmatpush1.msra.mxu0 0.0
    %2848 = vmatprep.subr.mxu0 0.0
    %2849 = vmatpush1.msra.mxu0 0.0
    %2850 = vmatprep.subr.mxu0 0.0
    %2851 = vmatpush1.msra.mxu0 0.0
    %2852 = vmatprep.subr.mxu0 0.0
    %2853 = vmatpush1.msra.mxu0 0.0
    %2854 = vmatprep.subr.mxu0 0.0
    %2855 = vmatpush1.msra.mxu0 0.0
    %2856 = vmatprep.subr.mxu0 0.0
    %2857 = vmatpush1.msra.mxu0 %v2821
    %2858 = vmatprep.subr.mxu0 0.0
    %2859 = vmatpush2.msra.mxu0 0.0
    %2860 = vmatprep.subr.mxu0 0.0
    %2861 = vmatpush2.msra.mxu0 0.0
    %2862 = vmatprep.subr.mxu0 0.0
    %2863 = vmatpush2.msra.mxu0 0.0
    %2864 = vmatprep.subr.mxu0 0.0
    %2865 = vmatpush2.msra.mxu0 0.0
    %2866 = vmatprep.subr.mxu0 0.0
    %2867 = vmatpush2.msra.mxu0 0.0
    %2868 = vmatprep.subr.mxu0 0.0
    %2869 = vmatpush2.msra.mxu0 0.0
    %2870 = vmatprep.subr.mxu0 0.0
    %2871 = vmatpush2.msra.mxu0 0.0
    %2872 = vmatprep.subr.mxu0 0.0
    %2873 = vmatpush2.msra.mxu0 0.0
    %2874 = vmatprep.subr.mxu0 0.0
    %2875 = vmatpush2.msra.mxu0 0.0
    %2876 = vmatprep.subr.mxu0 0.0
    %2877 = vmatpush2.msra.mxu0 0.0
    %2878 = vmatprep.subr.mxu0 0.0
    %2879 = vmatpush2.msra.mxu0 0.0
    %2880 = vmatprep.subr.mxu0 0.0
    %2881 = vmatpush2.msra.mxu0 0.0
    %2882 = vmatprep.subr.mxu0 0.0
    %2883 = vmatpush2.msra.mxu0 0.0
    %2884 = vmatprep.subr.mxu0 0.0
    %2885 = vmatpush2.msra.mxu0 0.0
    %2886 = vmatprep.subr.mxu0 0.0
    %2887 = vmatpush2.msra.mxu0 0.0
    %2888 = vmatprep.subr.mxu0 0.0
    %2889 = vmatpush2.msra.mxu0 0.0
    %2890 = vmatprep.mubr.f32.mxu0 0.0
    %2891 = vmatmul.mubr.f32.gmra.mxu0 %v2824
    %v2892 = vpop.f32.mrf.mxu0
    %v2893 = vadd.f32 0.0, %v2892
    %v2894 = vpop.f32.mrf.mxu0
    %2895 = vdwg.mxu0
    %2896 = vrot.lane.b32.xlu0 %v144, 40
    %v2897 = vpop.permute.xlu0 %2896
    %v2900 = vsel %vm306, %v2811, 0
    %2902 = vmatprep.subr.mxu0 0.0
    %2903 = vmatpush1.msra.mxu0 0.0
    %2904 = vmatprep.subr.mxu0 0.0
    %2905 = vmatpush1.msra.mxu0 0.0
    %2906 = vmatprep.subr.mxu0 0.0
    %2907 = vmatpush1.msra.mxu0 0.0
    %2908 = vmatprep.subr.mxu0 0.0
    %2909 = vmatpush1.msra.mxu0 0.0
    %2910 = vmatprep.subr.mxu0 0.0
    %2911 = vmatpush1.msra.mxu0 0.0
    %2912 = vmatprep.subr.mxu0 0.0
    %2913 = vmatpush1.msra.mxu0 0.0
    %2914 = vmatprep.subr.mxu0 0.0
    %2915 = vmatpush1.msra.mxu0 0.0
    %2916 = vmatprep.subr.mxu0 0.0
    %2917 = vmatpush1.msra.mxu0 0.0
    %2918 = vmatprep.subr.mxu0 0.0
    %2919 = vmatpush1.msra.mxu0 0.0
    %2920 = vmatprep.subr.mxu0 0.0
    %2921 = vmatpush1.msra.mxu0 0.0
    %2922 = vmatprep.subr.mxu0 0.0
    %2923 = vmatpush1.msra.mxu0 0.0
    %2924 = vmatprep.subr.mxu0 0.0
    %2925 = vmatpush1.msra.mxu0 0.0
    %2926 = vmatprep.subr.mxu0 0.0
    %2927 = vmatpush1.msra.mxu0 0.0
    %2928 = vmatprep.subr.mxu0 0.0
    %2929 = vmatpush1.msra.mxu0 0.0
    %2930 = vmatprep.subr.mxu0 0.0
    %2931 = vmatpush1.msra.mxu0 0.0
    %2932 = vmatprep.subr.mxu0 0.0
    %2933 = vmatpush1.msra.mxu0 %v2897
    %2934 = vmatprep.subr.mxu0 0.0
    %2935 = vmatpush2.msra.mxu0 0.0
    %2936 = vmatprep.subr.mxu0 0.0
    %2937 = vmatpush2.msra.mxu0 0.0
    %2938 = vmatprep.subr.mxu0 0.0
    %2939 = vmatpush2.msra.mxu0 0.0
    %2940 = vmatprep.subr.mxu0 0.0
    %2941 = vmatpush2.msra.mxu0 0.0
    %2942 = vmatprep.subr.mxu0 0.0
    %2943 = vmatpush2.msra.mxu0 0.0
    %2944 = vmatprep.subr.mxu0 0.0
    %2945 = vmatpush2.msra.mxu0 0.0
    %2946 = vmatprep.subr.mxu0 0.0
    %2947 = vmatpush2.msra.mxu0 0.0
    %2948 = vmatprep.subr.mxu0 0.0
    %2949 = vmatpush2.msra.mxu0 0.0
    %2950 = vmatprep.subr.mxu0 0.0
    %2951 = vmatpush2.msra.mxu0 0.0
    %2952 = vmatprep.subr.mxu0 0.0
    %2953 = vmatpush2.msra.mxu0 0.0
    %2954 = vmatprep.subr.mxu0 0.0
    %2955 = vmatpush2.msra.mxu0 0.0
    %2956 = vmatprep.subr.mxu0 0.0
    %2957 = vmatpush2.msra.mxu0 0.0
    %2958 = vmatprep.subr.mxu0 0.0
    %2959 = vmatpush2.msra.mxu0 0.0
    %2960 = vmatprep.subr.mxu0 0.0
    %2961 = vmatpush2.msra.mxu0 0.0
    %2962 = vmatprep.subr.mxu0 0.0
    %2963 = vmatpush2.msra.mxu0 0.0
    %2964 = vmatprep.subr.mxu0 0.0
    %2965 = vmatpush2.msra.mxu0 0.0
    %2966 = vmatprep.mubr.f32.mxu0 0.0
    %2967 = vmatmul.mubr.f32.gmra.mxu0 %v2900
    %v2968 = vpop.f32.mrf.mxu0
    %v2969 = vadd.f32 0.0, %v2968
    %v2970 = vpop.f32.mrf.mxu0
    %2971 = vdwg.mxu0
    %v2972 = vmul.f32 %v2893, %v2818
    %v2973 = vmul.f32 %v2969, %v2819
    %v2975 = vsel %vm154, %v2972, 0
    %v2978 = vsel %vm154, %v2973, 0
    %v2981 = vsel %vm819, %v150, 0
    %2983 = vmatprep.subr.mxu0 0.0
    %2984 = vmatpush1.msra.mxu0 0.0
    %2985 = vmatprep.subr.mxu0 0.0
    %2986 = vmatpush1.msra.mxu0 0.0
    %2987 = vmatprep.subr.mxu0 0.0
    %2988 = vmatpush1.msra.mxu0 0.0
    %2989 = vmatprep.subr.mxu0 0.0
    %2990 = vmatpush1.msra.mxu0 0.0
    %2991 = vmatprep.subr.mxu0 0.0
    %2992 = vmatpush1.msra.mxu0 0.0
    %2993 = vmatprep.subr.mxu0 0.0
    %2994 = vmatpush1.msra.mxu0 0.0
    %2995 = vmatprep.subr.mxu0 0.0
    %2996 = vmatpush1.msra.mxu0 0.0
    %2997 = vmatprep.subr.mxu0 0.0
    %2998 = vmatpush1.msra.mxu0 0.0
    %2999 = vmatprep.subr.mxu0 0.0
    %3000 = vmatpush1.msra.mxu0 0.0
    %3001 = vmatprep.subr.mxu0 0.0
    %3002 = vmatpush1.msra.mxu0 0.0
    %3003 = vmatprep.subr.mxu0 0.0
    %3004 = vmatpush1.msra.mxu0 0.0
    %3005 = vmatprep.subr.mxu0 0.0
    %3006 = vmatpush1.msra.mxu0 0.0
    %3007 = vmatprep.subr.mxu0 0.0
    %3008 = vmatpush1.msra.mxu0 0.0
    %3009 = vmatprep.subr.mxu0 0.0
    %3010 = vmatpush1.msra.mxu0 0.0
    %3011 = vmatprep.subr.mxu0 0.0
    %3012 = vmatpush1.msra.mxu0 0.0
    %3013 = vmatprep.subr.mxu0 0.0
    %3014 = vmatpush1.msra.mxu0 %v2981
    %3015 = vmatprep.subr.mxu0 0.0
    %3016 = vmatpush2.msra.mxu0 0.0
    %3017 = vmatprep.subr.mxu0 0.0
    %3018 = vmatpush2.msra.mxu0 0.0
    %3019 = vmatprep.subr.mxu0 0.0
    %3020 = vmatpush2.msra.mxu0 0.0
    %3021 = vmatprep.subr.mxu0 0.0
    %3022 = vmatpush2.msra.mxu0 0.0
    %3023 = vmatprep.subr.mxu0 0.0
    %3024 = vmatpush2.msra.mxu0 0.0
    %3025 = vmatprep.subr.mxu0 0.0
    %3026 = vmatpush2.msra.mxu0 0.0
    %3027 = vmatprep.subr.mxu0 0.0
    %3028 = vmatpush2.msra.mxu0 0.0
    %3029 = vmatprep.subr.mxu0 0.0
    %3030 = vmatpush2.msra.mxu0 0.0
    %3031 = vmatprep.subr.mxu0 0.0
    %3032 = vmatpush2.msra.mxu0 0.0
    %3033 = vmatprep.subr.mxu0 0.0
    %3034 = vmatpush2.msra.mxu0 0.0
    %3035 = vmatprep.subr.mxu0 0.0
    %3036 = vmatpush2.msra.mxu0 0.0
    %3037 = vmatprep.subr.mxu0 0.0
    %3038 = vmatpush2.msra.mxu0 0.0
    %3039 = vmatprep.subr.mxu0 0.0
    %3040 = vmatpush2.msra.mxu0 0.0
    %3041 = vmatprep.subr.mxu0 0.0
    %3042 = vmatpush2.msra.mxu0 0.0
    %3043 = vmatprep.subr.mxu0 0.0
    %3044 = vmatpush2.msra.mxu0 0.0
    %3045 = vmatprep.subr.mxu0 0.0
    %3046 = vmatpush2.msra.mxu0 0.0
    %3047 = vmatprep.mubr.f32.mxu0 0.0
    %3048 = vmatmul.mubr.f32.gmra.mxu0 %v2975
    %v3049 = vpop.f32.mrf.mxu0
    %v3050 = vadd.f32 0.0, %v3049
    %v3051 = vpop.f32.mrf.mxu0
    %3052 = vmatprep.mubr.f32.mxu0 0.0
    %3053 = vmatmul.mubr.f32.gmra.mxu0 %v2978
    %v3054 = vpop.f32.mrf.mxu0
    %v3055 = vadd.f32 0.0, %v3054
    %v3056 = vpop.f32.mrf.mxu0
    %3057 = vdwg.mxu0
    %v3058 = vadd.f32 %v2642, %v3050
    %v3059 = vadd.f32 %v2643, %v3055
    %3060 = vrot.lane.b32.xlu0 %v139, 100
    %v3061 = vpop.permute.xlu0 %3060
    %3062 = vrot.lane.b32.xlu0 %v139, 68
    %v3063 = vpop.permute.xlu0 %3062
    %v3064 = vsel %vm154, %v3061, 0
    %v3066 = vsel %vm154, %v3063, 0
    %3068 = vmatprep.subr.mxu0 0.0
    %3069 = vmatpush1.xpose.msra.mxu0 0.0
    %3070 = vmatprep.subr.mxu0 0.0
    %3071 = vmatpush1.xpose.msra.mxu0 0.0
    %3072 = vmatprep.subr.mxu0 0.0
    %3073 = vmatpush1.xpose.msra.mxu0 0.0
    %3074 = vmatprep.subr.mxu0 0.0
    %3075 = vmatpush1.xpose.msra.mxu0 0.0
    %3076 = vmatprep.subr.mxu0 0.0
    %3077 = vmatpush1.xpose.msra.mxu0 0.0
    %3078 = vmatprep.subr.mxu0 0.0
    %3079 = vmatpush1.xpose.msra.mxu0 0.0
    %3080 = vmatprep.subr.mxu0 0.0
    %3081 = vmatpush1.xpose.msra.mxu0 0.0
    %3082 = vmatprep.subr.mxu0 0.0
    %3083 = vmatpush1.xpose.msra.mxu0 0.0
    %3084 = vmatprep.subr.mxu0 0.0
    %3085 = vmatpush1.xpose.msra.mxu0 0.0
    %3086 = vmatprep.subr.mxu0 0.0
    %3087 = vmatpush1.xpose.msra.mxu0 0.0
    %3088 = vmatprep.subr.mxu0 0.0
    %3089 = vmatpush1.xpose.msra.mxu0 0.0
    %3090 = vmatprep.subr.mxu0 0.0
    %3091 = vmatpush1.xpose.msra.mxu0 0.0
    %3092 = vmatprep.subr.mxu0 0.0
    %3093 = vmatpush1.xpose.msra.mxu0 0.0
    %3094 = vmatprep.subr.mxu0 0.0
    %3095 = vmatpush1.xpose.msra.mxu0 0.0
    %3096 = vmatprep.subr.mxu0 0.0
    %3097 = vmatpush1.xpose.msra.mxu0 0.0
    %3098 = vmatprep.subr.mxu0 0.0
    %3099 = vmatpush1.xpose.msra.mxu0 %v3066
    %3100 = vmatprep.subr.mxu0 0.0
    %3101 = vmatpush2.xpose.msra.mxu0 0.0
    %3102 = vmatprep.subr.mxu0 0.0
    %3103 = vmatpush2.xpose.msra.mxu0 0.0
    %3104 = vmatprep.subr.mxu0 0.0
    %3105 = vmatpush2.xpose.msra.mxu0 0.0
    %3106 = vmatprep.subr.mxu0 0.0
    %3107 = vmatpush2.xpose.msra.mxu0 0.0
    %3108 = vmatprep.subr.mxu0 0.0
    %3109 = vmatpush2.xpose.msra.mxu0 0.0
    %3110 = vmatprep.subr.mxu0 0.0
    %3111 = vmatpush2.xpose.msra.mxu0 0.0
    %3112 = vmatprep.subr.mxu0 0.0
    %3113 = vmatpush2.xpose.msra.mxu0 0.0
    %3114 = vmatprep.subr.mxu0 0.0
    %3115 = vmatpush2.xpose.msra.mxu0 0.0
    %3116 = vmatprep.subr.mxu0 0.0
    %3117 = vmatpush2.xpose.msra.mxu0 0.0
    %3118 = vmatprep.subr.mxu0 0.0
    %3119 = vmatpush2.xpose.msra.mxu0 0.0
    %3120 = vmatprep.subr.mxu0 0.0
    %3121 = vmatpush2.xpose.msra.mxu0 0.0
    %3122 = vmatprep.subr.mxu0 0.0
    %3123 = vmatpush2.xpose.msra.mxu0 0.0
    %3124 = vmatprep.subr.mxu0 0.0
    %3125 = vmatpush2.xpose.msra.mxu0 0.0
    %3126 = vmatprep.subr.mxu0 0.0
    %3127 = vmatpush2.xpose.msra.mxu0 0.0
    %3128 = vmatprep.subr.mxu0 0.0
    %3129 = vmatpush2.xpose.msra.mxu0 0.0
    %3130 = vmatprep.subr.mxu0 0.0
    %3131 = vmatpush2.xpose.msra.mxu0 0.0
    %3132 = vmatprep.mubr.f32.mxu0 0.0
    %3133 = vmatmul.mubr.f32.gmra.mxu0 %v3064
    %v3134 = vpop.f32.mrf.mxu0
    %v3135 = vadd.f32 0.0, %v3134
    %v3136 = vpop.f32.mrf.mxu0
    %3137 = vdwg.mxu0
    %3138 = vrot.lane.b32.xlu0 %v144, 100
    %v3139 = vpop.permute.xlu0 %3138
    %3140 = vrot.lane.b32.xlu0 %v144, 68
    %v3141 = vpop.permute.xlu0 %3140
    %v3142 = vsel %vm154, %v3139, 0
    %v3144 = vsel %vm154, %v3141, 0
    %3146 = vmatprep.subr.mxu0 0.0
    %3147 = vmatpush1.xpose.msra.mxu0 0.0
    %3148 = vmatprep.subr.mxu0 0.0
    %3149 = vmatpush1.xpose.msra.mxu0 0.0
    %3150 = vmatprep.subr.mxu0 0.0
    %3151 = vmatpush1.xpose.msra.mxu0 0.0
    %3152 = vmatprep.subr.mxu0 0.0
    %3153 = vmatpush1.xpose.msra.mxu0 0.0
    %3154 = vmatprep.subr.mxu0 0.0
    %3155 = vmatpush1.xpose.msra.mxu0 0.0
    %3156 = vmatprep.subr.mxu0 0.0
    %3157 = vmatpush1.xpose.msra.mxu0 0.0
    %3158 = vmatprep.subr.mxu0 0.0
    %3159 = vmatpush1.xpose.msra.mxu0 0.0
    %3160 = vmatprep.subr.mxu0 0.0
    %3161 = vmatpush1.xpose.msra.mxu0 0.0
    %3162 = vmatprep.subr.mxu0 0.0
    %3163 = vmatpush1.xpose.msra.mxu0 0.0
    %3164 = vmatprep.subr.mxu0 0.0
    %3165 = vmatpush1.xpose.msra.mxu0 0.0
    %3166 = vmatprep.subr.mxu0 0.0
    %3167 = vmatpush1.xpose.msra.mxu0 0.0
    %3168 = vmatprep.subr.mxu0 0.0
    %3169 = vmatpush1.xpose.msra.mxu0 0.0
    %3170 = vmatprep.subr.mxu0 0.0
    %3171 = vmatpush1.xpose.msra.mxu0 0.0
    %3172 = vmatprep.subr.mxu0 0.0
    %3173 = vmatpush1.xpose.msra.mxu0 0.0
    %3174 = vmatprep.subr.mxu0 0.0
    %3175 = vmatpush1.xpose.msra.mxu0 0.0
    %3176 = vmatprep.subr.mxu0 0.0
    %3177 = vmatpush1.xpose.msra.mxu0 %v3144
    %3178 = vmatprep.subr.mxu0 0.0
    %3179 = vmatpush2.xpose.msra.mxu0 0.0
    %3180 = vmatprep.subr.mxu0 0.0
    %3181 = vmatpush2.xpose.msra.mxu0 0.0
    %3182 = vmatprep.subr.mxu0 0.0
    %3183 = vmatpush2.xpose.msra.mxu0 0.0
    %3184 = vmatprep.subr.mxu0 0.0
    %3185 = vmatpush2.xpose.msra.mxu0 0.0
    %3186 = vmatprep.subr.mxu0 0.0
    %3187 = vmatpush2.xpose.msra.mxu0 0.0
    %3188 = vmatprep.subr.mxu0 0.0
    %3189 = vmatpush2.xpose.msra.mxu0 0.0
    %3190 = vmatprep.subr.mxu0 0.0
    %3191 = vmatpush2.xpose.msra.mxu0 0.0
    %3192 = vmatprep.subr.mxu0 0.0
    %3193 = vmatpush2.xpose.msra.mxu0 0.0
    %3194 = vmatprep.subr.mxu0 0.0
    %3195 = vmatpush2.xpose.msra.mxu0 0.0
    %3196 = vmatprep.subr.mxu0 0.0
    %3197 = vmatpush2.xpose.msra.mxu0 0.0
    %3198 = vmatprep.subr.mxu0 0.0
    %3199 = vmatpush2.xpose.msra.mxu0 0.0
    %3200 = vmatprep.subr.mxu0 0.0
    %3201 = vmatpush2.xpose.msra.mxu0 0.0
    %3202 = vmatprep.subr.mxu0 0.0
    %3203 = vmatpush2.xpose.msra.mxu0 0.0
    %3204 = vmatprep.subr.mxu0 0.0
    %3205 = vmatpush2.xpose.msra.mxu0 0.0
    %3206 = vmatprep.subr.mxu0 0.0
    %3207 = vmatpush2.xpose.msra.mxu0 0.0
    %3208 = vmatprep.subr.mxu0 0.0
    %3209 = vmatpush2.xpose.msra.mxu0 0.0
    %3210 = vmatprep.mubr.f32.mxu0 0.0
    %3211 = vmatmul.mubr.f32.gmra.mxu0 %v3142
    %v3212 = vpop.f32.mrf.mxu0
    %v3213 = vadd.f32 0.0, %v3212
    %v3214 = vpop.f32.mrf.mxu0
    %3215 = vdwg.mxu0
    %v3216 = vsel %vm306, %v3135, -inf
    %3217 = vmax.xlane.f32.xlu0 %v3216
    %v3218 = vpop.xlane.xlu0 %3217
    %v3219 = vsel %vm306, %v3213, -inf
    %3220 = vmax.xlane.f32.xlu0 %v3219
    %v3221 = vpop.xlane.xlu0 %3220
    %v3222 = vsub.f32 %v3135, %v3218
    %v3223 = vsub.f32 %v3213, %v3221
    %v3224 = vmul.f32 %v3222, 1.442695
    %v3225 = vpow.pop %v3224
    %v3226 = vmul.f32 %v3223, 1.442695
    %v3227 = vpow.pop %v3226
    %v3228 = vsel %vm306, %v3225, 0.0
    %3229 = vadd.xlane.f32.xlu0 %v3228
    %v3230 = vpop.xlane.xlu0 %3229
    %v3231 = vsel %vm306, %v3227, 0.0
    %3232 = vadd.xlane.f32.xlu0 %v3231
    %v3233 = vpop.xlane.xlu0 %3232
    %v3234 = vrcp.pop %v3230
    %v3235 = vrcp.pop %v3233
    %3236 = vrot.lane.b32.xlu0 %v139, 36
    %v3237 = vpop.permute.xlu0 %3236
    %v3240 = vsel %vm306, %v3225, 0
    %3242 = vmatprep.subr.mxu0 0.0
    %3243 = vmatpush1.msra.mxu0 0.0
    %3244 = vmatprep.subr.mxu0 0.0
    %3245 = vmatpush1.msra.mxu0 0.0
    %3246 = vmatprep.subr.mxu0 0.0
    %3247 = vmatpush1.msra.mxu0 0.0
    %3248 = vmatprep.subr.mxu0 0.0
    %3249 = vmatpush1.msra.mxu0 0.0
    %3250 = vmatprep.subr.mxu0 0.0
    %3251 = vmatpush1.msra.mxu0 0.0
    %3252 = vmatprep.subr.mxu0 0.0
    %3253 = vmatpush1.msra.mxu0 0.0
    %3254 = vmatprep.subr.mxu0 0.0
    %3255 = vmatpush1.msra.mxu0 0.0
    %3256 = vmatprep.subr.mxu0 0.0
    %3257 = vmatpush1.msra.mxu0 0.0
    %3258 = vmatprep.subr.mxu0 0.0
    %3259 = vmatpush1.msra.mxu0 0.0
    %3260 = vmatprep.subr.mxu0 0.0
    %3261 = vmatpush1.msra.mxu0 0.0
    %3262 = vmatprep.subr.mxu0 0.0
    %3263 = vmatpush1.msra.mxu0 0.0
    %3264 = vmatprep.subr.mxu0 0.0
    %3265 = vmatpush1.msra.mxu0 0.0
    %3266 = vmatprep.subr.mxu0 0.0
    %3267 = vmatpush1.msra.mxu0 0.0
    %3268 = vmatprep.subr.mxu0 0.0
    %3269 = vmatpush1.msra.mxu0 0.0
    %3270 = vmatprep.subr.mxu0 0.0
    %3271 = vmatpush1.msra.mxu0 0.0
    %3272 = vmatprep.subr.mxu0 0.0
    %3273 = vmatpush1.msra.mxu0 %v3237
    %3274 = vmatprep.subr.mxu0 0.0
    %3275 = vmatpush2.msra.mxu0 0.0
    %3276 = vmatprep.subr.mxu0 0.0
    %3277 = vmatpush2.msra.mxu0 0.0
    %3278 = vmatprep.subr.mxu0 0.0
    %3279 = vmatpush2.msra.mxu0 0.0
    %3280 = vmatprep.subr.mxu0 0.0
    %3281 = vmatpush2.msra.mxu0 0.0
    %3282 = vmatprep.subr.mxu0 0.0
    %3283 = vmatpush2.msra.mxu0 0.0
    %3284 = vmatprep.subr.mxu0 0.0
    %3285 = vmatpush2.msra.mxu0 0.0
    %3286 = vmatprep.subr.mxu0 0.0
    %3287 = vmatpush2.msra.mxu0 0.0
    %3288 = vmatprep.subr.mxu0 0.0
    %3289 = vmatpush2.msra.mxu0 0.0
    %3290 = vmatprep.subr.mxu0 0.0
    %3291 = vmatpush2.msra.mxu0 0.0
    %3292 = vmatprep.subr.mxu0 0.0
    %3293 = vmatpush2.msra.mxu0 0.0
    %3294 = vmatprep.subr.mxu0 0.0
    %3295 = vmatpush2.msra.mxu0 0.0
    %3296 = vmatprep.subr.mxu0 0.0
    %3297 = vmatpush2.msra.mxu0 0.0
    %3298 = vmatprep.subr.mxu0 0.0
    %3299 = vmatpush2.msra.mxu0 0.0
    %3300 = vmatprep.subr.mxu0 0.0
    %3301 = vmatpush2.msra.mxu0 0.0
    %3302 = vmatprep.subr.mxu0 0.0
    %3303 = vmatpush2.msra.mxu0 0.0
    %3304 = vmatprep.subr.mxu0 0.0
    %3305 = vmatpush2.msra.mxu0 0.0
    %3306 = vmatprep.mubr.f32.mxu0 0.0
    %3307 = vmatmul.mubr.f32.gmra.mxu0 %v3240
    %v3308 = vpop.f32.mrf.mxu0
    %v3309 = vadd.f32 0.0, %v3308
    %v3310 = vpop.f32.mrf.mxu0
    %3311 = vdwg.mxu0
    %3312 = vrot.lane.b32.xlu0 %v144, 36
    %v3313 = vpop.permute.xlu0 %3312
    %v3316 = vsel %vm306, %v3227, 0
    %3318 = vmatprep.subr.mxu0 0.0
    %3319 = vmatpush1.msra.mxu0 0.0
    %3320 = vmatprep.subr.mxu0 0.0
    %3321 = vmatpush1.msra.mxu0 0.0
    %3322 = vmatprep.subr.mxu0 0.0
    %3323 = vmatpush1.msra.mxu0 0.0
    %3324 = vmatprep.subr.mxu0 0.0
    %3325 = vmatpush1.msra.mxu0 0.0
    %3326 = vmatprep.subr.mxu0 0.0
    %3327 = vmatpush1.msra.mxu0 0.0
    %3328 = vmatprep.subr.mxu0 0.0
    %3329 = vmatpush1.msra.mxu0 0.0
    %3330 = vmatprep.subr.mxu0 0.0
    %3331 = vmatpush1.msra.mxu0 0.0
    %3332 = vmatprep.subr.mxu0 0.0
    %3333 = vmatpush1.msra.mxu0 0.0
    %3334 = vmatprep.subr.mxu0 0.0
    %3335 = vmatpush1.msra.mxu0 0.0
    %3336 = vmatprep.subr.mxu0 0.0
    %3337 = vmatpush1.msra.mxu0 0.0
    %3338 = vmatprep.subr.mxu0 0.0
    %3339 = vmatpush1.msra.mxu0 0.0
    %3340 = vmatprep.subr.mxu0 0.0
    %3341 = vmatpush1.msra.mxu0 0.0
    %3342 = vmatprep.subr.mxu0 0.0
    %3343 = vmatpush1.msra.mxu0 0.0
    %3344 = vmatprep.subr.mxu0 0.0
    %3345 = vmatpush1.msra.mxu0 0.0
    %3346 = vmatprep.subr.mxu0 0.0
    %3347 = vmatpush1.msra.mxu0 0.0
    %3348 = vmatprep.subr.mxu0 0.0
    %3349 = vmatpush1.msra.mxu0 %v3313
    %3350 = vmatprep.subr.mxu0 0.0
    %3351 = vmatpush2.msra.mxu0 0.0
    %3352 = vmatprep.subr.mxu0 0.0
    %3353 = vmatpush2.msra.mxu0 0.0
    %3354 = vmatprep.subr.mxu0 0.0
    %3355 = vmatpush2.msra.mxu0 0.0
    %3356 = vmatprep.subr.mxu0 0.0
    %3357 = vmatpush2.msra.mxu0 0.0
    %3358 = vmatprep.subr.mxu0 0.0
    %3359 = vmatpush2.msra.mxu0 0.0
    %3360 = vmatprep.subr.mxu0 0.0
    %3361 = vmatpush2.msra.mxu0 0.0
    %3362 = vmatprep.subr.mxu0 0.0
    %3363 = vmatpush2.msra.mxu0 0.0
    %3364 = vmatprep.subr.mxu0 0.0
    %3365 = vmatpush2.msra.mxu0 0.0
    %3366 = vmatprep.subr.mxu0 0.0
    %3367 = vmatpush2.msra.mxu0 0.0
    %3368 = vmatprep.subr.mxu0 0.0
    %3369 = vmatpush2.msra.mxu0 0.0
    %3370 = vmatprep.subr.mxu0 0.0
    %3371 = vmatpush2.msra.mxu0 0.0
    %3372 = vmatprep.subr.mxu0 0.0
    %3373 = vmatpush2.msra.mxu0 0.0
    %3374 = vmatprep.subr.mxu0 0.0
    %3375 = vmatpush2.msra.mxu0 0.0
    %3376 = vmatprep.subr.mxu0 0.0
    %3377 = vmatpush2.msra.mxu0 0.0
    %3378 = vmatprep.subr.mxu0 0.0
    %3379 = vmatpush2.msra.mxu0 0.0
    %3380 = vmatprep.subr.mxu0 0.0
    %3381 = vmatpush2.msra.mxu0 0.0
    %3382 = vmatprep.mubr.f32.mxu0 0.0
    %3383 = vmatmul.mubr.f32.gmra.mxu0 %v3316
    %v3384 = vpop.f32.mrf.mxu0
    %v3385 = vadd.f32 0.0, %v3384
    %v3386 = vpop.f32.mrf.mxu0
    %3387 = vdwg.mxu0
    %v3388 = vmul.f32 %v3309, %v3234
    %v3389 = vmul.f32 %v3385, %v3235
    %v3390 = vrot.slane %v150, 4
    %v3392 = vsel %vm154, %v3388, 0
    %v3395 = vsel %vm154, %v3389, 0
    %v3397 = vsel %vm819, %v3390, 0
    %3399 = vmatprep.subr.mxu0 0.0
    %3400 = vmatpush1.msra.mxu0 0.0
    %3401 = vmatprep.subr.mxu0 0.0
    %3402 = vmatpush1.msra.mxu0 0.0
    %3403 = vmatprep.subr.mxu0 0.0
    %3404 = vmatpush1.msra.mxu0 0.0
    %3405 = vmatprep.subr.mxu0 0.0
    %3406 = vmatpush1.msra.mxu0 0.0
    %3407 = vmatprep.subr.mxu0 0.0
    %3408 = vmatpush1.msra.mxu0 0.0
    %3409 = vmatprep.subr.mxu0 0.0
    %3410 = vmatpush1.msra.mxu0 0.0
    %3411 = vmatprep.subr.mxu0 0.0
    %3412 = vmatpush1.msra.mxu0 0.0
    %3413 = vmatprep.subr.mxu0 0.0
    %3414 = vmatpush1.msra.mxu0 0.0
    %3415 = vmatprep.subr.mxu0 0.0
    %3416 = vmatpush1.msra.mxu0 0.0
    %3417 = vmatprep.subr.mxu0 0.0
    %3418 = vmatpush1.msra.mxu0 0.0
    %3419 = vmatprep.subr.mxu0 0.0
    %3420 = vmatpush1.msra.mxu0 0.0
    %3421 = vmatprep.subr.mxu0 0.0
    %3422 = vmatpush1.msra.mxu0 0.0
    %3423 = vmatprep.subr.mxu0 0.0
    %3424 = vmatpush1.msra.mxu0 0.0
    %3425 = vmatprep.subr.mxu0 0.0
    %3426 = vmatpush1.msra.mxu0 0.0
    %3427 = vmatprep.subr.mxu0 0.0
    %3428 = vmatpush1.msra.mxu0 0.0
    %3429 = vmatprep.subr.mxu0 0.0
    %3430 = vmatpush1.msra.mxu0 %v3397
    %3431 = vmatprep.subr.mxu0 0.0
    %3432 = vmatpush2.msra.mxu0 0.0
    %3433 = vmatprep.subr.mxu0 0.0
    %3434 = vmatpush2.msra.mxu0 0.0
    %3435 = vmatprep.subr.mxu0 0.0
    %3436 = vmatpush2.msra.mxu0 0.0
    %3437 = vmatprep.subr.mxu0 0.0
    %3438 = vmatpush2.msra.mxu0 0.0
    %3439 = vmatprep.subr.mxu0 0.0
    %3440 = vmatpush2.msra.mxu0 0.0
    %3441 = vmatprep.subr.mxu0 0.0
    %3442 = vmatpush2.msra.mxu0 0.0
    %3443 = vmatprep.subr.mxu0 0.0
    %3444 = vmatpush2.msra.mxu0 0.0
    %3445 = vmatprep.subr.mxu0 0.0
    %3446 = vmatpush2.msra.mxu0 0.0
    %3447 = vmatprep.subr.mxu0 0.0
    %3448 = vmatpush2.msra.mxu0 0.0
    %3449 = vmatprep.subr.mxu0 0.0
    %3450 = vmatpush2.msra.mxu0 0.0
    %3451 = vmatprep.subr.mxu0 0.0
    %3452 = vmatpush2.msra.mxu0 0.0
    %3453 = vmatprep.subr.mxu0 0.0
    %3454 = vmatpush2.msra.mxu0 0.0
    %3455 = vmatprep.subr.mxu0 0.0
    %3456 = vmatpush2.msra.mxu0 0.0
    %3457 = vmatprep.subr.mxu0 0.0
    %3458 = vmatpush2.msra.mxu0 0.0
    %3459 = vmatprep.subr.mxu0 0.0
    %3460 = vmatpush2.msra.mxu0 0.0
    %3461 = vmatprep.subr.mxu0 0.0
    %3462 = vmatpush2.msra.mxu0 0.0
    %3463 = vmatprep.mubr.f32.mxu0 0.0
    %3464 = vmatmul.mubr.f32.gmra.mxu0 %v3392
    %v3465 = vpop.f32.mrf.mxu0
    %v3466 = vadd.f32 0.0, %v3465
    %v3467 = vpop.f32.mrf.mxu0
    %3468 = vmatprep.mubr.f32.mxu0 0.0
    %3469 = vmatmul.mubr.f32.gmra.mxu0 %v3395
    %v3470 = vpop.f32.mrf.mxu0
    %v3471 = vadd.f32 0.0, %v3470
    %v3472 = vpop.f32.mrf.mxu0
    %3473 = vdwg.mxu0
    %v3474 = vadd.f32 %v3058, %v3466
    %v3475 = vadd.f32 %v3059, %v3471
    %v3476 = vld [vmem:[%s3] sm:$0x1]
    %v3478 = vlaneseq
    %v3479 = vshrl.u32 %v3478, 7
    %v3480 = vsub.s32 0, %v3479
    %v3481 = vrot.slane %v3476, %v3480
    %v3483 = vadd.f32 %v3474, %v3481
    %v3484 = vadd.f32 %v3475, %v3481
    %3485 = vst.msk [vmem:[#allocation8] sm:$0xff] %vm65, %v3483
    %3486 = vst.msk [vmem:[#allocation8 + $0x8] sm:$0xff] %vm65, %v3484
    // Predicated region
    $region30: #{tpu_custom_call.1} parent=1 // pred_check
      _
    $region31: #{tpu_custom_call.1} parent=1 // pred_check_branch
      %3488 = sbr.rel (0) target = $region33
    $region32: #{tpu_custom_call.1} parent=1 // pred_region
      %s3490 = ssub.s32 256, 256
      %3491 = vsyncadd [#allocation4], %s3490
      %s3492 = sshll.u32 [#allocation8], 4
      %s3493 = int_to_ptr.vmem [resolvable:$true] %s3492
      %3498 = dma.vmem_to_hbm [thread:$0]  %s3493, 256, %s4, [#allocation4], 128, 128, 8
    $region33: #{tpu_custom_call.1} parent=1 // pred_fallthru
      _
    // Predicated region
    $region34: #{tpu_custom_call.1} parent=1 // pred_check
      _
    $region35: #{tpu_custom_call.1} parent=1 // pred_check_branch
      %3500 = sbr.rel (0) target = $region37
    $region36: #{tpu_custom_call.1} parent=1 // pred_region
      %3501 = dma.done [#allocation4], 256
    $region37: #{tpu_custom_call.1} parent=1 // pred_fallthru
      _
    %3502 = vsyncpa [#allocation3], 1
    %3503 = vsyncpa [#allocation6], 1
    %3504 = vsyncpa [#allocation4], 1

</llo_original>
